<compile_context>
chip_gen: v6e
topology: v6e:2x2x1
jax: 0.10.0
libtpu: 0.0.40
codegen_flags: <defaults>
</compile_context>

<pallas_src>
import functools

import jax
import jax.numpy as jnp
from jax.experimental import pallas as pl
from jax.experimental.pallas import tpu as pltpu

LEAKY_SLOPE = 0.2
BN_EPS = 1e-5

# Row-tile targets chosen so double-buffered in+out blocks stay far below the
# 32 MiB default scoped VMEM (and v7x's 64 MiB physical VMEM).
TG_TARGET = 512   # points per block in the fused EdgeConv kernel
TN_TARGET = 512   # points per block in the conv3 + global-max kernel


def _leaky(y):
    return jnp.where(y > 0, y, LEAKY_SLOPE * y)


def _pick_tile(total, target):
    """Largest divisor of `total` that is <= target and a multiple of 8.

    Falls back to `total` (block == full dim, always legal) when no such
    divisor exists or the array is already small.
    """
    if total <= target:
        return total
    for d in range(target, 7, -1):
        if total % d == 0 and d % 8 == 0:
            return d
    return total


# --------------------------------------------------------------------------
# Kernel 1: conv1 -> conv2 -> max over K  (fused EdgeConv stage)
# --------------------------------------------------------------------------
def _edge_conv_kernel(x_ref, w1_ref, s1_ref, b1_ref, w2_ref, s2_ref, b2_ref,
                      o_ref, *, n_k):
    # x_ref: (K, TG, 6) bf16; weights bf16; scale/shift f32 (1, C); o_ref (TG, 128) f32
    acc = jnp.full(o_ref.shape, -jnp.inf, jnp.float32)
    for kk in range(n_k):                      # K is small & static -> unrolled
        xk = x_ref[kk]                         # (TG, 6)
        h = jnp.dot(xk, w1_ref[...], preferred_element_type=jnp.float32)
        h = _leaky(h * s1_ref[...] + b1_ref[...])
        h = jnp.dot(h.astype(w2_ref.dtype), w2_ref[...],
                    preferred_element_type=jnp.float32)
        h = _leaky(h * s2_ref[...] + b2_ref[...])
        acc = jnp.maximum(acc, h)              # max over neighbours, in-register
    o_ref[...] = acc


def edge_conv_fused(x_kl, w1, s1, b1, w2, s2, b2):
    """x_kl: (K, G, 6) bf16 -> (G, 128) f32 = max_k LReLU(BN(conv2(LReLU(BN(conv1)))))"""
    K, G, Cin = x_kl.shape
    C1 = w1.shape[1]
    C2 = w2.shape[1]
    TG = _pick_tile(G, TG_TARGET)
    return pl.pallas_call(
        functools.partial(_edge_conv_kernel, n_k=K),
        out_shape=jax.ShapeDtypeStruct((G, C2), jnp.float32),
        grid=(G // TG,),
        in_specs=[
            pl.BlockSpec((K, TG, Cin), lambda g: (0, g, 0)),
            pl.BlockSpec((Cin, C1), lambda g: (0, 0)),   # weights stay VMEM-resident
            pl.BlockSpec((1, C1), lambda g: (0, 0)),
            pl.BlockSpec((1, C1), lambda g: (0, 0)),
            pl.BlockSpec((C1, C2), lambda g: (0, 0)),
            pl.BlockSpec((1, C2), lambda g: (0, 0)),
            pl.BlockSpec((1, C2), lambda g: (0, 0)),
        ],
        out_specs=pl.BlockSpec((TG, C2), lambda g: (g, 0)),
        compiler_params=pltpu.CompilerParams(dimension_semantics=("parallel",)),
    )(x_kl, w1, s1, b1, w2, s2, b2)


# --------------------------------------------------------------------------
# Kernel 2: conv3 -> max over N  (global feature, accumulator over grid axis 1)
# --------------------------------------------------------------------------
def _conv3_max_kernel(x_ref, w_ref, s_ref, b_ref, o_ref):
    # x_ref: (1, TN, 128) bf16; o_ref: (1, 1, 1024) f32 (resident across j)
    j = pl.program_id(1)
    h = jnp.dot(x_ref[0], w_ref[...], preferred_element_type=jnp.float32)
    h = _leaky(h * s_ref[...] + b_ref[...])
    tile_max = jnp.max(h, axis=0, keepdims=True)       # (1, 1024)

    @pl.when(j == 0)
    def _():
        o_ref[0] = tile_max

    @pl.when(j > 0)
    def _():
        o_ref[0] = jnp.maximum(o_ref[0], tile_max)


def conv3_global_max(x3, w, s, b):
    """x3: (B, N, 128) bf16 -> (B, 1024) f32 = max_n LReLU(BN(conv3(x)))"""
    B, N, Cin = x3.shape
    Cout = w.shape[1]
    TN = _pick_tile(N, TN_TARGET)
    out = pl.pallas_call(
        _conv3_max_kernel,
        out_shape=jax.ShapeDtypeStruct((B, 1, Cout), jnp.float32),
        grid=(B, N // TN),
        in_specs=[
            pl.BlockSpec((1, TN, Cin), lambda bb, j: (bb, j, 0)),
            pl.BlockSpec((Cin, Cout), lambda bb, j: (0, 0)),
            pl.BlockSpec((1, Cout), lambda bb, j: (0, 0)),
            pl.BlockSpec((1, Cout), lambda bb, j: (0, 0)),
        ],
        out_specs=pl.BlockSpec((1, 1, Cout), lambda bb, j: (bb, 0, 0)),
        compiler_params=pltpu.CompilerParams(
            dimension_semantics=("parallel", "arbitrary")),
    )(x3, w, s, b)
    return out.reshape(B, Cout)


# --------------------------------------------------------------------------
# Kernel 3: linear1 -> linear2 (fused MLP head, tiny row count -> one block)
# --------------------------------------------------------------------------
def _mlp_head_kernel(x_ref, w1_ref, s1_ref, b1_ref, w2_ref, s2_ref, b2_ref, o_ref):
    h = jnp.dot(x_ref[...], w1_ref[...], preferred_element_type=jnp.float32)
    h = _leaky(h * s1_ref[...] + b1_ref[...])
    h = jnp.dot(h.astype(w2_ref.dtype), w2_ref[...],
                preferred_element_type=jnp.float32)
    h = _leaky(h * s2_ref[...] + b2_ref[...])
    o_ref[...] = h


def mlp_head(x, w1, s1, b1, w2, s2, b2):
    """x: (B, 1024) bf16 -> (B, 256) f32"""
    B, Cin = x.shape
    Ch = w1.shape[1]
    Cout = w2.shape[1]
    return pl.pallas_call(
        _mlp_head_kernel,
        out_shape=jax.ShapeDtypeStruct((B, Cout), jnp.float32),
        grid=(1,),
        in_specs=[
            pl.BlockSpec((B, Cin), lambda i: (0, 0)),
            pl.BlockSpec((Cin, Ch), lambda i: (0, 0)),
            pl.BlockSpec((1, Ch), lambda i: (0, 0)),
            pl.BlockSpec((1, Ch), lambda i: (0, 0)),
            pl.BlockSpec((Ch, Cout), lambda i: (0, 0)),
            pl.BlockSpec((1, Cout), lambda i: (0, 0)),
            pl.BlockSpec((1, Cout), lambda i: (0, 0)),
        ],
        out_specs=pl.BlockSpec((B, Cout), lambda i: (0, 0)),
        compiler_params=pltpu.CompilerParams(dimension_semantics=("arbitrary",)),
    )(x, w1, s1, b1, w2, s2, b2)


# --------------------------------------------------------------------------
# Parameters (deterministic synthetic init; eval-mode BatchNorm folded)
# --------------------------------------------------------------------------
def _bn_fold(c):
    # gamma=1, beta=0, running_mean=0, running_var=1 (fresh BN, eval mode)
    scale = (jnp.ones((c,), jnp.float32) / jnp.sqrt(1.0 + BN_EPS)).reshape(1, c)
    shift = jnp.zeros((1, c), jnp.float32)
    return scale, shift


def init_params(key):
    dims = [("conv1", 6, 64), ("conv2", 64, 128), ("conv3", 128, 1024),
            ("linear1", 1024, 512), ("linear2", 512, 256)]
    params = {}
    keys = jax.random.split(key, len(dims))
    for kk, (name, cin, cout) in zip(keys, dims):
        w = 0.1 * jax.random.normal(kk, (cin, cout), jnp.float32)
        params[name + "_w"] = w.astype(jnp.bfloat16)    # bf16 MXU inputs
        params[name + "_bn"] = _bn_fold(cout)
    # transform head: weight = 0, bias = flattened identity (matches PyTorch init)
    params["transform_w"] = jnp.zeros((256, 9), jnp.float32)
    params["transform_b"] = jnp.eye(3, dtype=jnp.float32).reshape(9)
    return params


# --------------------------------------------------------------------------
# Forward
# --------------------------------------------------------------------------
def transform_net_forward(params, x):
    """x: (B, 6, N, K) (PyTorch layout) -> (B, 3, 3)."""
    B, C, N, K = x.shape
    assert C == 6
    G = B * N

    # channels-last, K-major layout for the fused EdgeConv kernel: (K, B*N, 6)
    x_kl = jnp.transpose(x, (3, 0, 2, 1)).reshape(K, G, 6).astype(jnp.bfloat16)

    # conv1 -> conv2 -> max over K          : (G, 128)
    f = edge_conv_fused(x_kl, params["conv1_w"], *params["conv1_bn"],
                        params["conv2_w"], *params["conv2_bn"])

    # conv3 -> max over N                   : (B, 1024)
    g = conv3_global_max(f.reshape(B, N, 128).astype(jnp.bfloat16),
                         params["conv3_w"], *params["conv3_bn"])

    # linear1 -> linear2                    : (B, 256)
    h = mlp_head(g.astype(jnp.bfloat16),
                 params["linear1_w"], *params["linear1_bn"],
                 params["linear2_w"], *params["linear2_bn"])

    # 256 -> 9 transform head: tiny (9 output lanes), kept in plain jnp per the
    # perf review (MXU >90% padded; XLA fuses it for free).
    t = h @ params["transform_w"] + params["transform_b"]
    return t.reshape(B, 3, 3)


# --------------------------------------------------------------------------
if __name__ == "__main__":
    B, N, K = 2, 16, 4          # small demo shapes: batch=2, points=16, knn k=4

    key = jax.random.PRNGKey(0)
    kp, kx = jax.random.split(key)
    params = init_params(kp)

    x = jax.random.normal(kx, (B, 6, N, K), jnp.float32)   # PyTorch layout (B, 6, N, k)

    fwd = jax.jit(transform_net_forward)
    out = fwd(params, x)
    jax.block_until_ready(out)

    assert out.shape == (B, 3, 3)
    assert bool(jnp.all(jnp.isfinite(out)))
    # With transform.weight = 0 and bias = identity (PyTorch init), the output
    # must be the identity transform for every batch element.
    expected = jnp.broadcast_to(jnp.eye(3, dtype=jnp.float32), (B, 3, 3))
    assert bool(jnp.allclose(out, expected, atol=1e-5))
    print("KERNEL_OK")
</pallas_src>

<mosaic_0001>
module attributes {stable_mosaic.version = 11 : i64} {
  func.func @_edge_conv_kernel(%arg0: i32, %arg1: memref<4x32x6xbf16, #tpu.memory_space<vmem>>, %arg2: memref<6x64xbf16, #tpu.memory_space<vmem>>, %arg3: memref<1x64xf32, #tpu.memory_space<vmem>>, %arg4: memref<1x64xf32, #tpu.memory_space<vmem>>, %arg5: memref<64x128xbf16, #tpu.memory_space<vmem>>, %arg6: memref<1x128xf32, #tpu.memory_space<vmem>>, %arg7: memref<1x128xf32, #tpu.memory_space<vmem>>, %arg8: memref<32x128xf32, #tpu.memory_space<vmem>>) attributes {dimension_semantics = [#tpu.dimension_semantics<parallel>], iteration_bounds = array<i64: 1>, scalar_prefetch = 0 : i64, scratch_operands = 0 : i64, tpu.core_type = #tpu.core_type<tc>, window_params = [{transform_indices = @transform_0, window_bounds = array<i64: 4, 32, 6>}, {pipeline_mode = #tpu.pipeline_mode<synchronous>, transform_indices = @transform_1, window_bounds = array<i64: 6, 64>}, {pipeline_mode = #tpu.pipeline_mode<synchronous>, transform_indices = @transform_2, window_bounds = array<i64: 1, 64>}, {pipeline_mode = #tpu.pipeline_mode<synchronous>, transform_indices = @transform_3, window_bounds = array<i64: 1, 64>}, {pipeline_mode = #tpu.pipeline_mode<synchronous>, transform_indices = @transform_4, window_bounds = array<i64: 64, 128>}, {pipeline_mode = #tpu.pipeline_mode<synchronous>, transform_indices = @transform_5, window_bounds = array<i64: 1, 128>}, {pipeline_mode = #tpu.pipeline_mode<synchronous>, transform_indices = @transform_6, window_bounds = array<i64: 1, 128>}, {transform_indices = @transform_7, window_bounds = array<i64: 32, 128>}]} {
    %cst = arith.constant 0xFF800000 : f32
    %0 = vector.broadcast %cst : f32 to vector<32x128xf32>
    %c0 = arith.constant 0 : index
    %c0_0 = arith.constant 0 : index
    %c0_1 = arith.constant 0 : index
    %1 = vector.load %arg1[%c0, %c0_0, %c0_1] : memref<4x32x6xbf16, #tpu.memory_space<vmem>>, vector<1x32x6xbf16>
    %2 = vector.shape_cast %1 : vector<1x32x6xbf16> to vector<32x6xbf16>
    %c0_2 = arith.constant 0 : index
    %c0_3 = arith.constant 0 : index
    %3 = vector.load %arg2[%c0_2, %c0_3] : memref<6x64xbf16, #tpu.memory_space<vmem>>, vector<6x64xbf16>
    %cst_4 = arith.constant dense<0.000000e+00> : vector<32x64xf32>
    %4 = tpu.matmul %2, %3, %cst_4 {dimension_numbers = #tpu.dot_dimension_numbers<[1], [0], [0], [1], [0, 0, 1, 1], [], []>} : vector<32x6xbf16>, vector<6x64xbf16>, vector<32x64xf32> -> vector<32x64xf32>
    %c0_5 = arith.constant 0 : index
    %c0_6 = arith.constant 0 : index
    %5 = vector.load %arg3[%c0_5, %c0_6] : memref<1x64xf32, #tpu.memory_space<vmem>>, vector<1x64xf32>
    %6 = vector.broadcast %5 : vector<1x64xf32> to vector<32x64xf32>
    %7 = arith.mulf %4, %6 : vector<32x64xf32>
    %c0_7 = arith.constant 0 : index
    %c0_8 = arith.constant 0 : index
    %8 = vector.load %arg4[%c0_7, %c0_8] : memref<1x64xf32, #tpu.memory_space<vmem>>, vector<1x64xf32>
    %9 = vector.broadcast %8 : vector<1x64xf32> to vector<32x64xf32>
    %10 = arith.addf %7, %9 : vector<32x64xf32>
    %cst_9 = arith.constant 0.000000e+00 : f32
    %11 = vector.broadcast %cst_9 : f32 to vector<32x64xf32>
    %12 = arith.cmpf ogt, %10, %11 : vector<32x64xf32>
    %cst_10 = arith.constant 2.000000e-01 : f32
    %13 = vector.broadcast %cst_10 : f32 to vector<32x64xf32>
    %14 = arith.mulf %13, %10 : vector<32x64xf32>
    %15 = arith.select %12, %10, %14 : vector<32x64xi1>, vector<32x64xf32>
    %16 = arith.truncf %15 : vector<32x64xf32> to vector<32x64xbf16>
    %c0_11 = arith.constant 0 : index
    %c0_12 = arith.constant 0 : index
    %17 = vector.load %arg5[%c0_11, %c0_12] : memref<64x128xbf16, #tpu.memory_space<vmem>>, vector<64x128xbf16>
    %cst_13 = arith.constant dense<0.000000e+00> : vector<32x128xf32>
    %18 = tpu.matmul %16, %17, %cst_13 {dimension_numbers = #tpu.dot_dimension_numbers<[1], [0], [0], [1], [0, 0, 1, 1], [], []>} : vector<32x64xbf16>, vector<64x128xbf16>, vector<32x128xf32> -> vector<32x128xf32>
    %c0_14 = arith.constant 0 : index
    %c0_15 = arith.constant 0 : index
    %19 = vector.load %arg6[%c0_14, %c0_15] : memref<1x128xf32, #tpu.memory_space<vmem>>, vector<1x128xf32>
    %20 = vector.broadcast %19 : vector<1x128xf32> to vector<32x128xf32>
    %21 = arith.mulf %18, %20 : vector<32x128xf32>
    %c0_16 = arith.constant 0 : index
    %c0_17 = arith.constant 0 : index
    %22 = vector.load %arg7[%c0_16, %c0_17] : memref<1x128xf32, #tpu.memory_space<vmem>>, vector<1x128xf32>
    %23 = vector.broadcast %22 : vector<1x128xf32> to vector<32x128xf32>
    %24 = arith.addf %21, %23 : vector<32x128xf32>
    %cst_18 = arith.constant 0.000000e+00 : f32
    %25 = vector.broadcast %cst_18 : f32 to vector<32x128xf32>
    %26 = arith.cmpf ogt, %24, %25 : vector<32x128xf32>
    %cst_19 = arith.constant 2.000000e-01 : f32
    %27 = vector.broadcast %cst_19 : f32 to vector<32x128xf32>
    %28 = arith.mulf %27, %24 : vector<32x128xf32>
    %29 = arith.select %26, %24, %28 : vector<32x128xi1>, vector<32x128xf32>
    %30 = arith.maximumf %0, %29 : vector<32x128xf32>
    %c1 = arith.constant 1 : index
    %c0_20 = arith.constant 0 : index
    %c0_21 = arith.constant 0 : index
    %31 = vector.load %arg1[%c1, %c0_20, %c0_21] : memref<4x32x6xbf16, #tpu.memory_space<vmem>>, vector<1x32x6xbf16>
    %32 = vector.shape_cast %31 : vector<1x32x6xbf16> to vector<32x6xbf16>
    %c0_22 = arith.constant 0 : index
    %c0_23 = arith.constant 0 : index
    %33 = vector.load %arg2[%c0_22, %c0_23] : memref<6x64xbf16, #tpu.memory_space<vmem>>, vector<6x64xbf16>
    %cst_24 = arith.constant dense<0.000000e+00> : vector<32x64xf32>
    %34 = tpu.matmul %32, %33, %cst_24 {dimension_numbers = #tpu.dot_dimension_numbers<[1], [0], [0], [1], [0, 0, 1, 1], [], []>} : vector<32x6xbf16>, vector<6x64xbf16>, vector<32x64xf32> -> vector<32x64xf32>
    %c0_25 = arith.constant 0 : index
    %c0_26 = arith.constant 0 : index
    %35 = vector.load %arg3[%c0_25, %c0_26] : memref<1x64xf32, #tpu.memory_space<vmem>>, vector<1x64xf32>
    %36 = vector.broadcast %35 : vector<1x64xf32> to vector<32x64xf32>
    %37 = arith.mulf %34, %36 : vector<32x64xf32>
    %c0_27 = arith.constant 0 : index
    %c0_28 = arith.constant 0 : index
    %38 = vector.load %arg4[%c0_27, %c0_28] : memref<1x64xf32, #tpu.memory_space<vmem>>, vector<1x64xf32>
    %39 = vector.broadcast %38 : vector<1x64xf32> to vector<32x64xf32>
    %40 = arith.addf %37, %39 : vector<32x64xf32>
    %cst_29 = arith.constant 0.000000e+00 : f32
    %41 = vector.broadcast %cst_29 : f32 to vector<32x64xf32>
    %42 = arith.cmpf ogt, %40, %41 : vector<32x64xf32>
    %cst_30 = arith.constant 2.000000e-01 : f32
    %43 = vector.broadcast %cst_30 : f32 to vector<32x64xf32>
    %44 = arith.mulf %43, %40 : vector<32x64xf32>
    %45 = arith.select %42, %40, %44 : vector<32x64xi1>, vector<32x64xf32>
    %46 = arith.truncf %45 : vector<32x64xf32> to vector<32x64xbf16>
    %c0_31 = arith.constant 0 : index
    %c0_32 = arith.constant 0 : index
    %47 = vector.load %arg5[%c0_31, %c0_32] : memref<64x128xbf16, #tpu.memory_space<vmem>>, vector<64x128xbf16>
    %cst_33 = arith.constant dense<0.000000e+00> : vector<32x128xf32>
    %48 = tpu.matmul %46, %47, %cst_33 {dimension_numbers = #tpu.dot_dimension_numbers<[1], [0], [0], [1], [0, 0, 1, 1], [], []>} : vector<32x64xbf16>, vector<64x128xbf16>, vector<32x128xf32> -> vector<32x128xf32>
    %c0_34 = arith.constant 0 : index
    %c0_35 = arith.constant 0 : index
    %49 = vector.load %arg6[%c0_34, %c0_35] : memref<1x128xf32, #tpu.memory_space<vmem>>, vector<1x128xf32>
    %50 = vector.broadcast %49 : vector<1x128xf32> to vector<32x128xf32>
    %51 = arith.mulf %48, %50 : vector<32x128xf32>
    %c0_36 = arith.constant 0 : index
    %c0_37 = arith.constant 0 : index
    %52 = vector.load %arg7[%c0_36, %c0_37] : memref<1x128xf32, #tpu.memory_space<vmem>>, vector<1x128xf32>
    %53 = vector.broadcast %52 : vector<1x128xf32> to vector<32x128xf32>
    %54 = arith.addf %51, %53 : vector<32x128xf32>
    %cst_38 = arith.constant 0.000000e+00 : f32
    %55 = vector.broadcast %cst_38 : f32 to vector<32x128xf32>
    %56 = arith.cmpf ogt, %54, %55 : vector<32x128xf32>
    %cst_39 = arith.constant 2.000000e-01 : f32
    %57 = vector.broadcast %cst_39 : f32 to vector<32x128xf32>
    %58 = arith.mulf %57, %54 : vector<32x128xf32>
    %59 = arith.select %56, %54, %58 : vector<32x128xi1>, vector<32x128xf32>
    %60 = arith.maximumf %30, %59 : vector<32x128xf32>
    %c2 = arith.constant 2 : index
    %c0_40 = arith.constant 0 : index
    %c0_41 = arith.constant 0 : index
    %61 = vector.load %arg1[%c2, %c0_40, %c0_41] : memref<4x32x6xbf16, #tpu.memory_space<vmem>>, vector<1x32x6xbf16>
    %62 = vector.shape_cast %61 : vector<1x32x6xbf16> to vector<32x6xbf16>
    %c0_42 = arith.constant 0 : index
    %c0_43 = arith.constant 0 : index
    %63 = vector.load %arg2[%c0_42, %c0_43] : memref<6x64xbf16, #tpu.memory_space<vmem>>, vector<6x64xbf16>
    %cst_44 = arith.constant dense<0.000000e+00> : vector<32x64xf32>
    %64 = tpu.matmul %62, %63, %cst_44 {dimension_numbers = #tpu.dot_dimension_numbers<[1], [0], [0], [1], [0, 0, 1, 1], [], []>} : vector<32x6xbf16>, vector<6x64xbf16>, vector<32x64xf32> -> vector<32x64xf32>
    %c0_45 = arith.constant 0 : index
    %c0_46 = arith.constant 0 : index
    %65 = vector.load %arg3[%c0_45, %c0_46] : memref<1x64xf32, #tpu.memory_space<vmem>>, vector<1x64xf32>
    %66 = vector.broadcast %65 : vector<1x64xf32> to vector<32x64xf32>
    %67 = arith.mulf %64, %66 : vector<32x64xf32>
    %c0_47 = arith.constant 0 : index
    %c0_48 = arith.constant 0 : index
    %68 = vector.load %arg4[%c0_47, %c0_48] : memref<1x64xf32, #tpu.memory_space<vmem>>, vector<1x64xf32>
    %69 = vector.broadcast %68 : vector<1x64xf32> to vector<32x64xf32>
    %70 = arith.addf %67, %69 : vector<32x64xf32>
    %cst_49 = arith.constant 0.000000e+00 : f32
    %71 = vector.broadcast %cst_49 : f32 to vector<32x64xf32>
    %72 = arith.cmpf ogt, %70, %71 : vector<32x64xf32>
    %cst_50 = arith.constant 2.000000e-01 : f32
    %73 = vector.broadcast %cst_50 : f32 to vector<32x64xf32>
    %74 = arith.mulf %73, %70 : vector<32x64xf32>
    %75 = arith.select %72, %70, %74 : vector<32x64xi1>, vector<32x64xf32>
    %76 = arith.truncf %75 : vector<32x64xf32> to vector<32x64xbf16>
    %c0_51 = arith.constant 0 : index
    %c0_52 = arith.constant 0 : index
    %77 = vector.load %arg5[%c0_51, %c0_52] : memref<64x128xbf16, #tpu.memory_space<vmem>>, vector<64x128xbf16>
    %cst_53 = arith.constant dense<0.000000e+00> : vector<32x128xf32>
    %78 = tpu.matmul %76, %77, %cst_53 {dimension_numbers = #tpu.dot_dimension_numbers<[1], [0], [0], [1], [0, 0, 1, 1], [], []>} : vector<32x64xbf16>, vector<64x128xbf16>, vector<32x128xf32> -> vector<32x128xf32>
    %c0_54 = arith.constant 0 : index
    %c0_55 = arith.constant 0 : index
    %79 = vector.load %arg6[%c0_54, %c0_55] : memref<1x128xf32, #tpu.memory_space<vmem>>, vector<1x128xf32>
    %80 = vector.broadcast %79 : vector<1x128xf32> to vector<32x128xf32>
    %81 = arith.mulf %78, %80 : vector<32x128xf32>
    %c0_56 = arith.constant 0 : index
    %c0_57 = arith.constant 0 : index
    %82 = vector.load %arg7[%c0_56, %c0_57] : memref<1x128xf32, #tpu.memory_space<vmem>>, vector<1x128xf32>
    %83 = vector.broadcast %82 : vector<1x128xf32> to vector<32x128xf32>
    %84 = arith.addf %81, %83 : vector<32x128xf32>
    %cst_58 = arith.constant 0.000000e+00 : f32
    %85 = vector.broadcast %cst_58 : f32 to vector<32x128xf32>
    %86 = arith.cmpf ogt, %84, %85 : vector<32x128xf32>
    %cst_59 = arith.constant 2.000000e-01 : f32
    %87 = vector.broadcast %cst_59 : f32 to vector<32x128xf32>
    %88 = arith.mulf %87, %84 : vector<32x128xf32>
    %89 = arith.select %86, %84, %88 : vector<32x128xi1>, vector<32x128xf32>
    %90 = arith.maximumf %60, %89 : vector<32x128xf32>
    %c3 = arith.constant 3 : index
    %c0_60 = arith.constant 0 : index
    %c0_61 = arith.constant 0 : index
    %91 = vector.load %arg1[%c3, %c0_60, %c0_61] : memref<4x32x6xbf16, #tpu.memory_space<vmem>>, vector<1x32x6xbf16>
    %92 = vector.shape_cast %91 : vector<1x32x6xbf16> to vector<32x6xbf16>
    %c0_62 = arith.constant 0 : index
    %c0_63 = arith.constant 0 : index
    %93 = vector.load %arg2[%c0_62, %c0_63] : memref<6x64xbf16, #tpu.memory_space<vmem>>, vector<6x64xbf16>
    %cst_64 = arith.constant dense<0.000000e+00> : vector<32x64xf32>
    %94 = tpu.matmul %92, %93, %cst_64 {dimension_numbers = #tpu.dot_dimension_numbers<[1], [0], [0], [1], [0, 0, 1, 1], [], []>} : vector<32x6xbf16>, vector<6x64xbf16>, vector<32x64xf32> -> vector<32x64xf32>
    %c0_65 = arith.constant 0 : index
    %c0_66 = arith.constant 0 : index
    %95 = vector.load %arg3[%c0_65, %c0_66] : memref<1x64xf32, #tpu.memory_space<vmem>>, vector<1x64xf32>
    %96 = vector.broadcast %95 : vector<1x64xf32> to vector<32x64xf32>
    %97 = arith.mulf %94, %96 : vector<32x64xf32>
    %c0_67 = arith.constant 0 : index
    %c0_68 = arith.constant 0 : index
    %98 = vector.load %arg4[%c0_67, %c0_68] : memref<1x64xf32, #tpu.memory_space<vmem>>, vector<1x64xf32>
    %99 = vector.broadcast %98 : vector<1x64xf32> to vector<32x64xf32>
    %100 = arith.addf %97, %99 : vector<32x64xf32>
    %cst_69 = arith.constant 0.000000e+00 : f32
    %101 = vector.broadcast %cst_69 : f32 to vector<32x64xf32>
    %102 = arith.cmpf ogt, %100, %101 : vector<32x64xf32>
    %cst_70 = arith.constant 2.000000e-01 : f32
    %103 = vector.broadcast %cst_70 : f32 to vector<32x64xf32>
    %104 = arith.mulf %103, %100 : vector<32x64xf32>
    %105 = arith.select %102, %100, %104 : vector<32x64xi1>, vector<32x64xf32>
    %106 = arith.truncf %105 : vector<32x64xf32> to vector<32x64xbf16>
    %c0_71 = arith.constant 0 : index
    %c0_72 = arith.constant 0 : index
    %107 = vector.load %arg5[%c0_71, %c0_72] : memref<64x128xbf16, #tpu.memory_space<vmem>>, vector<64x128xbf16>
    %cst_73 = arith.constant dense<0.000000e+00> : vector<32x128xf32>
    %108 = tpu.matmul %106, %107, %cst_73 {dimension_numbers = #tpu.dot_dimension_numbers<[1], [0], [0], [1], [0, 0, 1, 1], [], []>} : vector<32x64xbf16>, vector<64x128xbf16>, vector<32x128xf32> -> vector<32x128xf32>
    %c0_74 = arith.constant 0 : index
    %c0_75 = arith.constant 0 : index
    %109 = vector.load %arg6[%c0_74, %c0_75] : memref<1x128xf32, #tpu.memory_space<vmem>>, vector<1x128xf32>
    %110 = vector.broadcast %109 : vector<1x128xf32> to vector<32x128xf32>
    %111 = arith.mulf %108, %110 : vector<32x128xf32>
    %c0_76 = arith.constant 0 : index
    %c0_77 = arith.constant 0 : index
    %112 = vector.load %arg7[%c0_76, %c0_77] : memref<1x128xf32, #tpu.memory_space<vmem>>, vector<1x128xf32>
    %113 = vector.broadcast %112 : vector<1x128xf32> to vector<32x128xf32>
    %114 = arith.addf %111, %113 : vector<32x128xf32>
    %cst_78 = arith.constant 0.000000e+00 : f32
    %115 = vector.broadcast %cst_78 : f32 to vector<32x128xf32>
    %116 = arith.cmpf ogt, %114, %115 : vector<32x128xf32>
    %cst_79 = arith.constant 2.000000e-01 : f32
    %117 = vector.broadcast %cst_79 : f32 to vector<32x128xf32>
    %118 = arith.mulf %117, %114 : vector<32x128xf32>
    %119 = arith.select %116, %114, %118 : vector<32x128xi1>, vector<32x128xf32>
    %120 = arith.maximumf %90, %119 : vector<32x128xf32>
    %c0_80 = arith.constant 0 : index
    %c0_81 = arith.constant 0 : index
    %121 = vector.load %arg8[%c0_80, %c0_81] : memref<32x128xf32, #tpu.memory_space<vmem>>, vector<32x128xf32>
    tpu.vector_store %arg8[%c0_80, %c0_81], %120 {strides = array<i32>} : memref<32x128xf32, #tpu.memory_space<vmem>>, vector<32x128xf32>,
    return
  }
  func.func @transform_0(%arg0: i32) -> (i32, i32, i32) {
    %c0_i32 = arith.constant 0 : i32
    %c0_i32_0 = arith.constant 0 : i32
    %c0_i32_1 = arith.constant 0 : i32
    return %c0_i32, %arg0, %c0_i32_0 : i32, i32, i32
  }
  func.func @transform_1(%arg0: i32) -> (i32, i32) {
    %c0_i32 = arith.constant 0 : i32
    %c0_i32_0 = arith.constant 0 : i32
    %c0_i32_1 = arith.constant 0 : i32
    return %c0_i32, %c0_i32_0 : i32, i32
  }
  func.func @transform_2(%arg0: i32) -> (i32, i32) {
    %c0_i32 = arith.constant 0 : i32
    %c0_i32_0 = arith.constant 0 : i32
    %c0_i32_1 = arith.constant 0 : i32
    return %c0_i32, %c0_i32_0 : i32, i32
  }
  func.func @transform_3(%arg0: i32) -> (i32, i32) {
    %c0_i32 = arith.constant 0 : i32
    %c0_i32_0 = arith.constant 0 : i32
    %c0_i32_1 = arith.constant 0 : i32
    return %c0_i32, %c0_i32_0 : i32, i32
  }
  func.func @transform_4(%arg0: i32) -> (i32, i32) {
    %c0_i32 = arith.constant 0 : i32
    %c0_i32_0 = arith.constant 0 : i32
    %c0_i32_1 = arith.constant 0 : i32
    return %c0_i32, %c0_i32_0 : i32, i32
  }
  func.func @transform_5(%arg0: i32) -> (i32, i32) {
    %c0_i32 = arith.constant 0 : i32
    %c0_i32_0 = arith.constant 0 : i32
    %c0_i32_1 = arith.constant 0 : i32
    return %c0_i32, %c0_i32_0 : i32, i32
  }
  func.func @transform_6(%arg0: i32) -> (i32, i32) {
    %c0_i32 = arith.constant 0 : i32
    %c0_i32_0 = arith.constant 0 : i32
    %c0_i32_1 = arith.constant 0 : i32
    return %c0_i32, %c0_i32_0 : i32, i32
  }
  func.func @transform_7(%arg0: i32) -> (i32, i32) {
    %c0_i32 = arith.constant 0 : i32
    %c0_i32_0 = arith.constant 0 : i32
    return %arg0, %c0_i32 : i32, i32
  }
}

module attributes {stable_mosaic.version = 11 : i64} {
  func.func @_conv3_max_kernel(%arg0: i32, %arg1: i32, %arg2: memref<1x16x128xbf16, #tpu.memory_space<vmem>>, %arg3: memref<128x1024xbf16, #tpu.memory_space<vmem>>, %arg4: memref<1x1024xf32, #tpu.memory_space<vmem>>, %arg5: memref<1x1024xf32, #tpu.memory_space<vmem>>, %arg6: memref<1x1x1024xf32, #tpu.memory_space<vmem>>) attributes {dimension_semantics = [#tpu.dimension_semantics<parallel>, #tpu.dimension_semantics<arbitrary>], iteration_bounds = array<i64: 2, 1>, scalar_prefetch = 0 : i64, scratch_operands = 0 : i64, tpu.core_type = #tpu.core_type<tc>, window_params = [{transform_indices = @transform_0, window_bounds = array<i64: 1, 16, 128>}, {pipeline_mode = #tpu.pipeline_mode<synchronous>, transform_indices = @transform_1, window_bounds = array<i64: 128, 1024>}, {pipeline_mode = #tpu.pipeline_mode<synchronous>, transform_indices = @transform_2, window_bounds = array<i64: 1, 1024>}, {pipeline_mode = #tpu.pipeline_mode<synchronous>, transform_indices = @transform_3, window_bounds = array<i64: 1, 1024>}, {transform_indices = @transform_4, window_bounds = array<i64: 1, 1, 1024>}]} {
    %c0 = arith.constant 0 : index
    %c0_0 = arith.constant 0 : index
    %c0_1 = arith.constant 0 : index
    %0 = vector.load %arg2[%c0, %c0_0, %c0_1] : memref<1x16x128xbf16, #tpu.memory_space<vmem>>, vector<1x16x128xbf16>
    %1 = vector.shape_cast %0 : vector<1x16x128xbf16> to vector<16x128xbf16>
    %c0_2 = arith.constant 0 : index
    %c0_3 = arith.constant 0 : index
    %2 = vector.load %arg3[%c0_2, %c0_3] : memref<128x1024xbf16, #tpu.memory_space<vmem>>, vector<128x1024xbf16>
    %cst = arith.constant dense<0.000000e+00> : vector<16x1024xf32>
    %3 = tpu.matmul %1, %2, %cst {dimension_numbers = #tpu.dot_dimension_numbers<[1], [0], [0], [1], [0, 0, 1, 1], [], []>} : vector<16x128xbf16>, vector<128x1024xbf16>, vector<16x1024xf32> -> vector<16x1024xf32>
    %c0_4 = arith.constant 0 : index
    %c0_5 = arith.constant 0 : index
    %4 = vector.load %arg4[%c0_4, %c0_5] : memref<1x1024xf32, #tpu.memory_space<vmem>>, vector<1x1024xf32>
    %5 = vector.broadcast %4 : vector<1x1024xf32> to vector<16x1024xf32>
    %6 = arith.mulf %3, %5 : vector<16x1024xf32>
    %c0_6 = arith.constant 0 : index
    %c0_7 = arith.constant 0 : index
    %7 = vector.load %arg5[%c0_6, %c0_7] : memref<1x1024xf32, #tpu.memory_space<vmem>>, vector<1x1024xf32>
    %8 = vector.broadcast %7 : vector<1x1024xf32> to vector<16x1024xf32>
    %9 = arith.addf %6, %8 : vector<16x1024xf32>
    %cst_8 = arith.constant 0.000000e+00 : f32
    %10 = vector.broadcast %cst_8 : f32 to vector<16x1024xf32>
    %11 = arith.cmpf ogt, %9, %10 : vector<16x1024xf32>
    %cst_9 = arith.constant 2.000000e-01 : f32
    %12 = vector.broadcast %cst_9 : f32 to vector<16x1024xf32>
    %13 = arith.mulf %12, %9 : vector<16x1024xf32>
    %14 = arith.select %11, %9, %13 : vector<16x1024xi1>, vector<16x1024xf32>
    %cst_10 = arith.constant dense<0xFF800000> : vector<1024xf32>
    %15 = vector.multi_reduction <maximumf>, %14, %cst_10 [0] : vector<16x1024xf32> to vector<1024xf32>
    %16 = vector.shape_cast %15 : vector<1024xf32> to vector<1x1024xf32>
    %c0_i32 = arith.constant 0 : i32
    %17 = arith.cmpi eq, %arg1, %c0_i32 : i32
    %18 = arith.extui %17 : i1 to i32
    %c0_i32_11 = arith.constant 0 : i32
    %19 = arith.cmpi ne, %18, %c0_i32_11 : i32
    scf.if %19 {
      %c0_14 = arith.constant 0 : index
      %c0_15 = arith.constant 0 : index
      %c0_16 = arith.constant 0 : index
      %23 = vector.load %arg6[%c0_14, %c0_15, %c0_16] : memref<1x1x1024xf32, #tpu.memory_space<vmem>>, vector<1x1x1024xf32>
      %24 = vector.shape_cast %23 : vector<1x1x1024xf32> to vector<1x1024xf32>
      %25 = vector.shape_cast %16 : vector<1x1024xf32> to vector<1x1x1024xf32>
      tpu.vector_store %arg6[%c0_14, %c0_15, %c0_16], %25 {strides = array<i32>} : memref<1x1x1024xf32, #tpu.memory_space<vmem>>, vector<1x1x1024xf32>,
    } else {
    }
    %c0_i32_12 = arith.constant 0 : i32
    %20 = arith.cmpi sgt, %arg1, %c0_i32_12 : i32
    %21 = arith.extui %20 : i1 to i32
    %c0_i32_13 = arith.constant 0 : i32
    %22 = arith.cmpi ne, %21, %c0_i32_13 : i32
    scf.if %22 {
      %c0_14 = arith.constant 0 : index
      %c0_15 = arith.constant 0 : index
      %c0_16 = arith.constant 0 : index
      %23 = vector.load %arg6[%c0_14, %c0_15, %c0_16] : memref<1x1x1024xf32, #tpu.memory_space<vmem>>, vector<1x1x1024xf32>
      %24 = vector.shape_cast %23 : vector<1x1x1024xf32> to vector<1x1024xf32>
      %25 = arith.maximumf %24, %16 : vector<1x1024xf32>
      %c0_17 = arith.constant 0 : index
      %c0_18 = arith.constant 0 : index
      %c0_19 = arith.constant 0 : index
      %26 = vector.load %arg6[%c0_17, %c0_18, %c0_19] : memref<1x1x1024xf32, #tpu.memory_space<vmem>>, vector<1x1x1024xf32>
      %27 = vector.shape_cast %26 : vector<1x1x1024xf32> to vector<1x1024xf32>
      %28 = vector.shape_cast %25 : vector<1x1024xf32> to vector<1x1x1024xf32>
      tpu.vector_store %arg6[%c0_17, %c0_18, %c0_19], %28 {strides = array<i32>} : memref<1x1x1024xf32, #tpu.memory_space<vmem>>, vector<1x1x1024xf32>,
    } else {
    }
    return
  }
  func.func @transform_0(%arg0: i32, %arg1: i32) -> (i32, i32, i32) {
    %c0_i32 = arith.constant 0 : i32
    %c0_i32_0 = arith.constant 0 : i32
    return %arg0, %arg1, %c0_i32 : i32, i32, i32
  }
  func.func @transform_1(%arg0: i32, %arg1: i32) -> (i32, i32) {
    %c0_i32 = arith.constant 0 : i32
    %c0_i32_0 = arith.constant 0 : i32
    %c0_i32_1 = arith.constant 0 : i32
    return %c0_i32, %c0_i32_0 : i32, i32
  }
  func.func @transform_2(%arg0: i32, %arg1: i32) -> (i32, i32) {
    %c0_i32 = arith.constant 0 : i32
    %c0_i32_0 = arith.constant 0 : i32
    %c0_i32_1 = arith.constant 0 : i32
    return %c0_i32, %c0_i32_0 : i32, i32
  }
  func.func @transform_3(%arg0: i32, %arg1: i32) -> (i32, i32) {
    %c0_i32 = arith.constant 0 : i32
    %c0_i32_0 = arith.constant 0 : i32
    %c0_i32_1 = arith.constant 0 : i32
    return %c0_i32, %c0_i32_0 : i32, i32
  }
  func.func @transform_4(%arg0: i32, %arg1: i32) -> (i32, i32, i32) {
    %c0_i32 = arith.constant 0 : i32
    %c0_i32_0 = arith.constant 0 : i32
    %c0_i32_1 = arith.constant 0 : i32
    return %arg0, %c0_i32, %c0_i32_0 : i32, i32, i32
  }
}

module attributes {stable_mosaic.version = 11 : i64} {
  func.func @_mlp_head_kernel(%arg0: i32, %arg1: memref<2x1024xbf16, #tpu.memory_space<vmem>>, %arg2: memref<1024x512xbf16, #tpu.memory_space<vmem>>, %arg3: memref<1x512xf32, #tpu.memory_space<vmem>>, %arg4: memref<1x512xf32, #tpu.memory_space<vmem>>, %arg5: memref<512x256xbf16, #tpu.memory_space<vmem>>, %arg6: memref<1x256xf32, #tpu.memory_space<vmem>>, %arg7: memref<1x256xf32, #tpu.memory_space<vmem>>, %arg8: memref<2x256xf32, #tpu.memory_space<vmem>>) attributes {dimension_semantics = [#tpu.dimension_semantics<arbitrary>], iteration_bounds = array<i64: 1>, scalar_prefetch = 0 : i64, scratch_operands = 0 : i64, tpu.core_type = #tpu.core_type<tc>, window_params = [{pipeline_mode = #tpu.pipeline_mode<synchronous>, transform_indices = @transform_0, window_bounds = array<i64: 2, 1024>}, {pipeline_mode = #tpu.pipeline_mode<synchronous>, transform_indices = @transform_1, window_bounds = array<i64: 1024, 512>}, {pipeline_mode = #tpu.pipeline_mode<synchronous>, transform_indices = @transform_2, window_bounds = array<i64: 1, 512>}, {pipeline_mode = #tpu.pipeline_mode<synchronous>, transform_indices = @transform_3, window_bounds = array<i64: 1, 512>}, {pipeline_mode = #tpu.pipeline_mode<synchronous>, transform_indices = @transform_4, window_bounds = array<i64: 512, 256>}, {pipeline_mode = #tpu.pipeline_mode<synchronous>, transform_indices = @transform_5, window_bounds = array<i64: 1, 256>}, {pipeline_mode = #tpu.pipeline_mode<synchronous>, transform_indices = @transform_6, window_bounds = array<i64: 1, 256>}, {pipeline_mode = #tpu.pipeline_mode<synchronous>, transform_indices = @transform_7, window_bounds = array<i64: 2, 256>}]} {
    %c0 = arith.constant 0 : index
    %c0_0 = arith.constant 0 : index
    %0 = vector.load %arg1[%c0, %c0_0] : memref<2x1024xbf16, #tpu.memory_space<vmem>>, vector<2x1024xbf16>
    %c0_1 = arith.constant 0 : index
    %c0_2 = arith.constant 0 : index
    %1 = vector.load %arg2[%c0_1, %c0_2] : memref<1024x512xbf16, #tpu.memory_space<vmem>>, vector<1024x512xbf16>
    %cst = arith.constant dense<0.000000e+00> : vector<2x512xf32>
    %2 = tpu.matmul %0, %1, %cst {dimension_numbers = #tpu.dot_dimension_numbers<[1], [0], [0], [1], [0, 0, 1, 1], [], []>} : vector<2x1024xbf16>, vector<1024x512xbf16>, vector<2x512xf32> -> vector<2x512xf32>
    %c0_3 = arith.constant 0 : index
    %c0_4 = arith.constant 0 : index
    %3 = vector.load %arg3[%c0_3, %c0_4] : memref<1x512xf32, #tpu.memory_space<vmem>>, vector<1x512xf32>
    %4 = vector.broadcast %3 : vector<1x512xf32> to vector<2x512xf32>
    %5 = arith.mulf %2, %4 : vector<2x512xf32>
    %c0_5 = arith.constant 0 : index
    %c0_6 = arith.constant 0 : index
    %6 = vector.load %arg4[%c0_5, %c0_6] : memref<1x512xf32, #tpu.memory_space<vmem>>, vector<1x512xf32>
    %7 = vector.broadcast %6 : vector<1x512xf32> to vector<2x512xf32>
    %8 = arith.addf %5, %7 : vector<2x512xf32>
    %cst_7 = arith.constant 0.000000e+00 : f32
    %9 = vector.broadcast %cst_7 : f32 to vector<2x512xf32>
    %10 = arith.cmpf ogt, %8, %9 : vector<2x512xf32>
    %cst_8 = arith.constant 2.000000e-01 : f32
    %11 = vector.broadcast %cst_8 : f32 to vector<2x512xf32>
    %12 = arith.mulf %11, %8 : vector<2x512xf32>
    %13 = arith.select %10, %8, %12 : vector<2x512xi1>, vector<2x512xf32>
    %14 = arith.truncf %13 : vector<2x512xf32> to vector<2x512xbf16>
    %c0_9 = arith.constant 0 : index
    %c0_10 = arith.constant 0 : index
    %15 = vector.load %arg5[%c0_9, %c0_10] : memref<512x256xbf16, #tpu.memory_space<vmem>>, vector<512x256xbf16>
    %cst_11 = arith.constant dense<0.000000e+00> : vector<2x256xf32>
    %16 = tpu.matmul %14, %15, %cst_11 {dimension_numbers = #tpu.dot_dimension_numbers<[1], [0], [0], [1], [0, 0, 1, 1], [], []>} : vector<2x512xbf16>, vector<512x256xbf16>, vector<2x256xf32> -> vector<2x256xf32>
    %c0_12 = arith.constant 0 : index
    %c0_13 = arith.constant 0 : index
    %17 = vector.load %arg6[%c0_12, %c0_13] : memref<1x256xf32, #tpu.memory_space<vmem>>, vector<1x256xf32>
    %18 = vector.broadcast %17 : vector<1x256xf32> to vector<2x256xf32>
    %19 = arith.mulf %16, %18 : vector<2x256xf32>
    %c0_14 = arith.constant 0 : index
    %c0_15 = arith.constant 0 : index
    %20 = vector.load %arg7[%c0_14, %c0_15] : memref<1x256xf32, #tpu.memory_space<vmem>>, vector<1x256xf32>
    %21 = vector.broadcast %20 : vector<1x256xf32> to vector<2x256xf32>
    %22 = arith.addf %19, %21 : vector<2x256xf32>
    %cst_16 = arith.constant 0.000000e+00 : f32
    %23 = vector.broadcast %cst_16 : f32 to vector<2x256xf32>
    %24 = arith.cmpf ogt, %22, %23 : vector<2x256xf32>
    %cst_17 = arith.constant 2.000000e-01 : f32
    %25 = vector.broadcast %cst_17 : f32 to vector<2x256xf32>
    %26 = arith.mulf %25, %22 : vector<2x256xf32>
    %27 = arith.select %24, %22, %26 : vector<2x256xi1>, vector<2x256xf32>
    %c0_18 = arith.constant 0 : index
    %c0_19 = arith.constant 0 : index
    %28 = vector.load %arg8[%c0_18, %c0_19] : memref<2x256xf32, #tpu.memory_space<vmem>>, vector<2x256xf32>
    tpu.vector_store %arg8[%c0_18, %c0_19], %27 {strides = array<i32>} : memref<2x256xf32, #tpu.memory_space<vmem>>, vector<2x256xf32>,
    return
  }
  func.func @transform_0(%arg0: i32) -> (i32, i32) {
    %c0_i32 = arith.constant 0 : i32
    %c0_i32_0 = arith.constant 0 : i32
    %c0_i32_1 = arith.constant 0 : i32
    return %c0_i32, %c0_i32_0 : i32, i32
  }
  func.func @transform_1(%arg0: i32) -> (i32, i32) {
    %c0_i32 = arith.constant 0 : i32
    %c0_i32_0 = arith.constant 0 : i32
    %c0_i32_1 = arith.constant 0 : i32
    return %c0_i32, %c0_i32_0 : i32, i32
  }
  func.func @transform_2(%arg0: i32) -> (i32, i32) {
    %c0_i32 = arith.constant 0 : i32
    %c0_i32_0 = arith.constant 0 : i32
    %c0_i32_1 = arith.constant 0 : i32
    return %c0_i32, %c0_i32_0 : i32, i32
  }
  func.func @transform_3(%arg0: i32) -> (i32, i32) {
    %c0_i32 = arith.constant 0 : i32
    %c0_i32_0 = arith.constant 0 : i32
    %c0_i32_1 = arith.constant 0 : i32
    return %c0_i32, %c0_i32_0 : i32, i32
  }
  func.func @transform_4(%arg0: i32) -> (i32, i32) {
    %c0_i32 = arith.constant 0 : i32
    %c0_i32_0 = arith.constant 0 : i32
    %c0_i32_1 = arith.constant 0 : i32
    return %c0_i32, %c0_i32_0 : i32, i32
  }
  func.func @transform_5(%arg0: i32) -> (i32, i32) {
    %c0_i32 = arith.constant 0 : i32
    %c0_i32_0 = arith.constant 0 : i32
    %c0_i32_1 = arith.constant 0 : i32
    return %c0_i32, %c0_i32_0 : i32, i32
  }
  func.func @transform_6(%arg0: i32) -> (i32, i32) {
    %c0_i32 = arith.constant 0 : i32
    %c0_i32_0 = arith.constant 0 : i32
    %c0_i32_1 = arith.constant 0 : i32
    return %c0_i32, %c0_i32_0 : i32, i32
  }
  func.func @transform_7(%arg0: i32) -> (i32, i32) {
    %c0_i32 = arith.constant 0 : i32
    %c0_i32_0 = arith.constant 0 : i32
    %c0_i32_1 = arith.constant 0 : i32
    return %c0_i32, %c0_i32_0 : i32, i32
  }
}

</mosaic_0001>

<llo_original>
// kernel: transform_net_forward.3
$region0: #{transform_net_forward.3}
  #allocation0 [shape = 'u32[]', space=smem, size = 0x4, offset = 0x4, fixed_abs, tag = 'smem constant byte address 0x4 - core index']
  #allocation1 [shape = 'u32[144,128]{1,0:T(1,128)}', space=vmem, size = 0x12000, scoped, tag = 'internal scratch']
  %s0 = inlined_call_operand.vmem [shape: bf16[4,32,6], index: 0, kind: input, shape index: {}]
  %s1 = inlined_call_operand.hbm [shape: bf16[6,64], index: 1, kind: input, shape index: {}]
  %s2 = inlined_call_operand.hbm [shape: f32[1,64], index: 2, kind: input, shape index: {}]
  %s3 = inlined_call_operand.hbm [shape: f32[1,64], index: 3, kind: input, shape index: {}]
  %s4 = inlined_call_operand.hbm [shape: bf16[64,128], index: 4, kind: input, shape index: {}]
  %s5 = inlined_call_operand.hbm [shape: f32[1,128], index: 5, kind: input, shape index: {}]
  %s6 = inlined_call_operand.hbm [shape: f32[1,128], index: 6, kind: input, shape index: {}]
  %s7 = inlined_call_operand.vmem [shape: f32[32,128], index: 7, kind: output, shape index: {}]
  %s8 = sld [smem:[#allocation0]]
  $region62: #{transform_net_forward.3} parent=0
    _
  %s10 = ssub.s32 1, %s8
  %s11 = scalar_select 0, %s10, %s8
  $region1: #{transform_net_forward.3} parent=0
    #allocation2 [shape = 'u8[2048]{0}', space=vmem, size = 0x800, scoped, tag = 'input window, operand 1, single buffered']
    #allocation3 [shape = 's32[1]{0}', space=sflag, size = 0x4, scoped, tag = 'scoped memory for transform_net_forward.3']
    #allocation4 [shape = 'u8[512]{0}', space=vmem, size = 0x400, scoped, tag = 'input window, operand 2, single buffered']
    #allocation5 [shape = 's32[1]{0}', space=sflag, size = 0x4, scoped, tag = 'scoped memory for transform_net_forward.3']
    #allocation6 [shape = 'u8[512]{0}', space=vmem, size = 0x400, scoped, tag = 'input window, operand 3, single buffered']
    #allocation7 [shape = 'u8[16384]{0}', space=vmem, size = 0x4000, scoped, tag = 'input window, operand 4, single buffered']
    #allocation8 [shape = 's32[1]{0}', space=sflag, size = 0x4, scoped, tag = 'scoped memory for transform_net_forward.3']
    #allocation9 [shape = 'u8[512]{0}', space=vmem, size = 0x400, scoped, tag = 'input window, operand 5, single buffered']
    #allocation10 [shape = 'u8[512]{0}', space=vmem, size = 0x400, scoped, tag = 'input window, operand 6, single buffered']
    #allocation11 [shape = 's32[1]{0}', space=sflag, size = 0x4, scoped, tag = 'scoped memory for transform_net_forward.3']
    %12 = vsyncpa [#allocation3], 0
    %13 = vsyncpa [#allocation5], 0
    %14 = vsyncpa [#allocation8], 0
    %15 = vsyncpa [#allocation11], 0
    // Predicated region
    $region2: #{transform_net_forward.3} parent=1 // pred_check
      _
    $region3: #{transform_net_forward.3} parent=1 // pred_check_branch
      %17 = sbr.rel (0) target = $region5
    $region4: #{transform_net_forward.3} parent=1 // pred_region
      _
    $region5: #{transform_net_forward.3} parent=1 // pred_fallthru
      _
    // Predicated region
    $region6: #{transform_net_forward.3} parent=1 // pred_check
      _
    $region7: #{transform_net_forward.3} parent=1 // pred_check_branch
      %19 = sbr.rel (0) target = $region9
    $region8: #{transform_net_forward.3} parent=1 // pred_region
      %s21 = ssub.s32 64, 64
      %22 = vsyncadd [#allocation3], %s21
      %s24 = sshll.u32 [#allocation2], 4
      %s25 = int_to_ptr.vmem [resolvable:$true] %s24
      %27 = dma.hbm_to_vmem [thread:$0]  %s1, 64, %s25, [#allocation3]
    $region9: #{transform_net_forward.3} parent=1 // pred_fallthru
      _
    // Predicated region
    $region10: #{transform_net_forward.3} parent=1 // pred_check
      _
    $region11: #{transform_net_forward.3} parent=1 // pred_check_branch
      %29 = sbr.rel (0) target = $region13
    $region12: #{transform_net_forward.3} parent=1 // pred_region
      %s31 = ssub.s32 16, 16
      %32 = vsyncadd [#allocation5], %s31
      %s34 = sshll.u32 [#allocation4], 4
      %s35 = int_to_ptr.vmem [resolvable:$true] %s34
      %37 = dma.hbm_to_vmem [thread:$0]  %s2, 16, %s35, [#allocation5]
    $region13: #{transform_net_forward.3} parent=1 // pred_fallthru
      _
    // Predicated region
    $region14: #{transform_net_forward.3} parent=1 // pred_check
      _
    $region15: #{transform_net_forward.3} parent=1 // pred_check_branch
      %39 = sbr.rel (0) target = $region17
    $region16: #{transform_net_forward.3} parent=1 // pred_region
      %s41 = ssub.s32 16, 16
      %42 = vsyncadd [#allocation5], %s41
      %s44 = sshll.u32 [#allocation6], 4
      %s45 = int_to_ptr.vmem [resolvable:$true] %s44
      %47 = dma.hbm_to_vmem [thread:$0]  %s3, 16, %s45, [#allocation5]
    $region17: #{transform_net_forward.3} parent=1 // pred_fallthru
      _
    // Predicated region
    $region18: #{transform_net_forward.3} parent=1 // pred_check
      _
    $region19: #{transform_net_forward.3} parent=1 // pred_check_branch
      %49 = sbr.rel (0) target = $region21
    $region20: #{transform_net_forward.3} parent=1 // pred_region
      %s51 = ssub.s32 512, 512
      %52 = vsyncadd [#allocation8], %s51
      %s53 = sshll.u32 [#allocation7], 4
      %s54 = int_to_ptr.vmem [resolvable:$true] %s53
      %59 = dma.hbm_to_vmem [thread:$0]  %s4, 512, %s54, [#allocation8], 64, 64, 4
    $region21: #{transform_net_forward.3} parent=1 // pred_fallthru
      _
    // Predicated region
    $region22: #{transform_net_forward.3} parent=1 // pred_check
      _
    $region23: #{transform_net_forward.3} parent=1 // pred_check_branch
      %61 = sbr.rel (0) target = $region25
    $region24: #{transform_net_forward.3} parent=1 // pred_region
      %s63 = ssub.s32 16, 16
      %64 = vsyncadd [#allocation8], %s63
      %s66 = sshll.u32 [#allocation9], 4
      %s67 = int_to_ptr.vmem [resolvable:$true] %s66
      %69 = dma.hbm_to_vmem [thread:$0]  %s5, 16, %s67, [#allocation8]
    $region25: #{transform_net_forward.3} parent=1 // pred_fallthru
      _
    // Predicated region
    $region26: #{transform_net_forward.3} parent=1 // pred_check
      _
    $region27: #{transform_net_forward.3} parent=1 // pred_check_branch
      %71 = sbr.rel (0) target = $region29
    $region28: #{transform_net_forward.3} parent=1 // pred_region
      %s73 = ssub.s32 16, 16
      %74 = vsyncadd [#allocation11], %s73
      %s76 = sshll.u32 [#allocation10], 4
      %s77 = int_to_ptr.vmem [resolvable:$true] %s76
      %79 = dma.hbm_to_vmem [thread:$0]  %s6, 16, %s77, [#allocation11]
    $region29: #{transform_net_forward.3} parent=1 // pred_fallthru
      _
    // Predicated region
    $region30: #{transform_net_forward.3} parent=1 // pred_check
      _
    $region31: #{transform_net_forward.3} parent=1 // pred_check_branch
      %81 = sbr.rel (0) target = $region33
    $region32: #{transform_net_forward.3} parent=1 // pred_region
      %82 = dma.done [#allocation3], 64
    $region33: #{transform_net_forward.3} parent=1 // pred_fallthru
      _
    // Predicated region
    $region34: #{transform_net_forward.3} parent=1 // pred_check
      _
    $region35: #{transform_net_forward.3} parent=1 // pred_check_branch
      %84 = sbr.rel (0) target = $region37
    $region36: #{transform_net_forward.3} parent=1 // pred_region
      %85 = dma.done [#allocation5], 16
    $region37: #{transform_net_forward.3} parent=1 // pred_fallthru
      _
    // Predicated region
    $region38: #{transform_net_forward.3} parent=1 // pred_check
      _
    $region39: #{transform_net_forward.3} parent=1 // pred_check_branch
      %87 = sbr.rel (0) target = $region41
    $region40: #{transform_net_forward.3} parent=1 // pred_region
      %88 = dma.done [#allocation5], 16
    $region41: #{transform_net_forward.3} parent=1 // pred_fallthru
      _
    // Predicated region
    $region42: #{transform_net_forward.3} parent=1 // pred_check
      _
    $region43: #{transform_net_forward.3} parent=1 // pred_check_branch
      %90 = sbr.rel (0) target = $region45
    $region44: #{transform_net_forward.3} parent=1 // pred_region
      %91 = dma.done [#allocation8], 512
    $region45: #{transform_net_forward.3} parent=1 // pred_fallthru
      _
    // Predicated region
    $region46: #{transform_net_forward.3} parent=1 // pred_check
      _
    $region47: #{transform_net_forward.3} parent=1 // pred_check_branch
      %93 = sbr.rel (0) target = $region49
    $region48: #{transform_net_forward.3} parent=1 // pred_region
      %94 = dma.done [#allocation8], 16
    $region49: #{transform_net_forward.3} parent=1 // pred_fallthru
      _
    // Predicated region
    $region50: #{transform_net_forward.3} parent=1 // pred_check
      _
    $region51: #{transform_net_forward.3} parent=1 // pred_check_branch
      %96 = sbr.rel (0) target = $region53
    $region52: #{transform_net_forward.3} parent=1 // pred_region
      %97 = dma.done [#allocation11], 16
    $region53: #{transform_net_forward.3} parent=1 // pred_fallthru
      _
    %v99 = vld [vmem:[%s0] sm:$0xf]
    %v100 = vld [vmem:[%s0 + $0x4] sm:$0xf]
    %v101 = vld [vmem:[%s0 + $0x8] sm:$0xf]
    %v102 = vld [vmem:[%s0 + $0xc] sm:$0xf]
    %v103 = vld [vmem:[#allocation2] sm:$0x7]
    %v108 = vunpack.c.l.b16 %v99
    %v109 = vunpack.c.l.b16 %v100
    %v110 = vunpack.c.l.b16 %v101
    %v111 = vunpack.c.l.b16 %v102
    %v112 = vpack.c.b16 %v109, %v108
    %v113 = vpack.c.b16 %v111, %v110
    %vm114 = vcmask 48128
    %v116 = vsel %vm114, %v112, 0
    %v119 = vsel %vm114, %v113, 0
    %vm121 = vcmask 1042432
    %v123 = vsel %vm121, %v103, 0
    %125 = vmatprep.subr.bf16.mxu0 0
    %126 = vmatpush1.bf16.msra.mxu0 0
    %127 = vmatprep.subr.bf16.mxu0 0
    %128 = vmatpush1.bf16.msra.mxu0 0
    %129 = vmatprep.subr.bf16.mxu0 0
    %130 = vmatpush1.bf16.msra.mxu0 0
    %131 = vmatprep.subr.bf16.mxu0 0
    %132 = vmatpush1.bf16.msra.mxu0 0
    %133 = vmatprep.subr.bf16.mxu0 0
    %134 = vmatpush1.bf16.msra.mxu0 0
    %135 = vmatprep.subr.bf16.mxu0 0
    %136 = vmatpush1.bf16.msra.mxu0 0
    %137 = vmatprep.subr.bf16.mxu0 0
    %138 = vmatpush1.bf16.msra.mxu0 0
    %139 = vmatprep.subr.bf16.mxu0 0
    %140 = vmatpush1.bf16.msra.mxu0 %v123
    %141 = vmatprep.subr.bf16.mxu0 0
    %142 = vmatpush2.bf16.msra.mxu0 0
    %143 = vmatprep.subr.bf16.mxu0 0
    %144 = vmatpush2.bf16.msra.mxu0 0
    %145 = vmatprep.subr.bf16.mxu0 0
    %146 = vmatpush2.bf16.msra.mxu0 0
    %147 = vmatprep.subr.bf16.mxu0 0
    %148 = vmatpush2.bf16.msra.mxu0 0
    %149 = vmatprep.subr.bf16.mxu0 0
    %150 = vmatpush2.bf16.msra.mxu0 0
    %151 = vmatprep.subr.bf16.mxu0 0
    %152 = vmatpush2.bf16.msra.mxu0 0
    %153 = vmatprep.subr.bf16.mxu0 0
    %154 = vmatpush2.bf16.msra.mxu0 0
    %155 = vmatprep.subr.bf16.mxu0 0
    %156 = vmatpush2.bf16.msra.mxu0 0
    %157 = vmatprep.mubr.bf16.mxu0 0
    %158 = vmatmul.mubr.bf16.gmra.mxu0 %v116
    %v159 = vpop.f32.mrf.mxu0
    %v160 = vadd.f32 0.0, %v159
    %v161 = vpop.f32.mrf.mxu0
    %v162 = vpop.f32.mrf.mxu0
    %v163 = vadd.f32 0.0, %v162
    %v164 = vpop.f32.mrf.mxu0
    %165 = vmatprep.mubr.bf16.mxu0 0
    %166 = vmatmul.mubr.bf16.gmra.mxu0 %v119
    %v167 = vpop.f32.mrf.mxu0
    %v168 = vadd.f32 0.0, %v167
    %v169 = vpop.f32.mrf.mxu0
    %v170 = vpop.f32.mrf.mxu0
    %v171 = vadd.f32 0.0, %v170
    %v172 = vpop.f32.mrf.mxu0
    %173 = vdwg.mxu0
    %v174 = vld [vmem:[#allocation4] sm:$0x1]
    %v176 = vlaneseq
    %v177 = vshrl.u32 %v176, 7
    %v178 = vsub.s32 0, %v177
    %v179 = vrot.slane %v174, %v178
    %v181 = vmul.f32 %v160, %v179
    %v182 = vmul.f32 %v163, %v179
    %v183 = vmul.f32 %v168, %v179
    %v184 = vmul.f32 %v171, %v179
    %v185 = vld [vmem:[#allocation6] sm:$0x1]
    %v187 = vlaneseq
    %v188 = vshrl.u32 %v187, 7
    %v189 = vsub.s32 0, %v188
    %v190 = vrot.slane %v185, %v189
    %v192 = vadd.f32 %v181, %v190
    %v193 = vadd.f32 %v182, %v190
    %v194 = vadd.f32 %v183, %v190
    %v195 = vadd.f32 %v184, %v190
    %vm196 = vcmp.gt.f32.partialorder %v192, 0.0
    %vm197 = vcmp.gt.f32.partialorder %v193, 0.0
    %vm198 = vcmp.gt.f32.partialorder %v194, 0.0
    %vm199 = vcmp.gt.f32.partialorder %v195, 0.0
    %v200 = vmul.f32 %v192, 0.2
    %v201 = vmul.f32 %v193, 0.2
    %v202 = vmul.f32 %v194, 0.2
    %v203 = vmul.f32 %v195, 0.2
    %v204 = vsel %vm196, %v192, %v200
    %v205 = vsel %vm197, %v193, %v201
    %v206 = vsel %vm198, %v194, %v202
    %v207 = vsel %vm199, %v195, %v203
    %v208 = vpack.c.bf16 %v205, %v204
    %v209 = vpack.c.bf16 %v207, %v206
    %v210 = vld [vmem:[#allocation7] sm:$0xf]
    %v211 = vld [vmem:[#allocation7 + $0x4] sm:$0xf]
    %v212 = vld [vmem:[#allocation7 + $0x8] sm:$0xf]
    %v213 = vld [vmem:[#allocation7 + $0xc] sm:$0xf]
    %v214 = vld [vmem:[#allocation7 + $0x10] sm:$0xf]
    %v215 = vld [vmem:[#allocation7 + $0x14] sm:$0xf]
    %v216 = vld [vmem:[#allocation7 + $0x18] sm:$0xf]
    %v217 = vld [vmem:[#allocation7 + $0x1c] sm:$0xf]
    %v226 = vunpack.c.l.b16 %v210
    %v227 = vunpack.c.l.b16 %v211
    %v228 = vunpack.c.l.b16 %v212
    %v229 = vunpack.c.l.b16 %v213
    %v230 = vunpack.c.l.b16 %v214
    %v231 = vunpack.c.l.b16 %v215
    %v232 = vunpack.c.l.b16 %v216
    %v233 = vunpack.c.l.b16 %v217
    %v234 = vpack.c.b16 %v227, %v226
    %v235 = vpack.c.b16 %v229, %v228
    %v236 = vpack.c.b16 %v231, %v230
    %v237 = vpack.c.b16 %v233, %v232
    %vm242 = vcmask 523264
    %v244 = vsel %vm242, %v208, 0
    %v247 = vsel %vm242, %v209, 0
    %249 = vmatprep.subr.bf16.mxu0 0
    %250 = vmatpush1.bf16.msra.mxu0 0
    %251 = vmatprep.subr.bf16.mxu0 0
    %252 = vmatpush1.bf16.msra.mxu0 0
    %253 = vmatprep.subr.bf16.mxu0 0
    %254 = vmatpush1.bf16.msra.mxu0 0
    %255 = vmatprep.subr.bf16.mxu0 0
    %256 = vmatpush1.bf16.msra.mxu0 0
    %257 = vmatprep.subr.bf16.mxu0 0
    %258 = vmatpush1.bf16.msra.mxu0 %v237
    %259 = vmatprep.subr.bf16.mxu0 0
    %260 = vmatpush1.bf16.msra.mxu0 %v236
    %261 = vmatprep.subr.bf16.mxu0 0
    %262 = vmatpush1.bf16.msra.mxu0 %v235
    %263 = vmatprep.subr.bf16.mxu0 0
    %264 = vmatpush1.bf16.msra.mxu0 %v234
    %265 = vmatprep.subr.bf16.mxu0 0
    %266 = vmatpush2.bf16.msra.mxu0 0
    %267 = vmatprep.subr.bf16.mxu0 0
    %268 = vmatpush2.bf16.msra.mxu0 0
    %269 = vmatprep.subr.bf16.mxu0 0
    %270 = vmatpush2.bf16.msra.mxu0 0
    %271 = vmatprep.subr.bf16.mxu0 0
    %272 = vmatpush2.bf16.msra.mxu0 0
    %273 = vmatprep.subr.bf16.mxu0 0
    %274 = vmatpush2.bf16.msra.mxu0 0
    %275 = vmatprep.subr.bf16.mxu0 0
    %276 = vmatpush2.bf16.msra.mxu0 0
    %277 = vmatprep.subr.bf16.mxu0 0
    %278 = vmatpush2.bf16.msra.mxu0 0
    %279 = vmatprep.subr.bf16.mxu0 0
    %280 = vmatpush2.bf16.msra.mxu0 0
    %281 = vmatprep.mubr.bf16.mxu0 0
    %282 = vmatmul.mubr.bf16.gmra.mxu0 %v244
    %v283 = vpop.f32.mrf.mxu0
    %v284 = vadd.f32 0.0, %v283
    %v285 = vpop.f32.mrf.mxu0
    %v286 = vpop.f32.mrf.mxu0
    %v287 = vadd.f32 0.0, %v286
    %v288 = vpop.f32.mrf.mxu0
    %289 = vmatprep.mubr.bf16.mxu0 0
    %290 = vmatmul.mubr.bf16.gmra.mxu0 %v247
    %v291 = vpop.f32.mrf.mxu0
    %v292 = vadd.f32 0.0, %v291
    %v293 = vpop.f32.mrf.mxu0
    %v294 = vpop.f32.mrf.mxu0
    %v295 = vadd.f32 0.0, %v294
    %v296 = vpop.f32.mrf.mxu0
    %297 = vdwg.mxu0
    %v298 = vld [vmem:[#allocation9] sm:$0x1]
    %v300 = vlaneseq
    %v301 = vshrl.u32 %v300, 7
    %v302 = vsub.s32 0, %v301
    %v303 = vrot.slane %v298, %v302
    %v305 = vmul.f32 %v284, %v303
    %v306 = vmul.f32 %v287, %v303
    %v307 = vmul.f32 %v292, %v303
    %v308 = vmul.f32 %v295, %v303
    %v309 = vld [vmem:[#allocation10] sm:$0x1]
    %v311 = vlaneseq
    %v312 = vshrl.u32 %v311, 7
    %v313 = vsub.s32 0, %v312
    %v314 = vrot.slane %v309, %v313
    %v316 = vadd.f32 %v305, %v314
    %v317 = vadd.f32 %v306, %v314
    %v318 = vadd.f32 %v307, %v314
    %v319 = vadd.f32 %v308, %v314
    %vm320 = vcmp.gt.f32.partialorder %v316, 0.0
    %vm321 = vcmp.gt.f32.partialorder %v317, 0.0
    %vm322 = vcmp.gt.f32.partialorder %v318, 0.0
    %vm323 = vcmp.gt.f32.partialorder %v319, 0.0
    %v324 = vmul.f32 %v316, 0.2
    %v325 = vmul.f32 %v317, 0.2
    %v326 = vmul.f32 %v318, 0.2
    %v327 = vmul.f32 %v319, 0.2
    %v328 = vsel %vm320, %v316, %v324
    %v329 = vsel %vm321, %v317, %v325
    %v330 = vsel %vm322, %v318, %v326
    %v331 = vsel %vm323, %v319, %v327
    %s332 = scalar_lea.vmem %s0, 16
    %v333 = vld [vmem:[%s332] sm:$0xf]
    %v334 = vld [vmem:[%s332 + $0x4] sm:$0xf]
    %v335 = vld [vmem:[%s332 + $0x8] sm:$0xf]
    %v336 = vld [vmem:[%s332 + $0xc] sm:$0xf]
    %v341 = vunpack.c.l.b16 %v333
    %v342 = vunpack.c.l.b16 %v334
    %v343 = vunpack.c.l.b16 %v335
    %v344 = vunpack.c.l.b16 %v336
    %v345 = vpack.c.b16 %v342, %v341
    %v346 = vpack.c.b16 %v344, %v343
    %v348 = vsel %vm114, %v345, 0
    %v351 = vsel %vm114, %v346, 0
    %353 = vmatprep.subr.bf16.mxu0 0
    %354 = vmatpush1.bf16.msra.mxu0 0
    %355 = vmatprep.subr.bf16.mxu0 0
    %356 = vmatpush1.bf16.msra.mxu0 0
    %357 = vmatprep.subr.bf16.mxu0 0
    %358 = vmatpush1.bf16.msra.mxu0 0
    %359 = vmatprep.subr.bf16.mxu0 0
    %360 = vmatpush1.bf16.msra.mxu0 0
    %361 = vmatprep.subr.bf16.mxu0 0
    %362 = vmatpush1.bf16.msra.mxu0 0
    %363 = vmatprep.subr.bf16.mxu0 0
    %364 = vmatpush1.bf16.msra.mxu0 0
    %365 = vmatprep.subr.bf16.mxu0 0
    %366 = vmatpush1.bf16.msra.mxu0 0
    %367 = vmatprep.subr.bf16.mxu0 0
    %368 = vmatpush1.bf16.msra.mxu0 %v123
    %369 = vmatprep.subr.bf16.mxu0 0
    %370 = vmatpush2.bf16.msra.mxu0 0
    %371 = vmatprep.subr.bf16.mxu0 0
    %372 = vmatpush2.bf16.msra.mxu0 0
    %373 = vmatprep.subr.bf16.mxu0 0
    %374 = vmatpush2.bf16.msra.mxu0 0
    %375 = vmatprep.subr.bf16.mxu0 0
    %376 = vmatpush2.bf16.msra.mxu0 0
    %377 = vmatprep.subr.bf16.mxu0 0
    %378 = vmatpush2.bf16.msra.mxu0 0
    %379 = vmatprep.subr.bf16.mxu0 0
    %380 = vmatpush2.bf16.msra.mxu0 0
    %381 = vmatprep.subr.bf16.mxu0 0
    %382 = vmatpush2.bf16.msra.mxu0 0
    %383 = vmatprep.subr.bf16.mxu0 0
    %384 = vmatpush2.bf16.msra.mxu0 0
    %385 = vmatprep.mubr.bf16.mxu0 0
    %386 = vmatmul.mubr.bf16.gmra.mxu0 %v348
    %v387 = vpop.f32.mrf.mxu0
    %v388 = vadd.f32 0.0, %v387
    %v389 = vpop.f32.mrf.mxu0
    %v390 = vpop.f32.mrf.mxu0
    %v391 = vadd.f32 0.0, %v390
    %v392 = vpop.f32.mrf.mxu0
    %393 = vmatprep.mubr.bf16.mxu0 0
    %394 = vmatmul.mubr.bf16.gmra.mxu0 %v351
    %v395 = vpop.f32.mrf.mxu0
    %v396 = vadd.f32 0.0, %v395
    %v397 = vpop.f32.mrf.mxu0
    %v398 = vpop.f32.mrf.mxu0
    %v399 = vadd.f32 0.0, %v398
    %v400 = vpop.f32.mrf.mxu0
    %401 = vdwg.mxu0
    %v402 = vmul.f32 %v388, %v179
    %v403 = vmul.f32 %v391, %v179
    %v404 = vmul.f32 %v396, %v179
    %v405 = vmul.f32 %v399, %v179
    %v406 = vadd.f32 %v402, %v190
    %v407 = vadd.f32 %v403, %v190
    %v408 = vadd.f32 %v404, %v190
    %v409 = vadd.f32 %v405, %v190
    %vm410 = vcmp.gt.f32.partialorder %v406, 0.0
    %vm411 = vcmp.gt.f32.partialorder %v407, 0.0
    %vm412 = vcmp.gt.f32.partialorder %v408, 0.0
    %vm413 = vcmp.gt.f32.partialorder %v409, 0.0
    %v414 = vmul.f32 %v406, 0.2
    %v415 = vmul.f32 %v407, 0.2
    %v416 = vmul.f32 %v408, 0.2
    %v417 = vmul.f32 %v409, 0.2
    %v418 = vsel %vm410, %v406, %v414
    %v419 = vsel %vm411, %v407, %v415
    %v420 = vsel %vm412, %v408, %v416
    %v421 = vsel %vm413, %v409, %v417
    %v422 = vpack.c.bf16 %v419, %v418
    %v423 = vpack.c.bf16 %v421, %v420
    %v425 = vsel %vm242, %v422, 0
    %v428 = vsel %vm242, %v423, 0
    %430 = vmatprep.subr.bf16.mxu0 0
    %431 = vmatpush1.bf16.msra.mxu0 0
    %432 = vmatprep.subr.bf16.mxu0 0
    %433 = vmatpush1.bf16.msra.mxu0 0
    %434 = vmatprep.subr.bf16.mxu0 0
    %435 = vmatpush1.bf16.msra.mxu0 0
    %436 = vmatprep.subr.bf16.mxu0 0
    %437 = vmatpush1.bf16.msra.mxu0 0
    %438 = vmatprep.subr.bf16.mxu0 0
    %439 = vmatpush1.bf16.msra.mxu0 %v237
    %440 = vmatprep.subr.bf16.mxu0 0
    %441 = vmatpush1.bf16.msra.mxu0 %v236
    %442 = vmatprep.subr.bf16.mxu0 0
    %443 = vmatpush1.bf16.msra.mxu0 %v235
    %444 = vmatprep.subr.bf16.mxu0 0
    %445 = vmatpush1.bf16.msra.mxu0 %v234
    %446 = vmatprep.subr.bf16.mxu0 0
    %447 = vmatpush2.bf16.msra.mxu0 0
    %448 = vmatprep.subr.bf16.mxu0 0
    %449 = vmatpush2.bf16.msra.mxu0 0
    %450 = vmatprep.subr.bf16.mxu0 0
    %451 = vmatpush2.bf16.msra.mxu0 0
    %452 = vmatprep.subr.bf16.mxu0 0
    %453 = vmatpush2.bf16.msra.mxu0 0
    %454 = vmatprep.subr.bf16.mxu0 0
    %455 = vmatpush2.bf16.msra.mxu0 0
    %456 = vmatprep.subr.bf16.mxu0 0
    %457 = vmatpush2.bf16.msra.mxu0 0
    %458 = vmatprep.subr.bf16.mxu0 0
    %459 = vmatpush2.bf16.msra.mxu0 0
    %460 = vmatprep.subr.bf16.mxu0 0
    %461 = vmatpush2.bf16.msra.mxu0 0
    %462 = vmatprep.mubr.bf16.mxu0 0
    %463 = vmatmul.mubr.bf16.gmra.mxu0 %v425
    %v464 = vpop.f32.mrf.mxu0
    %v465 = vadd.f32 0.0, %v464
    %v466 = vpop.f32.mrf.mxu0
    %v467 = vpop.f32.mrf.mxu0
    %v468 = vadd.f32 0.0, %v467
    %v469 = vpop.f32.mrf.mxu0
    %470 = vmatprep.mubr.bf16.mxu0 0
    %471 = vmatmul.mubr.bf16.gmra.mxu0 %v428
    %v472 = vpop.f32.mrf.mxu0
    %v473 = vadd.f32 0.0, %v472
    %v474 = vpop.f32.mrf.mxu0
    %v475 = vpop.f32.mrf.mxu0
    %v476 = vadd.f32 0.0, %v475
    %v477 = vpop.f32.mrf.mxu0
    %478 = vdwg.mxu0
    %v479 = vmul.f32 %v465, %v303
    %v480 = vmul.f32 %v468, %v303
    %v481 = vmul.f32 %v473, %v303
    %v482 = vmul.f32 %v476, %v303
    %v483 = vadd.f32 %v479, %v314
    %v484 = vadd.f32 %v480, %v314
    %v485 = vadd.f32 %v481, %v314
    %v486 = vadd.f32 %v482, %v314
    %vm487 = vcmp.gt.f32.partialorder %v483, 0.0
    %vm488 = vcmp.gt.f32.partialorder %v484, 0.0
    %vm489 = vcmp.gt.f32.partialorder %v485, 0.0
    %vm490 = vcmp.gt.f32.partialorder %v486, 0.0
    %v491 = vmul.f32 %v483, 0.2
    %v492 = vmul.f32 %v484, 0.2
    %v493 = vmul.f32 %v485, 0.2
    %v494 = vmul.f32 %v486, 0.2
    %v495 = vsel %vm487, %v483, %v491
    %v496 = vsel %vm488, %v484, %v492
    %v497 = vsel %vm489, %v485, %v493
    %v498 = vsel %vm490, %v486, %v494
    %v499 = vmax.f32 %v328, %v495
    %v500 = vmax.f32 %v329, %v496
    %v501 = vmax.f32 %v330, %v497
    %v502 = vmax.f32 %v331, %v498
    %s503 = scalar_lea.vmem %s0, 32
    %v504 = vld [vmem:[%s503] sm:$0xf]
    %v505 = vld [vmem:[%s503 + $0x4] sm:$0xf]
    %v506 = vld [vmem:[%s503 + $0x8] sm:$0xf]
    %v507 = vld [vmem:[%s503 + $0xc] sm:$0xf]
    %v512 = vunpack.c.l.b16 %v504
    %v513 = vunpack.c.l.b16 %v505
    %v514 = vunpack.c.l.b16 %v506
    %v515 = vunpack.c.l.b16 %v507
    %v516 = vpack.c.b16 %v513, %v512
    %v517 = vpack.c.b16 %v515, %v514
    %v519 = vsel %vm114, %v516, 0
    %v522 = vsel %vm114, %v517, 0
    %524 = vmatprep.subr.bf16.mxu0 0
    %525 = vmatpush1.bf16.msra.mxu0 0
    %526 = vmatprep.subr.bf16.mxu0 0
    %527 = vmatpush1.bf16.msra.mxu0 0
    %528 = vmatprep.subr.bf16.mxu0 0
    %529 = vmatpush1.bf16.msra.mxu0 0
    %530 = vmatprep.subr.bf16.mxu0 0
    %531 = vmatpush1.bf16.msra.mxu0 0
    %532 = vmatprep.subr.bf16.mxu0 0
    %533 = vmatpush1.bf16.msra.mxu0 0
    %534 = vmatprep.subr.bf16.mxu0 0
    %535 = vmatpush1.bf16.msra.mxu0 0
    %536 = vmatprep.subr.bf16.mxu0 0
    %537 = vmatpush1.bf16.msra.mxu0 0
    %538 = vmatprep.subr.bf16.mxu0 0
    %539 = vmatpush1.bf16.msra.mxu0 %v123
    %540 = vmatprep.subr.bf16.mxu0 0
    %541 = vmatpush2.bf16.msra.mxu0 0
    %542 = vmatprep.subr.bf16.mxu0 0
    %543 = vmatpush2.bf16.msra.mxu0 0
    %544 = vmatprep.subr.bf16.mxu0 0
    %545 = vmatpush2.bf16.msra.mxu0 0
    %546 = vmatprep.subr.bf16.mxu0 0
    %547 = vmatpush2.bf16.msra.mxu0 0
    %548 = vmatprep.subr.bf16.mxu0 0
    %549 = vmatpush2.bf16.msra.mxu0 0
    %550 = vmatprep.subr.bf16.mxu0 0
    %551 = vmatpush2.bf16.msra.mxu0 0
    %552 = vmatprep.subr.bf16.mxu0 0
    %553 = vmatpush2.bf16.msra.mxu0 0
    %554 = vmatprep.subr.bf16.mxu0 0
    %555 = vmatpush2.bf16.msra.mxu0 0
    %556 = vmatprep.mubr.bf16.mxu0 0
    %557 = vmatmul.mubr.bf16.gmra.mxu0 %v519
    %v558 = vpop.f32.mrf.mxu0
    %v559 = vadd.f32 0.0, %v558
    %v560 = vpop.f32.mrf.mxu0
    %v561 = vpop.f32.mrf.mxu0
    %v562 = vadd.f32 0.0, %v561
    %v563 = vpop.f32.mrf.mxu0
    %564 = vmatprep.mubr.bf16.mxu0 0
    %565 = vmatmul.mubr.bf16.gmra.mxu0 %v522
    %v566 = vpop.f32.mrf.mxu0
    %v567 = vadd.f32 0.0, %v566
    %v568 = vpop.f32.mrf.mxu0
    %v569 = vpop.f32.mrf.mxu0
    %v570 = vadd.f32 0.0, %v569
    %v571 = vpop.f32.mrf.mxu0
    %572 = vdwg.mxu0
    %v573 = vmul.f32 %v559, %v179
    %v574 = vmul.f32 %v562, %v179
    %v575 = vmul.f32 %v567, %v179
    %v576 = vmul.f32 %v570, %v179
    %v577 = vadd.f32 %v573, %v190
    %v578 = vadd.f32 %v574, %v190
    %v579 = vadd.f32 %v575, %v190
    %v580 = vadd.f32 %v576, %v190
    %vm581 = vcmp.gt.f32.partialorder %v577, 0.0
    %vm582 = vcmp.gt.f32.partialorder %v578, 0.0
    %vm583 = vcmp.gt.f32.partialorder %v579, 0.0
    %vm584 = vcmp.gt.f32.partialorder %v580, 0.0
    %v585 = vmul.f32 %v577, 0.2
    %v586 = vmul.f32 %v578, 0.2
    %v587 = vmul.f32 %v579, 0.2
    %v588 = vmul.f32 %v580, 0.2
    %v589 = vsel %vm581, %v577, %v585
    %v590 = vsel %vm582, %v578, %v586
    %v591 = vsel %vm583, %v579, %v587
    %v592 = vsel %vm584, %v580, %v588
    %v593 = vpack.c.bf16 %v590, %v589
    %v594 = vpack.c.bf16 %v592, %v591
    %v596 = vsel %vm242, %v593, 0
    %v599 = vsel %vm242, %v594, 0
    %601 = vmatprep.subr.bf16.mxu0 0
    %602 = vmatpush1.bf16.msra.mxu0 0
    %603 = vmatprep.subr.bf16.mxu0 0
    %604 = vmatpush1.bf16.msra.mxu0 0
    %605 = vmatprep.subr.bf16.mxu0 0
    %606 = vmatpush1.bf16.msra.mxu0 0
    %607 = vmatprep.subr.bf16.mxu0 0
    %608 = vmatpush1.bf16.msra.mxu0 0
    %609 = vmatprep.subr.bf16.mxu0 0
    %610 = vmatpush1.bf16.msra.mxu0 %v237
    %611 = vmatprep.subr.bf16.mxu0 0
    %612 = vmatpush1.bf16.msra.mxu0 %v236
    %613 = vmatprep.subr.bf16.mxu0 0
    %614 = vmatpush1.bf16.msra.mxu0 %v235
    %615 = vmatprep.subr.bf16.mxu0 0
    %616 = vmatpush1.bf16.msra.mxu0 %v234
    %617 = vmatprep.subr.bf16.mxu0 0
    %618 = vmatpush2.bf16.msra.mxu0 0
    %619 = vmatprep.subr.bf16.mxu0 0
    %620 = vmatpush2.bf16.msra.mxu0 0
    %621 = vmatprep.subr.bf16.mxu0 0
    %622 = vmatpush2.bf16.msra.mxu0 0
    %623 = vmatprep.subr.bf16.mxu0 0
    %624 = vmatpush2.bf16.msra.mxu0 0
    %625 = vmatprep.subr.bf16.mxu0 0
    %626 = vmatpush2.bf16.msra.mxu0 0
    %627 = vmatprep.subr.bf16.mxu0 0
    %628 = vmatpush2.bf16.msra.mxu0 0
    %629 = vmatprep.subr.bf16.mxu0 0
    %630 = vmatpush2.bf16.msra.mxu0 0
    %631 = vmatprep.subr.bf16.mxu0 0
    %632 = vmatpush2.bf16.msra.mxu0 0
    %633 = vmatprep.mubr.bf16.mxu0 0
    %634 = vmatmul.mubr.bf16.gmra.mxu0 %v596
    %v635 = vpop.f32.mrf.mxu0
    %v636 = vadd.f32 0.0, %v635
    %v637 = vpop.f32.mrf.mxu0
    %v638 = vpop.f32.mrf.mxu0
    %v639 = vadd.f32 0.0, %v638
    %v640 = vpop.f32.mrf.mxu0
    %641 = vmatprep.mubr.bf16.mxu0 0
    %642 = vmatmul.mubr.bf16.gmra.mxu0 %v599
    %v643 = vpop.f32.mrf.mxu0
    %v644 = vadd.f32 0.0, %v643
    %v645 = vpop.f32.mrf.mxu0
    %v646 = vpop.f32.mrf.mxu0
    %v647 = vadd.f32 0.0, %v646
    %v648 = vpop.f32.mrf.mxu0
    %649 = vdwg.mxu0
    %v650 = vmul.f32 %v636, %v303
    %v651 = vmul.f32 %v639, %v303
    %v652 = vmul.f32 %v644, %v303
    %v653 = vmul.f32 %v647, %v303
    %v654 = vadd.f32 %v650, %v314
    %v655 = vadd.f32 %v651, %v314
    %v656 = vadd.f32 %v652, %v314
    %v657 = vadd.f32 %v653, %v314
    %vm658 = vcmp.gt.f32.partialorder %v654, 0.0
    %vm659 = vcmp.gt.f32.partialorder %v655, 0.0
    %vm660 = vcmp.gt.f32.partialorder %v656, 0.0
    %vm661 = vcmp.gt.f32.partialorder %v657, 0.0
    %v662 = vmul.f32 %v654, 0.2
    %v663 = vmul.f32 %v655, 0.2
    %v664 = vmul.f32 %v656, 0.2
    %v665 = vmul.f32 %v657, 0.2
    %v666 = vsel %vm658, %v654, %v662
    %v667 = vsel %vm659, %v655, %v663
    %v668 = vsel %vm660, %v656, %v664
    %v669 = vsel %vm661, %v657, %v665
    %v670 = vmax.f32 %v499, %v666
    %v671 = vmax.f32 %v500, %v667
    %v672 = vmax.f32 %v501, %v668
    %v673 = vmax.f32 %v502, %v669
    %s674 = scalar_lea.vmem %s0, 48
    %v675 = vld [vmem:[%s674] sm:$0xf]
    %v676 = vld [vmem:[%s674 + $0x4] sm:$0xf]
    %v677 = vld [vmem:[%s674 + $0x8] sm:$0xf]
    %v678 = vld [vmem:[%s674 + $0xc] sm:$0xf]
    %v683 = vunpack.c.l.b16 %v675
    %v684 = vunpack.c.l.b16 %v676
    %v685 = vunpack.c.l.b16 %v677
    %v686 = vunpack.c.l.b16 %v678
    %v687 = vpack.c.b16 %v684, %v683
    %v688 = vpack.c.b16 %v686, %v685
    %v690 = vsel %vm114, %v687, 0
    %v693 = vsel %vm114, %v688, 0
    %695 = vmatprep.subr.bf16.mxu0 0
    %696 = vmatpush1.bf16.msra.mxu0 0
    %697 = vmatprep.subr.bf16.mxu0 0
    %698 = vmatpush1.bf16.msra.mxu0 0
    %699 = vmatprep.subr.bf16.mxu0 0
    %700 = vmatpush1.bf16.msra.mxu0 0
    %701 = vmatprep.subr.bf16.mxu0 0
    %702 = vmatpush1.bf16.msra.mxu0 0
    %703 = vmatprep.subr.bf16.mxu0 0
    %704 = vmatpush1.bf16.msra.mxu0 0
    %705 = vmatprep.subr.bf16.mxu0 0
    %706 = vmatpush1.bf16.msra.mxu0 0
    %707 = vmatprep.subr.bf16.mxu0 0
    %708 = vmatpush1.bf16.msra.mxu0 0
    %709 = vmatprep.subr.bf16.mxu0 0
    %710 = vmatpush1.bf16.msra.mxu0 %v123
    %711 = vmatprep.subr.bf16.mxu0 0
    %712 = vmatpush2.bf16.msra.mxu0 0
    %713 = vmatprep.subr.bf16.mxu0 0
    %714 = vmatpush2.bf16.msra.mxu0 0
    %715 = vmatprep.subr.bf16.mxu0 0
    %716 = vmatpush2.bf16.msra.mxu0 0
    %717 = vmatprep.subr.bf16.mxu0 0
    %718 = vmatpush2.bf16.msra.mxu0 0
    %719 = vmatprep.subr.bf16.mxu0 0
    %720 = vmatpush2.bf16.msra.mxu0 0
    %721 = vmatprep.subr.bf16.mxu0 0
    %722 = vmatpush2.bf16.msra.mxu0 0
    %723 = vmatprep.subr.bf16.mxu0 0
    %724 = vmatpush2.bf16.msra.mxu0 0
    %725 = vmatprep.subr.bf16.mxu0 0
    %726 = vmatpush2.bf16.msra.mxu0 0
    %727 = vmatprep.mubr.bf16.mxu0 0
    %728 = vmatmul.mubr.bf16.gmra.mxu0 %v690
    %v729 = vpop.f32.mrf.mxu0
    %v730 = vadd.f32 0.0, %v729
    %v731 = vpop.f32.mrf.mxu0
    %v732 = vpop.f32.mrf.mxu0
    %v733 = vadd.f32 0.0, %v732
    %v734 = vpop.f32.mrf.mxu0
    %735 = vmatprep.mubr.bf16.mxu0 0
    %736 = vmatmul.mubr.bf16.gmra.mxu0 %v693
    %v737 = vpop.f32.mrf.mxu0
    %v738 = vadd.f32 0.0, %v737
    %v739 = vpop.f32.mrf.mxu0
    %v740 = vpop.f32.mrf.mxu0
    %v741 = vadd.f32 0.0, %v740
    %v742 = vpop.f32.mrf.mxu0
    %743 = vdwg.mxu0
    %v744 = vmul.f32 %v730, %v179
    %v745 = vmul.f32 %v733, %v179
    %v746 = vmul.f32 %v738, %v179
    %v747 = vmul.f32 %v741, %v179
    %v748 = vadd.f32 %v744, %v190
    %v749 = vadd.f32 %v745, %v190
    %v750 = vadd.f32 %v746, %v190
    %v751 = vadd.f32 %v747, %v190
    %vm752 = vcmp.gt.f32.partialorder %v748, 0.0
    %vm753 = vcmp.gt.f32.partialorder %v749, 0.0
    %vm754 = vcmp.gt.f32.partialorder %v750, 0.0
    %vm755 = vcmp.gt.f32.partialorder %v751, 0.0
    %v756 = vmul.f32 %v748, 0.2
    %v757 = vmul.f32 %v749, 0.2
    %v758 = vmul.f32 %v750, 0.2
    %v759 = vmul.f32 %v751, 0.2
    %v760 = vsel %vm752, %v748, %v756
    %v761 = vsel %vm753, %v749, %v757
    %v762 = vsel %vm754, %v750, %v758
    %v763 = vsel %vm755, %v751, %v759
    %v764 = vpack.c.bf16 %v761, %v760
    %v765 = vpack.c.bf16 %v763, %v762
    %v767 = vsel %vm242, %v764, 0
    %v770 = vsel %vm242, %v765, 0
    %772 = vmatprep.subr.bf16.mxu0 0
    %773 = vmatpush1.bf16.msra.mxu0 0
    %774 = vmatprep.subr.bf16.mxu0 0
    %775 = vmatpush1.bf16.msra.mxu0 0
    %776 = vmatprep.subr.bf16.mxu0 0
    %777 = vmatpush1.bf16.msra.mxu0 0
    %778 = vmatprep.subr.bf16.mxu0 0
    %779 = vmatpush1.bf16.msra.mxu0 0
    %780 = vmatprep.subr.bf16.mxu0 0
    %781 = vmatpush1.bf16.msra.mxu0 %v237
    %782 = vmatprep.subr.bf16.mxu0 0
    %783 = vmatpush1.bf16.msra.mxu0 %v236
    %784 = vmatprep.subr.bf16.mxu0 0
    %785 = vmatpush1.bf16.msra.mxu0 %v235
    %786 = vmatprep.subr.bf16.mxu0 0
    %787 = vmatpush1.bf16.msra.mxu0 %v234
    %788 = vmatprep.subr.bf16.mxu0 0
    %789 = vmatpush2.bf16.msra.mxu0 0
    %790 = vmatprep.subr.bf16.mxu0 0
    %791 = vmatpush2.bf16.msra.mxu0 0
    %792 = vmatprep.subr.bf16.mxu0 0
    %793 = vmatpush2.bf16.msra.mxu0 0
    %794 = vmatprep.subr.bf16.mxu0 0
    %795 = vmatpush2.bf16.msra.mxu0 0
    %796 = vmatprep.subr.bf16.mxu0 0
    %797 = vmatpush2.bf16.msra.mxu0 0
    %798 = vmatprep.subr.bf16.mxu0 0
    %799 = vmatpush2.bf16.msra.mxu0 0
    %800 = vmatprep.subr.bf16.mxu0 0
    %801 = vmatpush2.bf16.msra.mxu0 0
    %802 = vmatprep.subr.bf16.mxu0 0
    %803 = vmatpush2.bf16.msra.mxu0 0
    %804 = vmatprep.mubr.bf16.mxu0 0
    %805 = vmatmul.mubr.bf16.gmra.mxu0 %v767
    %v806 = vpop.f32.mrf.mxu0
    %v807 = vadd.f32 0.0, %v806
    %v808 = vpop.f32.mrf.mxu0
    %v809 = vpop.f32.mrf.mxu0
    %v810 = vadd.f32 0.0, %v809
    %v811 = vpop.f32.mrf.mxu0
    %812 = vmatprep.mubr.bf16.mxu0 0
    %813 = vmatmul.mubr.bf16.gmra.mxu0 %v770
    %v814 = vpop.f32.mrf.mxu0
    %v815 = vadd.f32 0.0, %v814
    %v816 = vpop.f32.mrf.mxu0
    %v817 = vpop.f32.mrf.mxu0
    %v818 = vadd.f32 0.0, %v817
    %v819 = vpop.f32.mrf.mxu0
    %820 = vdwg.mxu0
    %v821 = vmul.f32 %v807, %v303
    %v822 = vmul.f32 %v810, %v303
    %v823 = vmul.f32 %v815, %v303
    %v824 = vmul.f32 %v818, %v303
    %v825 = vadd.f32 %v821, %v314
    %v826 = vadd.f32 %v822, %v314
    %v827 = vadd.f32 %v823, %v314
    %v828 = vadd.f32 %v824, %v314
    %vm829 = vcmp.gt.f32.partialorder %v825, 0.0
    %vm830 = vcmp.gt.f32.partialorder %v826, 0.0
    %vm831 = vcmp.gt.f32.partialorder %v827, 0.0
    %vm832 = vcmp.gt.f32.partialorder %v828, 0.0
    %v833 = vmul.f32 %v825, 0.2
    %v834 = vmul.f32 %v826, 0.2
    %v835 = vmul.f32 %v827, 0.2
    %v836 = vmul.f32 %v828, 0.2
    %v837 = vsel %vm829, %v825, %v833
    %v838 = vsel %vm830, %v826, %v834
    %v839 = vsel %vm831, %v827, %v835
    %v840 = vsel %vm832, %v828, %v836
    %v841 = vmax.f32 %v670, %v837
    %v842 = vmax.f32 %v671, %v838
    %v843 = vmax.f32 %v672, %v839
    %v844 = vmax.f32 %v673, %v840
    %845 = vst [vmem:[%s7] sm:$0xff] %v841
    %846 = vst [vmem:[%s7 + $0x8] sm:$0xff] %v842
    %847 = vst [vmem:[%s7 + $0x10] sm:$0xff] %v843
    %848 = vst [vmem:[%s7 + $0x18] sm:$0xff] %v844
    // Predicated region
    $region54: #{transform_net_forward.3} parent=1 // pred_check
      _
    $region55: #{transform_net_forward.3} parent=1 // pred_check_branch
      %850 = sbr.rel (0) target = $region57
    $region56: #{transform_net_forward.3} parent=1 // pred_region
      _
    $region57: #{transform_net_forward.3} parent=1 // pred_fallthru
      _
    // Predicated region
    $region58: #{transform_net_forward.3} parent=1 // pred_check
      _
    $region59: #{transform_net_forward.3} parent=1 // pred_check_branch
      %852 = sbr.rel (0) target = $region61
    $region60: #{transform_net_forward.3} parent=1 // pred_region
      _
    $region61: #{transform_net_forward.3} parent=1 // pred_fallthru
      _
    %853 = vsyncpa [#allocation3], 1
    %854 = vsyncpa [#allocation5], 1
    %855 = vsyncpa [#allocation8], 1
    %856 = vsyncpa [#allocation11], 1

// kernel: transform_net_forward.4
$region0: #{transform_net_forward.4}
  #allocation0 [shape = 'u32[]', space=smem, size = 0x4, offset = 0x4, fixed_abs, tag = 'smem constant byte address 0x4 - core index']
  #allocation1 [shape = 'u32[144,128]{1,0:T(1,128)}', space=vmem, size = 0x12000, scoped, tag = 'internal scratch']
  %s0 = inlined_call_operand.vmem [shape: bf16[2,16,128], index: 0, kind: input, shape index: {}]
  %s1 = inlined_call_operand.hbm [shape: bf16[128,1024], index: 1, kind: input, shape index: {}]
  %s2 = inlined_call_operand.hbm [shape: f32[1,1024], index: 2, kind: input, shape index: {}]
  %s3 = inlined_call_operand.hbm [shape: f32[1,1024], index: 3, kind: input, shape index: {}]
  %s4 = inlined_call_operand.vmem [shape: f32[2,1,1024], index: 4, kind: output, shape index: {}]
  %s5 = sld [smem:[#allocation0]]
  $region69: #{transform_net_forward.4} parent=0
    _
  %s7 = ssub.s32 1, %s5
  %s8 = scalar_select 0, %s7, %s5
  $region1: #{transform_net_forward.4} parent=0
    #allocation2 [shape = 'u8[262144]{0}', space=vmem, size = 0x40000, scoped, tag = 'input window, operand 1, single buffered']
    #allocation3 [shape = 's32[2]{0}', space=sflag, size = 0x8, scoped, tag = 'scoped memory for transform_net_forward.4']
    #allocation4 [shape = 'u8[4096]{0}', space=vmem, size = 0x1000, scoped, tag = 'input window, operand 2, single buffered']
    #allocation5 [shape = 's32[1]{0}', space=sflag, size = 0x4, scoped, tag = 'scoped memory for transform_net_forward.4']
    #allocation6 [shape = 'u8[4096]{0}', space=vmem, size = 0x1000, scoped, tag = 'input window, operand 3, single buffered']
    %9 = vsyncpa [#allocation3], 0
    %10 = vsyncpa [#allocation5], 0
    loop: start=0, step=1, limit=4
    $region2: #{transform_net_forward.4} parent=1 // loop_pre_header
      _
    $region3: #{transform_net_forward.4} parent=1 // loop_header
      %s12 = sphi 0, %s16
      %p13 = scmp.ge.s32.totalorder %s12, 4
      %s19 = sphi 0, %s31
      %s20 = sphi 0, %s27
      %s21 = sphi 0, %s19
      %s22 = sphi 0, %s20
      %s23 = sphi 0, %s21
      %s24 = sphi 0, %s22
      %s36 = sphi 0, %s38
      %s39 = sphi 0, %s36
      %s40 = sphi 0, %s39
      %s56 = sphi 0, %s40
      %s60 = sphi 0, %s60
      %s62 = sphi 0, %s60
      %s63 = sphi 0, %s62
      %s77 = sphi 0, %s63
      %s81 = sphi 0, %s81
      %s83 = sphi 0, %s81
      %s84 = sphi 0, %s83
      %s98 = sphi 0, %s84
      %s102 = sphi 0, %s102
      %s104 = sphi 0, %s102
      %s105 = sphi 0, %s104
      %s119 = sphi 0, %s105
      %s125 = sphi 0, %s127
      %s128 = sphi 0, %s125
      %s129 = sphi 0, %s128
      %s145 = sphi 0, %s129
    $region4: #{transform_net_forward.4} parent=1 // loop_header_branch
      %15 = sbr.rel (%p13) target = $region8
    $region5: #{transform_net_forward.4} parent=1 // loop_body
      %s17 = ssub.s32 %s12, 1
      %s18 = ssub.s32 %s12, 2
      %s25 = sadd.s32 1, %s20
      %p26 = scmp.ge.s32.totalorder %s25, 1
      %s27 = scalar_select %p26, 0, %s25
      %s28 = sadd.s32 1, %s19
      %s29 = scalar_select %p26, %s28, %s19
      %p30 = scmp.ge.s32.totalorder %s29, 2
      %s31 = scalar_select %p30, 0, %s29
      %s32 = ssub.s32 %s19, %s31
      %s33 = ssub.s32 %s20, %s27
      %s34 = sor.u32 %s32, %s33
      %p35 = scmp.eq.s32.totalorder %s34, 0
      %s37 = sadd.s32 %s36, 1
      %s38 = scalar_select %p35, %s36, %s37
      %p41 = pneg %p35
      %p42 = scmp.eq.s32.totalorder %s12, 1
      %p43 = por %p41, %p42
      %p44 = scmp.ne.s32.totalorder %s36, %s39
      %p45 = scmp.eq.s32.totalorder %s12, 0
      %p46 = por %p44, %p45
      %p47 = scmp.ne.s32.totalorder %s36, %s39
      %p48 = scmp.eq.s32.totalorder %s17, 1
      %p49 = por %p47, %p48
      %p50 = scmp.ne.s32.totalorder %s39, %s40
      %p51 = scmp.eq.s32.totalorder %s17, 0
      %p52 = por %p50, %p51
      %p53 = scmp.ne.s32.totalorder %s39, %s40
      %p54 = scmp.eq.s32.totalorder %s18, 1
      %p55 = por %p53, %p54
      %p57 = scmp.ne.s32.totalorder %s40, %s56
      %p58 = scmp.eq.s32.totalorder %s18, 0
      %p59 = por %p57, %p58
      %s61 = sadd.s32 %s60, 1
      %p64 = scmp.eq.s32.totalorder %s12, 1
      %p65 = scmp.ne.s32.totalorder %s60, %s62
      %p66 = scmp.eq.s32.totalorder %s12, 0
      %p67 = por %p65, %p66
      %p68 = scmp.ne.s32.totalorder %s60, %s62
      %p69 = scmp.eq.s32.totalorder %s17, 1
      %p70 = por %p68, %p69
      %p71 = scmp.ne.s32.totalorder %s62, %s63
      %p72 = scmp.eq.s32.totalorder %s17, 0
      %p73 = por %p71, %p72
      %p74 = scmp.ne.s32.totalorder %s62, %s63
      %p75 = scmp.eq.s32.totalorder %s18, 1
      %p76 = por %p74, %p75
      %p78 = scmp.ne.s32.totalorder %s63, %s77
      %p79 = scmp.eq.s32.totalorder %s18, 0
      %p80 = por %p78, %p79
      %s82 = sadd.s32 %s81, 1
      %p85 = scmp.eq.s32.totalorder %s12, 1
      %p86 = scmp.ne.s32.totalorder %s81, %s83
      %p87 = scmp.eq.s32.totalorder %s12, 0
      %p88 = por %p86, %p87
      %p89 = scmp.ne.s32.totalorder %s81, %s83
      %p90 = scmp.eq.s32.totalorder %s17, 1
      %p91 = por %p89, %p90
      %p92 = scmp.ne.s32.totalorder %s83, %s84
      %p93 = scmp.eq.s32.totalorder %s17, 0
      %p94 = por %p92, %p93
      %p95 = scmp.ne.s32.totalorder %s83, %s84
      %p96 = scmp.eq.s32.totalorder %s18, 1
      %p97 = por %p95, %p96
      %p99 = scmp.ne.s32.totalorder %s84, %s98
      %p100 = scmp.eq.s32.totalorder %s18, 0
      %p101 = por %p99, %p100
      %s103 = sadd.s32 %s102, 1
      %p106 = scmp.eq.s32.totalorder %s12, 1
      %p107 = scmp.ne.s32.totalorder %s102, %s104
      %p108 = scmp.eq.s32.totalorder %s12, 0
      %p109 = por %p107, %p108
      %p110 = scmp.ne.s32.totalorder %s102, %s104
      %p111 = scmp.eq.s32.totalorder %s17, 1
      %p112 = por %p110, %p111
      %p113 = scmp.ne.s32.totalorder %s104, %s105
      %p114 = scmp.eq.s32.totalorder %s17, 0
      %p115 = por %p113, %p114
      %p116 = scmp.ne.s32.totalorder %s104, %s105
      %p117 = scmp.eq.s32.totalorder %s18, 1
      %p118 = por %p116, %p117
      %p120 = scmp.ne.s32.totalorder %s105, %s119
      %p121 = scmp.eq.s32.totalorder %s18, 0
      %p122 = por %p120, %p121
      %s123 = ssub.s32 %s19, %s31
      %p124 = scmp.eq.s32.totalorder %s123, 0
      %s126 = sadd.s32 %s125, 1
      %s127 = scalar_select %p124, %s125, %s126
      %p130 = pneg %p124
      %p131 = scmp.eq.s32.totalorder %s12, 1
      %p132 = por %p130, %p131
      %p133 = scmp.ne.s32.totalorder %s125, %s128
      %p134 = scmp.eq.s32.totalorder %s12, 0
      %p135 = por %p133, %p134
      %p136 = scmp.ne.s32.totalorder %s125, %s128
      %p137 = scmp.eq.s32.totalorder %s17, 1
      %p138 = por %p136, %p137
      %p139 = scmp.ne.s32.totalorder %s128, %s129
      %p140 = scmp.eq.s32.totalorder %s17, 0
      %p141 = por %p139, %p140
      %p142 = scmp.ne.s32.totalorder %s128, %s129
      %p143 = scmp.eq.s32.totalorder %s18, 1
      %p144 = por %p142, %p143
      %p146 = scmp.ne.s32.totalorder %s129, %s145
      %p147 = scmp.eq.s32.totalorder %s18, 0
      %p148 = por %p146, %p147
      %p149 = scmp.le.s32.totalorder 1, %s12
      %p150 = scmp.lt.s32.totalorder %s12, 3
      %p151 = pnand %p149, %p150
      %p152 = pneg %p151
      // Predicated region
      $region9: #{transform_net_forward.4} parent=5 // pred_check
        _
      $region10: #{transform_net_forward.4} parent=5 // pred_check_branch
        %154 = sbr.rel (%p151) target = $region12
      $region11: #{transform_net_forward.4} parent=5 // pred_region
        %s155 = ssub.s32 %s12, 1
        // Predicated region
        $region13: #{transform_net_forward.4} parent=11 // pred_check
          %p156 = pneg %p73
        $region14: #{transform_net_forward.4} parent=11 // pred_check_branch
          %158 = sbr.rel (%p156) target = $region16
        $region15: #{transform_net_forward.4} parent=11 // pred_region
          %s160 = ssub.s32 8192, 8192
          %161 = vsyncadd [#allocation3], %s160
          %s162 = sshll.u32 [#allocation2], 4
          %s163 = int_to_ptr.vmem [resolvable:$true] %s162
          %168 = dma.hbm_to_vmem [thread:$0]  %s1, 8192, %s163, [#allocation3], 512, 512, 32
        $region16: #{transform_net_forward.4} parent=11 // pred_fallthru
          _
        // Predicated region
        $region17: #{transform_net_forward.4} parent=11 // pred_check
          %p169 = pneg %p94
        $region18: #{transform_net_forward.4} parent=11 // pred_check_branch
          %171 = sbr.rel (%p169) target = $region20
        $region19: #{transform_net_forward.4} parent=11 // pred_region
          %s173 = ssub.s32 128, 128
          %174 = vsyncadd [#allocation5], %s173
          %s176 = sshll.u32 [#allocation4], 4
          %s177 = int_to_ptr.vmem [resolvable:$true] %s176
          %179 = dma.hbm_to_vmem [thread:$0]  %s2, 128, %s177, [#allocation5]
        $region20: #{transform_net_forward.4} parent=11 // pred_fallthru
          _
        // Predicated region
        $region21: #{transform_net_forward.4} parent=11 // pred_check
          %p180 = pneg %p115
        $region22: #{transform_net_forward.4} parent=11 // pred_check_branch
          %182 = sbr.rel (%p180) target = $region24
        $region23: #{transform_net_forward.4} parent=11 // pred_region
          %s184 = ssub.s32 128, 128
          %185 = vsyncadd [#allocation5], %s184
          %s187 = sshll.u32 [#allocation6], 4
          %s188 = int_to_ptr.vmem [resolvable:$true] %s187
          %190 = dma.hbm_to_vmem [thread:$0]  %s3, 128, %s188, [#allocation5]
        $region24: #{transform_net_forward.4} parent=11 // pred_fallthru
          _
      $region12: #{transform_net_forward.4} parent=5 // pred_fallthru
        _
      %p191 = scmp.lt.s32.totalorder %s12, 2
      // Predicated region
      $region25: #{transform_net_forward.4} parent=5 // pred_check
        %p192 = pneg %p191
      $region26: #{transform_net_forward.4} parent=5 // pred_check_branch
        %194 = sbr.rel (%p192) target = $region28
      $region27: #{transform_net_forward.4} parent=5 // pred_region
        // Predicated region
        $region29: #{transform_net_forward.4} parent=27 // pred_check
          %p195 = pneg %p46
        $region30: #{transform_net_forward.4} parent=27 // pred_check_branch
          %197 = sbr.rel (%p195) target = $region32
        $region31: #{transform_net_forward.4} parent=27 // pred_region
          %s198 = smul.u32 2, %s20
          %p199 = scmp.lt.s32.totalorder %s19, 1
          %s200 = scalar_select %p199, %s19, 1
          %p201 = scmp.lt.s32.totalorder %s198, 1
          %s202 = scalar_select %p201, %s198, 1
          %s203 = smul.addr %s200, 2
          %s204 = sadd.s32 %s202, %s203
          %s205 = smul.addr %s204, 4
          %s206 = scalar_lea.vmem %s0, %s205
          %s207 = smul.u32 2, %s20
        $region32: #{transform_net_forward.4} parent=27 // pred_fallthru
          _
      $region28: #{transform_net_forward.4} parent=5 // pred_fallthru
        _
      %p208 = scmp.le.s32.totalorder 1, %s12
      %p209 = scmp.lt.s32.totalorder %s12, 3
      %p210 = pnand %p208, %p209
      %p211 = pneg %p210
      // Predicated region
      $region33: #{transform_net_forward.4} parent=5 // pred_check
        _
      $region34: #{transform_net_forward.4} parent=5 // pred_check_branch
        %213 = sbr.rel (%p210) target = $region36
      $region35: #{transform_net_forward.4} parent=5 // pred_region
        %s214 = ssub.s32 %s12, 1
        // Predicated region
        $region37: #{transform_net_forward.4} parent=35 // pred_check
          %p215 = pneg %p73
        $region38: #{transform_net_forward.4} parent=35 // pred_check_branch
          %217 = sbr.rel (%p215) target = $region40
        $region39: #{transform_net_forward.4} parent=35 // pred_region
          %218 = dma.done [#allocation3], 8192
        $region40: #{transform_net_forward.4} parent=35 // pred_fallthru
          _
        // Predicated region
        $region41: #{transform_net_forward.4} parent=35 // pred_check
          %p219 = pneg %p94
        $region42: #{transform_net_forward.4} parent=35 // pred_check_branch
          %221 = sbr.rel (%p219) target = $region44
        $region43: #{transform_net_forward.4} parent=35 // pred_region
          %222 = dma.done [#allocation5], 128
        $region44: #{transform_net_forward.4} parent=35 // pred_fallthru
          _
        // Predicated region
        $region45: #{transform_net_forward.4} parent=35 // pred_check
          %p223 = pneg %p115
        $region46: #{transform_net_forward.4} parent=35 // pred_check_branch
          %225 = sbr.rel (%p223) target = $region48
        $region47: #{transform_net_forward.4} parent=35 // pred_region
          %226 = dma.done [#allocation5], 128
        $region48: #{transform_net_forward.4} parent=35 // pred_fallthru
          _
        %s227 = smul.u32 2, %s22
        %p228 = scmp.lt.s32.totalorder %s21, 1
        %s229 = scalar_select %p228, %s21, 1
        %p230 = scmp.lt.s32.totalorder %s227, 1
        %s231 = scalar_select %p230, %s227, 1
        %s232 = smul.addr %s229, 2
        %s233 = sadd.s32 %s231, %s232
        %s234 = smul.addr %s233, 4
        %s235 = scalar_lea.vmem %s0, %s234
        %p236 = pneg %p52
        %p237 = pneg %p49
        %p238 = pneg %p73
        %p239 = pneg %p70
        %p240 = pneg %p94
        %p241 = pneg %p91
        %p242 = pneg %p115
        %p243 = pneg %p112
        %p244 = pneg %p141
        %p245 = pneg %p138
        %p246 = scmp.lt.s32.totalorder %s21, 1
        %s247 = scalar_select %p246, %s21, 1
        %s248 = smul.addr %s247, 8
        %s249 = scalar_lea.vmem %s4, %s248
        %s250 = smul.u32 2, %s22
        %p251 = scmp.lt.s32.totalorder %s21, 1
        %s252 = scalar_select %p251, %s21, 1
        %p253 = scmp.lt.s32.totalorder %s250, 1
        %s254 = scalar_select %p253, %s250, 1
        %s255 = smul.addr %s252, 2
        %s256 = sadd.s32 %s254, %s255
        %s257 = smul.addr %s256, 4
        %s258 = scalar_lea.vmem %s0, %s257
        %s259 = smul.u32 2, %s22
        %p260 = scmp.lt.s32.totalorder %s21, 1
        %s261 = scalar_select %p260, %s21, 1
        %s262 = smul.addr %s261, 8
        %s263 = scalar_lea.vmem %s4, %s262
        %v265 = vld [vmem:[%s258] sm:$0xf]
        %v266 = vld [vmem:[%s258 + $0x4] sm:$0xf]
        %v267 = vld [vmem:[#allocation2] sm:$0xff]
        %v268 = vld [vmem:[#allocation2 + $0x8] sm:$0xff]
        %v269 = vld [vmem:[#allocation2 + $0x10] sm:$0xff]
        %v270 = vld [vmem:[#allocation2 + $0x18] sm:$0xff]
        %v271 = vld [vmem:[#allocation2 + $0x20] sm:$0xff]
        %v272 = vld [vmem:[#allocation2 + $0x28] sm:$0xff]
        %v273 = vld [vmem:[#allocation2 + $0x30] sm:$0xff]
        %v274 = vld [vmem:[#allocation2 + $0x38] sm:$0xff]
        %v275 = vld [vmem:[#allocation2 + $0x40] sm:$0xff]
        %v276 = vld [vmem:[#allocation2 + $0x48] sm:$0xff]
        %v277 = vld [vmem:[#allocation2 + $0x50] sm:$0xff]
        %v278 = vld [vmem:[#allocation2 + $0x58] sm:$0xff]
        %v279 = vld [vmem:[#allocation2 + $0x60] sm:$0xff]
        %v280 = vld [vmem:[#allocation2 + $0x68] sm:$0xff]
        %v281 = vld [vmem:[#allocation2 + $0x70] sm:$0xff]
        %v282 = vld [vmem:[#allocation2 + $0x78] sm:$0xff]
        %v283 = vld [vmem:[#allocation2 + $0x80] sm:$0xff]
        %v284 = vld [vmem:[#allocation2 + $0x88] sm:$0xff]
        %v285 = vld [vmem:[#allocation2 + $0x90] sm:$0xff]
        %v286 = vld [vmem:[#allocation2 + $0x98] sm:$0xff]
        %v287 = vld [vmem:[#allocation2 + $0xa0] sm:$0xff]
        %v288 = vld [vmem:[#allocation2 + $0xa8] sm:$0xff]
        %v289 = vld [vmem:[#allocation2 + $0xb0] sm:$0xff]
        %v290 = vld [vmem:[#allocation2 + $0xb8] sm:$0xff]
        %v291 = vld [vmem:[#allocation2 + $0xc0] sm:$0xff]
        %v292 = vld [vmem:[#allocation2 + $0xc8] sm:$0xff]
        %v293 = vld [vmem:[#allocation2 + $0xd0] sm:$0xff]
        %v294 = vld [vmem:[#allocation2 + $0xd8] sm:$0xff]
        %v295 = vld [vmem:[#allocation2 + $0xe0] sm:$0xff]
        %v296 = vld [vmem:[#allocation2 + $0xe8] sm:$0xff]
        %v297 = vld [vmem:[#allocation2 + $0xf0] sm:$0xff]
        %v298 = vld [vmem:[#allocation2 + $0xf8] sm:$0xff]
        %v299 = vld [vmem:[#allocation2 + $0x100] sm:$0xff]
        %v300 = vld [vmem:[#allocation2 + $0x108] sm:$0xff]
        %v301 = vld [vmem:[#allocation2 + $0x110] sm:$0xff]
        %v302 = vld [vmem:[#allocation2 + $0x118] sm:$0xff]
        %v303 = vld [vmem:[#allocation2 + $0x120] sm:$0xff]
        %v304 = vld [vmem:[#allocation2 + $0x128] sm:$0xff]
        %v305 = vld [vmem:[#allocation2 + $0x130] sm:$0xff]
        %v306 = vld [vmem:[#allocation2 + $0x138] sm:$0xff]
        %v307 = vld [vmem:[#allocation2 + $0x140] sm:$0xff]
        %v308 = vld [vmem:[#allocation2 + $0x148] sm:$0xff]
        %v309 = vld [vmem:[#allocation2 + $0x150] sm:$0xff]
        %v310 = vld [vmem:[#allocation2 + $0x158] sm:$0xff]
        %v311 = vld [vmem:[#allocation2 + $0x160] sm:$0xff]
        %v312 = vld [vmem:[#allocation2 + $0x168] sm:$0xff]
        %v313 = vld [vmem:[#allocation2 + $0x170] sm:$0xff]
        %v314 = vld [vmem:[#allocation2 + $0x178] sm:$0xff]
        %v315 = vld [vmem:[#allocation2 + $0x180] sm:$0xff]
        %v316 = vld [vmem:[#allocation2 + $0x188] sm:$0xff]
        %v317 = vld [vmem:[#allocation2 + $0x190] sm:$0xff]
        %v318 = vld [vmem:[#allocation2 + $0x198] sm:$0xff]
        %v319 = vld [vmem:[#allocation2 + $0x1a0] sm:$0xff]
        %v320 = vld [vmem:[#allocation2 + $0x1a8] sm:$0xff]
        %v321 = vld [vmem:[#allocation2 + $0x1b0] sm:$0xff]
        %v322 = vld [vmem:[#allocation2 + $0x1b8] sm:$0xff]
        %v323 = vld [vmem:[#allocation2 + $0x1c0] sm:$0xff]
        %v324 = vld [vmem:[#allocation2 + $0x1c8] sm:$0xff]
        %v325 = vld [vmem:[#allocation2 + $0x1d0] sm:$0xff]
        %v326 = vld [vmem:[#allocation2 + $0x1d8] sm:$0xff]
        %v327 = vld [vmem:[#allocation2 + $0x1e0] sm:$0xff]
        %v328 = vld [vmem:[#allocation2 + $0x1e8] sm:$0xff]
        %v329 = vld [vmem:[#allocation2 + $0x1f0] sm:$0xff]
        %v330 = vld [vmem:[#allocation2 + $0x1f8] sm:$0xff]
        %v333 = vunpack.c.l.b16 %v265
        %v334 = vunpack.c.l.b16 %v266
        %v335 = vpack.c.b16 %v334, %v333
        %v401 = vunpack.c.l.b16 %v267
        %v402 = vunpack.c.h.b16 %v267
        %v403 = vunpack.c.l.b16 %v268
        %v404 = vunpack.c.h.b16 %v268
        %v405 = vunpack.c.l.b16 %v269
        %v406 = vunpack.c.h.b16 %v269
        %v407 = vunpack.c.l.b16 %v270
        %v408 = vunpack.c.h.b16 %v270
        %v409 = vunpack.c.l.b16 %v271
        %v410 = vunpack.c.h.b16 %v271
        %v411 = vunpack.c.l.b16 %v272
        %v412 = vunpack.c.h.b16 %v272
        %v413 = vunpack.c.l.b16 %v273
        %v414 = vunpack.c.h.b16 %v273
        %v415 = vunpack.c.l.b16 %v274
        %v416 = vunpack.c.h.b16 %v274
        %v417 = vunpack.c.l.b16 %v275
        %v418 = vunpack.c.h.b16 %v275
        %v419 = vunpack.c.l.b16 %v276
        %v420 = vunpack.c.h.b16 %v276
        %v421 = vunpack.c.l.b16 %v277
        %v422 = vunpack.c.h.b16 %v277
        %v423 = vunpack.c.l.b16 %v278
        %v424 = vunpack.c.h.b16 %v278
        %v425 = vunpack.c.l.b16 %v279
        %v426 = vunpack.c.h.b16 %v279
        %v427 = vunpack.c.l.b16 %v280
        %v428 = vunpack.c.h.b16 %v280
        %v429 = vunpack.c.l.b16 %v281
        %v430 = vunpack.c.h.b16 %v281
        %v431 = vunpack.c.l.b16 %v282
        %v432 = vunpack.c.h.b16 %v282
        %v433 = vunpack.c.l.b16 %v283
        %v434 = vunpack.c.h.b16 %v283
        %v435 = vunpack.c.l.b16 %v284
        %v436 = vunpack.c.h.b16 %v284
        %v437 = vunpack.c.l.b16 %v285
        %v438 = vunpack.c.h.b16 %v285
        %v439 = vunpack.c.l.b16 %v286
        %v440 = vunpack.c.h.b16 %v286
        %v441 = vunpack.c.l.b16 %v287
        %v442 = vunpack.c.h.b16 %v287
        %v443 = vunpack.c.l.b16 %v288
        %v444 = vunpack.c.h.b16 %v288
        %v445 = vunpack.c.l.b16 %v289
        %v446 = vunpack.c.h.b16 %v289
        %v447 = vunpack.c.l.b16 %v290
        %v448 = vunpack.c.h.b16 %v290
        %v449 = vunpack.c.l.b16 %v291
        %v450 = vunpack.c.h.b16 %v291
        %v451 = vunpack.c.l.b16 %v292
        %v452 = vunpack.c.h.b16 %v292
        %v453 = vunpack.c.l.b16 %v293
        %v454 = vunpack.c.h.b16 %v293
        %v455 = vunpack.c.l.b16 %v294
        %v456 = vunpack.c.h.b16 %v294
        %v457 = vunpack.c.l.b16 %v295
        %v458 = vunpack.c.h.b16 %v295
        %v459 = vunpack.c.l.b16 %v296
        %v460 = vunpack.c.h.b16 %v296
        %v461 = vunpack.c.l.b16 %v297
        %v462 = vunpack.c.h.b16 %v297
        %v463 = vunpack.c.l.b16 %v298
        %v464 = vunpack.c.h.b16 %v298
        %v465 = vunpack.c.l.b16 %v299
        %v466 = vunpack.c.h.b16 %v299
        %v467 = vunpack.c.l.b16 %v300
        %v468 = vunpack.c.h.b16 %v300
        %v469 = vunpack.c.l.b16 %v301
        %v470 = vunpack.c.h.b16 %v301
        %v471 = vunpack.c.l.b16 %v302
        %v472 = vunpack.c.h.b16 %v302
        %v473 = vunpack.c.l.b16 %v303
        %v474 = vunpack.c.h.b16 %v303
        %v475 = vunpack.c.l.b16 %v304
        %v476 = vunpack.c.h.b16 %v304
        %v477 = vunpack.c.l.b16 %v305
        %v478 = vunpack.c.h.b16 %v305
        %v479 = vunpack.c.l.b16 %v306
        %v480 = vunpack.c.h.b16 %v306
        %v481 = vunpack.c.l.b16 %v307
        %v482 = vunpack.c.h.b16 %v307
        %v483 = vunpack.c.l.b16 %v308
        %v484 = vunpack.c.h.b16 %v308
        %v485 = vunpack.c.l.b16 %v309
        %v486 = vunpack.c.h.b16 %v309
        %v487 = vunpack.c.l.b16 %v310
        %v488 = vunpack.c.h.b16 %v310
        %v489 = vunpack.c.l.b16 %v311
        %v490 = vunpack.c.h.b16 %v311
        %v491 = vunpack.c.l.b16 %v312
        %v492 = vunpack.c.h.b16 %v312
        %v493 = vunpack.c.l.b16 %v313
        %v494 = vunpack.c.h.b16 %v313
        %v495 = vunpack.c.l.b16 %v314
        %v496 = vunpack.c.h.b16 %v314
        %v497 = vunpack.c.l.b16 %v315
        %v498 = vunpack.c.h.b16 %v315
        %v499 = vunpack.c.l.b16 %v316
        %v500 = vunpack.c.h.b16 %v316
        %v501 = vunpack.c.l.b16 %v317
        %v502 = vunpack.c.h.b16 %v317
        %v503 = vunpack.c.l.b16 %v318
        %v504 = vunpack.c.h.b16 %v318
        %v505 = vunpack.c.l.b16 %v319
        %v506 = vunpack.c.h.b16 %v319
        %v507 = vunpack.c.l.b16 %v320
        %v508 = vunpack.c.h.b16 %v320
        %v509 = vunpack.c.l.b16 %v321
        %v510 = vunpack.c.h.b16 %v321
        %v511 = vunpack.c.l.b16 %v322
        %v512 = vunpack.c.h.b16 %v322
        %v513 = vunpack.c.l.b16 %v323
        %v514 = vunpack.c.h.b16 %v323
        %v515 = vunpack.c.l.b16 %v324
        %v516 = vunpack.c.h.b16 %v324
        %v517 = vunpack.c.l.b16 %v325
        %v518 = vunpack.c.h.b16 %v325
        %v519 = vunpack.c.l.b16 %v326
        %v520 = vunpack.c.h.b16 %v326
        %v521 = vunpack.c.l.b16 %v327
        %v522 = vunpack.c.h.b16 %v327
        %v523 = vunpack.c.l.b16 %v328
        %v524 = vunpack.c.h.b16 %v328
        %v525 = vunpack.c.l.b16 %v329
        %v526 = vunpack.c.h.b16 %v329
        %v527 = vunpack.c.l.b16 %v330
        %v528 = vunpack.c.h.b16 %v330
        %v529 = vpack.c.b16 %v409, %v401
        %v530 = vpack.c.b16 %v410, %v402
        %v531 = vpack.c.b16 %v411, %v403
        %v532 = vpack.c.b16 %v412, %v404
        %v533 = vpack.c.b16 %v413, %v405
        %v534 = vpack.c.b16 %v414, %v406
        %v535 = vpack.c.b16 %v415, %v407
        %v536 = vpack.c.b16 %v416, %v408
        %v537 = vpack.c.b16 %v425, %v417
        %v538 = vpack.c.b16 %v426, %v418
        %v539 = vpack.c.b16 %v427, %v419
        %v540 = vpack.c.b16 %v428, %v420
        %v541 = vpack.c.b16 %v429, %v421
        %v542 = vpack.c.b16 %v430, %v422
        %v543 = vpack.c.b16 %v431, %v423
        %v544 = vpack.c.b16 %v432, %v424
        %v545 = vpack.c.b16 %v441, %v433
        %v546 = vpack.c.b16 %v442, %v434
        %v547 = vpack.c.b16 %v443, %v435
        %v548 = vpack.c.b16 %v444, %v436
        %v549 = vpack.c.b16 %v445, %v437
        %v550 = vpack.c.b16 %v446, %v438
        %v551 = vpack.c.b16 %v447, %v439
        %v552 = vpack.c.b16 %v448, %v440
        %v553 = vpack.c.b16 %v457, %v449
        %v554 = vpack.c.b16 %v458, %v450
        %v555 = vpack.c.b16 %v459, %v451
        %v556 = vpack.c.b16 %v460, %v452
        %v557 = vpack.c.b16 %v461, %v453
        %v558 = vpack.c.b16 %v462, %v454
        %v559 = vpack.c.b16 %v463, %v455
        %v560 = vpack.c.b16 %v464, %v456
        %v561 = vpack.c.b16 %v473, %v465
        %v562 = vpack.c.b16 %v474, %v466
        %v563 = vpack.c.b16 %v475, %v467
        %v564 = vpack.c.b16 %v476, %v468
        %v565 = vpack.c.b16 %v477, %v469
        %v566 = vpack.c.b16 %v478, %v470
        %v567 = vpack.c.b16 %v479, %v471
        %v568 = vpack.c.b16 %v480, %v472
        %v569 = vpack.c.b16 %v489, %v481
        %v570 = vpack.c.b16 %v490, %v482
        %v571 = vpack.c.b16 %v491, %v483
        %v572 = vpack.c.b16 %v492, %v484
        %v573 = vpack.c.b16 %v493, %v485
        %v574 = vpack.c.b16 %v494, %v486
        %v575 = vpack.c.b16 %v495, %v487
        %v576 = vpack.c.b16 %v496, %v488
        %v577 = vpack.c.b16 %v505, %v497
        %v578 = vpack.c.b16 %v506, %v498
        %v579 = vpack.c.b16 %v507, %v499
        %v580 = vpack.c.b16 %v508, %v500
        %v581 = vpack.c.b16 %v509, %v501
        %v582 = vpack.c.b16 %v510, %v502
        %v583 = vpack.c.b16 %v511, %v503
        %v584 = vpack.c.b16 %v512, %v504
        %v585 = vpack.c.b16 %v521, %v513
        %v586 = vpack.c.b16 %v522, %v514
        %v587 = vpack.c.b16 %v523, %v515
        %v588 = vpack.c.b16 %v524, %v516
        %v589 = vpack.c.b16 %v525, %v517
        %v590 = vpack.c.b16 %v526, %v518
        %v591 = vpack.c.b16 %v527, %v519
        %v592 = vpack.c.b16 %v528, %v520
        %657 = vmatprep.subr.bf16.mxu0 %v586
        %658 = vmatpush1.bf16.msra.mxu0 %v585
        %659 = vmatprep.subr.bf16.mxu0 %v578
        %660 = vmatpush1.bf16.msra.mxu0 %v577
        %661 = vmatprep.subr.bf16.mxu0 %v570
        %662 = vmatpush1.bf16.msra.mxu0 %v569
        %663 = vmatprep.subr.bf16.mxu0 %v562
        %664 = vmatpush1.bf16.msra.mxu0 %v561
        %665 = vmatprep.subr.bf16.mxu0 %v554
        %666 = vmatpush1.bf16.msra.mxu0 %v553
        %667 = vmatprep.subr.bf16.mxu0 %v546
        %668 = vmatpush1.bf16.msra.mxu0 %v545
        %669 = vmatprep.subr.bf16.mxu0 %v538
        %670 = vmatpush1.bf16.msra.mxu0 %v537
        %671 = vmatprep.subr.bf16.mxu0 %v530
        %672 = vmatpush1.bf16.msra.mxu0 %v529
        %673 = vmatprep.subr.bf16.mxu0 0
        %674 = vmatpush2.bf16.msra.mxu0 0
        %675 = vmatprep.subr.bf16.mxu0 0
        %676 = vmatpush2.bf16.msra.mxu0 0
        %677 = vmatprep.subr.bf16.mxu0 0
        %678 = vmatpush2.bf16.msra.mxu0 0
        %679 = vmatprep.subr.bf16.mxu0 0
        %680 = vmatpush2.bf16.msra.mxu0 0
        %681 = vmatprep.subr.bf16.mxu0 0
        %682 = vmatpush2.bf16.msra.mxu0 0
        %683 = vmatprep.subr.bf16.mxu0 0
        %684 = vmatpush2.bf16.msra.mxu0 0
        %685 = vmatprep.subr.bf16.mxu0 0
        %686 = vmatpush2.bf16.msra.mxu0 0
        %687 = vmatprep.subr.bf16.mxu0 0
        %688 = vmatpush2.bf16.msra.mxu0 0
        %689 = vmatprep.mubr.bf16.mxu0 0
        %690 = vmatmul.mubr.bf16.gmra.mxu0 %v335
        %v691 = vpop.f32.mrf.mxu0
        %v692 = vadd.f32 0.0, %v691
        %v693 = vpop.f32.mrf.mxu0
        %v694 = vadd.f32 0.0, %v693
        %v695 = vpop.f32.mrf.mxu0
        %v696 = vadd.f32 0.0, %v695
        %v697 = vpop.f32.mrf.mxu0
        %v698 = vadd.f32 0.0, %v697
        %699 = vdwg.mxu0
        %700 = vmatprep.subr.bf16.mxu0 %v588
        %701 = vmatpush1.bf16.msra.mxu0 %v587
        %702 = vmatprep.subr.bf16.mxu0 %v580
        %703 = vmatpush1.bf16.msra.mxu0 %v579
        %704 = vmatprep.subr.bf16.mxu0 %v572
        %705 = vmatpush1.bf16.msra.mxu0 %v571
        %706 = vmatprep.subr.bf16.mxu0 %v564
        %707 = vmatpush1.bf16.msra.mxu0 %v563
        %708 = vmatprep.subr.bf16.mxu0 %v556
        %709 = vmatpush1.bf16.msra.mxu0 %v555
        %710 = vmatprep.subr.bf16.mxu0 %v548
        %711 = vmatpush1.bf16.msra.mxu0 %v547
        %712 = vmatprep.subr.bf16.mxu0 %v540
        %713 = vmatpush1.bf16.msra.mxu0 %v539
        %714 = vmatprep.subr.bf16.mxu0 %v532
        %715 = vmatpush1.bf16.msra.mxu0 %v531
        %716 = vmatprep.subr.bf16.mxu0 0
        %717 = vmatpush2.bf16.msra.mxu0 0
        %718 = vmatprep.subr.bf16.mxu0 0
        %719 = vmatpush2.bf16.msra.mxu0 0
        %720 = vmatprep.subr.bf16.mxu0 0
        %721 = vmatpush2.bf16.msra.mxu0 0
        %722 = vmatprep.subr.bf16.mxu0 0
        %723 = vmatpush2.bf16.msra.mxu0 0
        %724 = vmatprep.subr.bf16.mxu0 0
        %725 = vmatpush2.bf16.msra.mxu0 0
        %726 = vmatprep.subr.bf16.mxu0 0
        %727 = vmatpush2.bf16.msra.mxu0 0
        %728 = vmatprep.subr.bf16.mxu0 0
        %729 = vmatpush2.bf16.msra.mxu0 0
        %730 = vmatprep.subr.bf16.mxu0 0
        %731 = vmatpush2.bf16.msra.mxu0 0
        %732 = vmatprep.mubr.bf16.mxu0 0
        %733 = vmatmul.mubr.bf16.gmra.mxu0 %v335
        %v734 = vpop.f32.mrf.mxu0
        %v735 = vadd.f32 0.0, %v734
        %v736 = vpop.f32.mrf.mxu0
        %v737 = vadd.f32 0.0, %v736
        %v738 = vpop.f32.mrf.mxu0
        %v739 = vadd.f32 0.0, %v738
        %v740 = vpop.f32.mrf.mxu0
        %v741 = vadd.f32 0.0, %v740
        %742 = vdwg.mxu0
        %743 = vmatprep.subr.bf16.mxu0 %v590
        %744 = vmatpush1.bf16.msra.mxu0 %v589
        %745 = vmatprep.subr.bf16.mxu0 %v582
        %746 = vmatpush1.bf16.msra.mxu0 %v581
        %747 = vmatprep.subr.bf16.mxu0 %v574
        %748 = vmatpush1.bf16.msra.mxu0 %v573
        %749 = vmatprep.subr.bf16.mxu0 %v566
        %750 = vmatpush1.bf16.msra.mxu0 %v565
        %751 = vmatprep.subr.bf16.mxu0 %v558
        %752 = vmatpush1.bf16.msra.mxu0 %v557
        %753 = vmatprep.subr.bf16.mxu0 %v550
        %754 = vmatpush1.bf16.msra.mxu0 %v549
        %755 = vmatprep.subr.bf16.mxu0 %v542
        %756 = vmatpush1.bf16.msra.mxu0 %v541
        %757 = vmatprep.subr.bf16.mxu0 %v534
        %758 = vmatpush1.bf16.msra.mxu0 %v533
        %759 = vmatprep.subr.bf16.mxu0 0
        %760 = vmatpush2.bf16.msra.mxu0 0
        %761 = vmatprep.subr.bf16.mxu0 0
        %762 = vmatpush2.bf16.msra.mxu0 0
        %763 = vmatprep.subr.bf16.mxu0 0
        %764 = vmatpush2.bf16.msra.mxu0 0
        %765 = vmatprep.subr.bf16.mxu0 0
        %766 = vmatpush2.bf16.msra.mxu0 0
        %767 = vmatprep.subr.bf16.mxu0 0
        %768 = vmatpush2.bf16.msra.mxu0 0
        %769 = vmatprep.subr.bf16.mxu0 0
        %770 = vmatpush2.bf16.msra.mxu0 0
        %771 = vmatprep.subr.bf16.mxu0 0
        %772 = vmatpush2.bf16.msra.mxu0 0
        %773 = vmatprep.subr.bf16.mxu0 0
        %774 = vmatpush2.bf16.msra.mxu0 0
        %775 = vmatprep.mubr.bf16.mxu0 0
        %776 = vmatmul.mubr.bf16.gmra.mxu0 %v335
        %v777 = vpop.f32.mrf.mxu0
        %v778 = vadd.f32 0.0, %v777
        %v779 = vpop.f32.mrf.mxu0
        %v780 = vadd.f32 0.0, %v779
        %v781 = vpop.f32.mrf.mxu0
        %v782 = vadd.f32 0.0, %v781
        %v783 = vpop.f32.mrf.mxu0
        %v784 = vadd.f32 0.0, %v783
        %785 = vdwg.mxu0
        %786 = vmatprep.subr.bf16.mxu0 %v592
        %787 = vmatpush1.bf16.msra.mxu0 %v591
        %788 = vmatprep.subr.bf16.mxu0 %v584
        %789 = vmatpush1.bf16.msra.mxu0 %v583
        %790 = vmatprep.subr.bf16.mxu0 %v576
        %791 = vmatpush1.bf16.msra.mxu0 %v575
        %792 = vmatprep.subr.bf16.mxu0 %v568
        %793 = vmatpush1.bf16.msra.mxu0 %v567
        %794 = vmatprep.subr.bf16.mxu0 %v560
        %795 = vmatpush1.bf16.msra.mxu0 %v559
        %796 = vmatprep.subr.bf16.mxu0 %v552
        %797 = vmatpush1.bf16.msra.mxu0 %v551
        %798 = vmatprep.subr.bf16.mxu0 %v544
        %799 = vmatpush1.bf16.msra.mxu0 %v543
        %800 = vmatprep.subr.bf16.mxu0 %v536
        %801 = vmatpush1.bf16.msra.mxu0 %v535
        %802 = vmatprep.subr.bf16.mxu0 0
        %803 = vmatpush2.bf16.msra.mxu0 0
        %804 = vmatprep.subr.bf16.mxu0 0
        %805 = vmatpush2.bf16.msra.mxu0 0
        %806 = vmatprep.subr.bf16.mxu0 0
        %807 = vmatpush2.bf16.msra.mxu0 0
        %808 = vmatprep.subr.bf16.mxu0 0
        %809 = vmatpush2.bf16.msra.mxu0 0
        %810 = vmatprep.subr.bf16.mxu0 0
        %811 = vmatpush2.bf16.msra.mxu0 0
        %812 = vmatprep.subr.bf16.mxu0 0
        %813 = vmatpush2.bf16.msra.mxu0 0
        %814 = vmatprep.subr.bf16.mxu0 0
        %815 = vmatpush2.bf16.msra.mxu0 0
        %816 = vmatprep.subr.bf16.mxu0 0
        %817 = vmatpush2.bf16.msra.mxu0 0
        %818 = vmatprep.mubr.bf16.mxu0 0
        %819 = vmatmul.mubr.bf16.gmra.mxu0 %v335
        %v820 = vpop.f32.mrf.mxu0
        %v821 = vadd.f32 0.0, %v820
        %v822 = vpop.f32.mrf.mxu0
        %v823 = vadd.f32 0.0, %v822
        %v824 = vpop.f32.mrf.mxu0
        %v825 = vadd.f32 0.0, %v824
        %v826 = vpop.f32.mrf.mxu0
        %v827 = vadd.f32 0.0, %v826
        %828 = vdwg.mxu0
        %v829 = vld [vmem:[#allocation4] sm:$0xff]
        %v831 = vlaneseq
        %v832 = vshrl.u32 %v831, 7
        %v833 = vsub.s32 0, %v832
        %v834 = vrot.slane %v829, %v833
        %v835 = vlaneseq
        %v836 = vshrl.u32 %v835, 7
        %v837 = vsub.s32 1, %v836
        %v838 = vrot.slane %v829, %v837
        %v839 = vlaneseq
        %v840 = vshrl.u32 %v839, 7
        %v841 = vsub.s32 2, %v840
        %v842 = vrot.slane %v829, %v841
        %v843 = vlaneseq
        %v844 = vshrl.u32 %v843, 7
        %v845 = vsub.s32 3, %v844
        %v846 = vrot.slane %v829, %v845
        %v847 = vlaneseq
        %v848 = vshrl.u32 %v847, 7
        %v849 = vsub.s32 4, %v848
        %v850 = vrot.slane %v829, %v849
        %v851 = vlaneseq
        %v852 = vshrl.u32 %v851, 7
        %v853 = vsub.s32 5, %v852
        %v854 = vrot.slane %v829, %v853
        %v855 = vlaneseq
        %v856 = vshrl.u32 %v855, 7
        %v857 = vsub.s32 6, %v856
        %v858 = vrot.slane %v829, %v857
        %v859 = vlaneseq
        %v860 = vshrl.u32 %v859, 7
        %v861 = vsub.s32 7, %v860
        %v862 = vrot.slane %v829, %v861
        %v871 = vmul.f32 %v692, %v834
        %v872 = vmul.f32 %v694, %v838
        %v873 = vmul.f32 %v735, %v842
        %v874 = vmul.f32 %v737, %v846
        %v875 = vmul.f32 %v778, %v850
        %v876 = vmul.f32 %v780, %v854
        %v877 = vmul.f32 %v821, %v858
        %v878 = vmul.f32 %v823, %v862
        %v879 = vmul.f32 %v696, %v834
        %v880 = vmul.f32 %v698, %v838
        %v881 = vmul.f32 %v739, %v842
        %v882 = vmul.f32 %v741, %v846
        %v883 = vmul.f32 %v782, %v850
        %v884 = vmul.f32 %v784, %v854
        %v885 = vmul.f32 %v825, %v858
        %v886 = vmul.f32 %v827, %v862
        %v887 = vld [vmem:[#allocation6] sm:$0xff]
        %v889 = vlaneseq
        %v890 = vshrl.u32 %v889, 7
        %v891 = vsub.s32 0, %v890
        %v892 = vrot.slane %v887, %v891
        %v893 = vlaneseq
        %v894 = vshrl.u32 %v893, 7
        %v895 = vsub.s32 1, %v894
        %v896 = vrot.slane %v887, %v895
        %v897 = vlaneseq
        %v898 = vshrl.u32 %v897, 7
        %v899 = vsub.s32 2, %v898
        %v900 = vrot.slane %v887, %v899
        %v901 = vlaneseq
        %v902 = vshrl.u32 %v901, 7
        %v903 = vsub.s32 3, %v902
        %v904 = vrot.slane %v887, %v903
        %v905 = vlaneseq
        %v906 = vshrl.u32 %v905, 7
        %v907 = vsub.s32 4, %v906
        %v908 = vrot.slane %v887, %v907
        %v909 = vlaneseq
        %v910 = vshrl.u32 %v909, 7
        %v911 = vsub.s32 5, %v910
        %v912 = vrot.slane %v887, %v911
        %v913 = vlaneseq
        %v914 = vshrl.u32 %v913, 7
        %v915 = vsub.s32 6, %v914
        %v916 = vrot.slane %v887, %v915
        %v917 = vlaneseq
        %v918 = vshrl.u32 %v917, 7
        %v919 = vsub.s32 7, %v918
        %v920 = vrot.slane %v887, %v919
        %v929 = vadd.f32 %v871, %v892
        %v930 = vadd.f32 %v872, %v896
        %v931 = vadd.f32 %v873, %v900
        %v932 = vadd.f32 %v874, %v904
        %v933 = vadd.f32 %v875, %v908
        %v934 = vadd.f32 %v876, %v912
        %v935 = vadd.f32 %v877, %v916
        %v936 = vadd.f32 %v878, %v920
        %v937 = vadd.f32 %v879, %v892
        %v938 = vadd.f32 %v880, %v896
        %v939 = vadd.f32 %v881, %v900
        %v940 = vadd.f32 %v882, %v904
        %v941 = vadd.f32 %v883, %v908
        %v942 = vadd.f32 %v884, %v912
        %v943 = vadd.f32 %v885, %v916
        %v944 = vadd.f32 %v886, %v920
        %vm945 = vcmp.gt.f32.partialorder %v929, 0.0
        %vm946 = vcmp.gt.f32.partialorder %v930, 0.0
        %vm947 = vcmp.gt.f32.partialorder %v931, 0.0
        %vm948 = vcmp.gt.f32.partialorder %v932, 0.0
        %vm949 = vcmp.gt.f32.partialorder %v933, 0.0
        %vm950 = vcmp.gt.f32.partialorder %v934, 0.0
        %vm951 = vcmp.gt.f32.partialorder %v935, 0.0
        %vm952 = vcmp.gt.f32.partialorder %v936, 0.0
        %vm953 = vcmp.gt.f32.partialorder %v937, 0.0
        %vm954 = vcmp.gt.f32.partialorder %v938, 0.0
        %vm955 = vcmp.gt.f32.partialorder %v939, 0.0
        %vm956 = vcmp.gt.f32.partialorder %v940, 0.0
        %vm957 = vcmp.gt.f32.partialorder %v941, 0.0
        %vm958 = vcmp.gt.f32.partialorder %v942, 0.0
        %vm959 = vcmp.gt.f32.partialorder %v943, 0.0
        %vm960 = vcmp.gt.f32.partialorder %v944, 0.0
        %v961 = vmul.f32 %v929, 0.2
        %v962 = vmul.f32 %v930, 0.2
        %v963 = vmul.f32 %v931, 0.2
        %v964 = vmul.f32 %v932, 0.2
        %v965 = vmul.f32 %v933, 0.2
        %v966 = vmul.f32 %v934, 0.2
        %v967 = vmul.f32 %v935, 0.2
        %v968 = vmul.f32 %v936, 0.2
        %v969 = vmul.f32 %v937, 0.2
        %v970 = vmul.f32 %v938, 0.2
        %v971 = vmul.f32 %v939, 0.2
        %v972 = vmul.f32 %v940, 0.2
        %v973 = vmul.f32 %v941, 0.2
        %v974 = vmul.f32 %v942, 0.2
        %v975 = vmul.f32 %v943, 0.2
        %v976 = vmul.f32 %v944, 0.2
        %v977 = vsel %vm945, %v929, %v961
        %v978 = vsel %vm946, %v930, %v962
        %v979 = vsel %vm947, %v931, %v963
        %v980 = vsel %vm948, %v932, %v964
        %v981 = vsel %vm949, %v933, %v965
        %v982 = vsel %vm950, %v934, %v966
        %v983 = vsel %vm951, %v935, %v967
        %v984 = vsel %vm952, %v936, %v968
        %v985 = vsel %vm953, %v937, %v969
        %v986 = vsel %vm954, %v938, %v970
        %v987 = vsel %vm955, %v939, %v971
        %v988 = vsel %vm956, %v940, %v972
        %v989 = vsel %vm957, %v941, %v973
        %v990 = vsel %vm958, %v942, %v974
        %v991 = vsel %vm959, %v943, %v975
        %v992 = vsel %vm960, %v944, %v976
        %v993 = vmax.f32 %v977, %v985
        %v994 = vrot.slane %v993, 4
        %v995 = vmax.f32 %v993, %v994
        %v996 = vrot.slane %v995, 2
        %v997 = vmax.f32 %v995, %v996
        %v998 = vrot.slane %v997, 1
        %v999 = vmax.f32 %v997, %v998
        %v1000 = vmax.f32 %v978, %v986
        %v1001 = vrot.slane %v1000, 4
        %v1002 = vmax.f32 %v1000, %v1001
        %v1003 = vrot.slane %v1002, 2
        %v1004 = vmax.f32 %v1002, %v1003
        %v1005 = vrot.slane %v1004, 1
        %v1006 = vmax.f32 %v1004, %v1005
        %v1007 = vmax.f32 %v979, %v987
        %v1008 = vrot.slane %v1007, 4
        %v1009 = vmax.f32 %v1007, %v1008
        %v1010 = vrot.slane %v1009, 2
        %v1011 = vmax.f32 %v1009, %v1010
        %v1012 = vrot.slane %v1011, 1
        %v1013 = vmax.f32 %v1011, %v1012
        %v1014 = vmax.f32 %v980, %v988
        %v1015 = vrot.slane %v1014, 4
        %v1016 = vmax.f32 %v1014, %v1015
        %v1017 = vrot.slane %v1016, 2
        %v1018 = vmax.f32 %v1016, %v1017
        %v1019 = vrot.slane %v1018, 1
        %v1020 = vmax.f32 %v1018, %v1019
        %v1021 = vmax.f32 %v981, %v989
        %v1022 = vrot.slane %v1021, 4
        %v1023 = vmax.f32 %v1021, %v1022
        %v1024 = vrot.slane %v1023, 2
        %v1025 = vmax.f32 %v1023, %v1024
        %v1026 = vrot.slane %v1025, 1
        %v1027 = vmax.f32 %v1025, %v1026
        %v1028 = vmax.f32 %v982, %v990
        %v1029 = vrot.slane %v1028, 4
        %v1030 = vmax.f32 %v1028, %v1029
        %v1031 = vrot.slane %v1030, 2
        %v1032 = vmax.f32 %v1030, %v1031
        %v1033 = vrot.slane %v1032, 1
        %v1034 = vmax.f32 %v1032, %v1033
        %v1035 = vmax.f32 %v983, %v991
        %v1036 = vrot.slane %v1035, 4
        %v1037 = vmax.f32 %v1035, %v1036
        %v1038 = vrot.slane %v1037, 2
        %v1039 = vmax.f32 %v1037, %v1038
        %v1040 = vrot.slane %v1039, 1
        %v1041 = vmax.f32 %v1039, %v1040
        %v1042 = vmax.f32 %v984, %v992
        %v1043 = vrot.slane %v1042, 4
        %v1044 = vmax.f32 %v1042, %v1043
        %v1045 = vrot.slane %v1044, 2
        %v1046 = vmax.f32 %v1044, %v1045
        %v1047 = vrot.slane %v1046, 1
        %v1048 = vmax.f32 %v1046, %v1047
        %p1049 = scmp.eq.s32.totalorder %s22, 0
        // Predicated region
        $region49: #{transform_net_forward.4} parent=35 // pred_check
          %p1050 = pneg %p1049
        $region50: #{transform_net_forward.4} parent=35 // pred_check_branch
          %1052 = sbr.rel (%p1050) target = $region52
        $region51: #{transform_net_forward.4} parent=35 // pred_region
          %v1061 = vcombine.low %v999, %v1006
          %v1062 = vcombine.low %v1013, %v1020
          %v1063 = vcombine.low %v1027, %v1034
          %v1064 = vcombine.low %v1041, %v1048
          %v1066 = vunpack.c.l.s4 1966171168
          %v1067 = vunpack.c.0.s8 %v1066
          %v1068 = vlaneseq
          %v1069 = vshrl.u32 %v1068, 7
          %v1070 = vsub.s32 %v1067, %v1069
          %v1071 = vrot.slane %v1061, %v1070
          %v1073 = vunpack.c.l.s4 1966171168
          %v1074 = vunpack.c.0.s8 %v1073
          %v1075 = vlaneseq
          %v1076 = vshrl.u32 %v1075, 7
          %v1077 = vsub.s32 %v1074, %v1076
          %v1078 = vrot.slane %v1062, %v1077
          %v1080 = vunpack.c.l.s4 1966171168
          %v1081 = vunpack.c.0.s8 %v1080
          %v1082 = vlaneseq
          %v1083 = vshrl.u32 %v1082, 7
          %v1084 = vsub.s32 %v1081, %v1083
          %v1085 = vrot.slane %v1063, %v1084
          %v1087 = vunpack.c.l.s4 1966171168
          %v1088 = vunpack.c.0.s8 %v1087
          %v1089 = vlaneseq
          %v1090 = vshrl.u32 %v1089, 7
          %v1091 = vsub.s32 %v1088, %v1090
          %v1092 = vrot.slane %v1064, %v1091
          %v1093 = vcombine.low %v1071, %v1078
          %v1094 = vcombine.low %v1085, %v1092
          %v1096 = vunpack.c.l.s4 1966171168
          %v1097 = vunpack.c.0.s8 %v1096
          %v1098 = vlaneseq
          %v1099 = vshrl.u32 %v1098, 7
          %v1100 = vsub.s32 %v1097, %v1099
          %v1101 = vrot.slane %v1093, %v1100
          %v1103 = vunpack.c.l.s4 1966171168
          %v1104 = vunpack.c.0.s8 %v1103
          %v1105 = vlaneseq
          %v1106 = vshrl.u32 %v1105, 7
          %v1107 = vsub.s32 %v1104, %v1106
          %v1108 = vrot.slane %v1094, %v1107
          %v1109 = vcombine.low %v1101, %v1108
          %1111 = vst [vmem:[%s263] sm:$0xff] %v1109
        $region52: #{transform_net_forward.4} parent=35 // pred_fallthru
          _
        %p1112 = scmp.gt.s32.totalorder %s22, 0
        // Predicated region
        $region53: #{transform_net_forward.4} parent=35 // pred_check
          %p1113 = pneg %p1112
        $region54: #{transform_net_forward.4} parent=35 // pred_check_branch
          %1115 = sbr.rel (%p1113) target = $region56
        $region55: #{transform_net_forward.4} parent=35 // pred_region
          %v1116 = vld [vmem:[%s263] sm:$0xff]
          %v1125 = vcombine.low %v999, %v1006
          %v1126 = vcombine.low %v1013, %v1020
          %v1127 = vcombine.low %v1027, %v1034
          %v1128 = vcombine.low %v1041, %v1048
          %v1130 = vunpack.c.l.s4 1966171168
          %v1131 = vunpack.c.0.s8 %v1130
          %v1132 = vlaneseq
          %v1133 = vshrl.u32 %v1132, 7
          %v1134 = vsub.s32 %v1131, %v1133
          %v1135 = vrot.slane %v1125, %v1134
          %v1137 = vunpack.c.l.s4 1966171168
          %v1138 = vunpack.c.0.s8 %v1137
          %v1139 = vlaneseq
          %v1140 = vshrl.u32 %v1139, 7
          %v1141 = vsub.s32 %v1138, %v1140
          %v1142 = vrot.slane %v1126, %v1141
          %v1144 = vunpack.c.l.s4 1966171168
          %v1145 = vunpack.c.0.s8 %v1144
          %v1146 = vlaneseq
          %v1147 = vshrl.u32 %v1146, 7
          %v1148 = vsub.s32 %v1145, %v1147
          %v1149 = vrot.slane %v1127, %v1148
          %v1151 = vunpack.c.l.s4 1966171168
          %v1152 = vunpack.c.0.s8 %v1151
          %v1153 = vlaneseq
          %v1154 = vshrl.u32 %v1153, 7
          %v1155 = vsub.s32 %v1152, %v1154
          %v1156 = vrot.slane %v1128, %v1155
          %v1157 = vcombine.low %v1135, %v1142
          %v1158 = vcombine.low %v1149, %v1156
          %v1160 = vunpack.c.l.s4 1966171168
          %v1161 = vunpack.c.0.s8 %v1160
          %v1162 = vlaneseq
          %v1163 = vshrl.u32 %v1162, 7
          %v1164 = vsub.s32 %v1161, %v1163
          %v1165 = vrot.slane %v1157, %v1164
          %v1167 = vunpack.c.l.s4 1966171168
          %v1168 = vunpack.c.0.s8 %v1167
          %v1169 = vlaneseq
          %v1170 = vshrl.u32 %v1169, 7
          %v1171 = vsub.s32 %v1168, %v1170
          %v1172 = vrot.slane %v1158, %v1171
          %v1173 = vcombine.low %v1165, %v1172
          %v1175 = vmax.f32 %v1116, %v1173
          %1176 = vst [vmem:[%s263] sm:$0xff] %v1175
        $region56: #{transform_net_forward.4} parent=35 // pred_fallthru
          _
        %p1177 = scmp.lt.s32.totalorder %s21, 1
        %s1178 = scalar_select %p1177, %s21, 1
        %s1179 = smul.addr %s1178, 8
        %s1180 = scalar_lea.vmem %s4, %s1179
        // Predicated region
        $region57: #{transform_net_forward.4} parent=35 // pred_check
          %p1181 = pneg %p138
        $region58: #{transform_net_forward.4} parent=35 // pred_check_branch
          %1183 = sbr.rel (%p1181) target = $region60
        $region59: #{transform_net_forward.4} parent=35 // pred_region
          _
        $region60: #{transform_net_forward.4} parent=35 // pred_fallthru
          _
      $region36: #{transform_net_forward.4} parent=5 // pred_fallthru
        _
      %p1184 = scmp.le.s32.totalorder 2, %s12
      // Predicated region
      $region61: #{transform_net_forward.4} parent=5 // pred_check
        %p1185 = pneg %p1184
      $region62: #{transform_net_forward.4} parent=5 // pred_check_branch
        %1187 = sbr.rel (%p1185) target = $region64
      $region63: #{transform_net_forward.4} parent=5 // pred_region
        %s1188 = ssub.s32 %s12, 2
        // Predicated region
        $region65: #{transform_net_forward.4} parent=63 // pred_check
          %p1189 = pneg %p144
        $region66: #{transform_net_forward.4} parent=63 // pred_check_branch
          %1191 = sbr.rel (%p1189) target = $region68
        $region67: #{transform_net_forward.4} parent=63 // pred_region
          %p1192 = scmp.lt.s32.totalorder %s23, 1
          %s1193 = scalar_select %p1192, %s23, 1
          %s1194 = smul.addr %s1193, 8
          %s1195 = scalar_lea.vmem %s4, %s1194
        $region68: #{transform_net_forward.4} parent=63 // pred_fallthru
          _
      $region64: #{transform_net_forward.4} parent=5 // pred_fallthru
        _
    $region6: #{transform_net_forward.4} parent=1 // loop_footer
      %s16 = sadd.s32 1, %s12
    $region7: #{transform_net_forward.4} parent=1 // loop_footer_branch
      %11 = sbr.rel target = $region3
    $region8: #{transform_net_forward.4} parent=1 // loop_exit
      _
    %1196 = vsyncpa [#allocation3], 1
    %s1197 = scalar_lea.sflag [#allocation3], 1
    %1198 = vsyncpa %s1197, 1
    %1199 = vsyncpa [#allocation5], 1

// kernel: transform_net_forward.5
$region0: #{transform_net_forward.5}
  #allocation0 [shape = 'u32[]', space=smem, size = 0x4, offset = 0x4, fixed_abs, tag = 'smem constant byte address 0x4 - core index']
  #allocation1 [shape = 'u32[144,128]{1,0:T(1,128)}', space=vmem, size = 0x12000, scoped, tag = 'internal scratch']
  %s0 = inlined_call_operand.vmem [shape: bf16[2,1024], index: 0, kind: input, shape index: {}]
  %s1 = inlined_call_operand.hbm [shape: bf16[1024,512], index: 1, kind: input, shape index: {}]
  %s2 = inlined_call_operand.vmem [shape: f32[1,512], index: 2, kind: input, shape index: {}]
  %s3 = inlined_call_operand.vmem [shape: f32[1,512], index: 3, kind: input, shape index: {}]
  %s4 = inlined_call_operand.vmem [shape: bf16[512,256], index: 4, kind: input, shape index: {}]
  %s5 = inlined_call_operand.vmem [shape: f32[1,256], index: 5, kind: input, shape index: {}]
  %s6 = inlined_call_operand.vmem [shape: f32[1,256], index: 6, kind: input, shape index: {}]
  %s7 = inlined_call_operand.vmem [shape: f32[2,256], index: 7, kind: output, shape index: {}]
  %s8 = sld [smem:[#allocation0]]
  $region42: #{transform_net_forward.5} parent=0
    _
  %s10 = ssub.s32 1, %s8
  %s11 = scalar_select 0, %s10, %s8
  $region1: #{transform_net_forward.5} parent=0
    #allocation2 [shape = 'u8[1048576]{0}', space=vmem, size = 0x100000, scoped, tag = 'input window, operand 1, single buffered']
    #allocation3 [shape = 's32[1]{0}', space=sflag, size = 0x4, scoped, tag = 'scoped memory for transform_net_forward.5']
    %12 = vsyncpa [#allocation3], 0
    // Predicated region
    $region2: #{transform_net_forward.5} parent=1 // pred_check
      _
    $region3: #{transform_net_forward.5} parent=1 // pred_check_branch
      %14 = sbr.rel (0) target = $region5
    $region4: #{transform_net_forward.5} parent=1 // pred_region
      _
    $region5: #{transform_net_forward.5} parent=1 // pred_fallthru
      _
    // Predicated region
    $region6: #{transform_net_forward.5} parent=1 // pred_check
      _
    $region7: #{transform_net_forward.5} parent=1 // pred_check_branch
      %16 = sbr.rel (0) target = $region9
    $region8: #{transform_net_forward.5} parent=1 // pred_region
      %s18 = ssub.s32 32768, 32768
      %19 = vsyncadd [#allocation3], %s18
      %s20 = sshll.u32 [#allocation2], 4
      %s21 = int_to_ptr.vmem [resolvable:$true] %s20
      %26 = dma.hbm_to_vmem [thread:$0]  %s1, 32768, %s21, [#allocation3], 256, 256, 16
    $region9: #{transform_net_forward.5} parent=1 // pred_fallthru
      _
    // Predicated region
    $region10: #{transform_net_forward.5} parent=1 // pred_check
      _
    $region11: #{transform_net_forward.5} parent=1 // pred_check_branch
      %28 = sbr.rel (0) target = $region13
    $region12: #{transform_net_forward.5} parent=1 // pred_region
      _
    $region13: #{transform_net_forward.5} parent=1 // pred_fallthru
      _
    // Predicated region
    $region14: #{transform_net_forward.5} parent=1 // pred_check
      _
    $region15: #{transform_net_forward.5} parent=1 // pred_check_branch
      %30 = sbr.rel (0) target = $region17
    $region16: #{transform_net_forward.5} parent=1 // pred_region
      _
    $region17: #{transform_net_forward.5} parent=1 // pred_fallthru
      _
    // Predicated region
    $region18: #{transform_net_forward.5} parent=1 // pred_check
      _
    $region19: #{transform_net_forward.5} parent=1 // pred_check_branch
      %32 = sbr.rel (0) target = $region21
    $region20: #{transform_net_forward.5} parent=1 // pred_region
      _
    $region21: #{transform_net_forward.5} parent=1 // pred_fallthru
      _
    // Predicated region
    $region22: #{transform_net_forward.5} parent=1 // pred_check
      _
    $region23: #{transform_net_forward.5} parent=1 // pred_check_branch
      %34 = sbr.rel (0) target = $region25
    $region24: #{transform_net_forward.5} parent=1 // pred_region
      _
    $region25: #{transform_net_forward.5} parent=1 // pred_fallthru
      _
    // Predicated region
    $region26: #{transform_net_forward.5} parent=1 // pred_check
      _
    $region27: #{transform_net_forward.5} parent=1 // pred_check_branch
      %36 = sbr.rel (0) target = $region29
    $region28: #{transform_net_forward.5} parent=1 // pred_region
      _
    $region29: #{transform_net_forward.5} parent=1 // pred_fallthru
      _
    // Predicated region
    $region30: #{transform_net_forward.5} parent=1 // pred_check
      _
    $region31: #{transform_net_forward.5} parent=1 // pred_check_branch
      %38 = sbr.rel (0) target = $region33
    $region32: #{transform_net_forward.5} parent=1 // pred_region
      %39 = dma.done [#allocation3], 32768
    $region33: #{transform_net_forward.5} parent=1 // pred_fallthru
      _
    %v40 = vld [vmem:[%s0] sm:$0xff]
    %v41 = vld [vmem:[#allocation2] sm:$0xff]
    %v42 = vld [vmem:[#allocation2 + $0x8] sm:$0xff]
    %v43 = vld [vmem:[#allocation2 + $0x10] sm:$0xff]
    %v44 = vld [vmem:[#allocation2 + $0x18] sm:$0xff]
    %v45 = vld [vmem:[#allocation2 + $0x20] sm:$0xff]
    %v46 = vld [vmem:[#allocation2 + $0x28] sm:$0xff]
    %v47 = vld [vmem:[#allocation2 + $0x30] sm:$0xff]
    %v48 = vld [vmem:[#allocation2 + $0x38] sm:$0xff]
    %v49 = vld [vmem:[#allocation2 + $0x40] sm:$0xff]
    %v50 = vld [vmem:[#allocation2 + $0x48] sm:$0xff]
    %v51 = vld [vmem:[#allocation2 + $0x50] sm:$0xff]
    %v52 = vld [vmem:[#allocation2 + $0x58] sm:$0xff]
    %v53 = vld [vmem:[#allocation2 + $0x60] sm:$0xff]
    %v54 = vld [vmem:[#allocation2 + $0x68] sm:$0xff]
    %v55 = vld [vmem:[#allocation2 + $0x70] sm:$0xff]
    %v56 = vld [vmem:[#allocation2 + $0x78] sm:$0xff]
    %v57 = vld [vmem:[#allocation2 + $0x80] sm:$0xff]
    %v58 = vld [vmem:[#allocation2 + $0x88] sm:$0xff]
    %v59 = vld [vmem:[#allocation2 + $0x90] sm:$0xff]
    %v60 = vld [vmem:[#allocation2 + $0x98] sm:$0xff]
    %v61 = vld [vmem:[#allocation2 + $0xa0] sm:$0xff]
    %v62 = vld [vmem:[#allocation2 + $0xa8] sm:$0xff]
    %v63 = vld [vmem:[#allocation2 + $0xb0] sm:$0xff]
    %v64 = vld [vmem:[#allocation2 + $0xb8] sm:$0xff]
    %v65 = vld [vmem:[#allocation2 + $0xc0] sm:$0xff]
    %v66 = vld [vmem:[#allocation2 + $0xc8] sm:$0xff]
    %v67 = vld [vmem:[#allocation2 + $0xd0] sm:$0xff]
    %v68 = vld [vmem:[#allocation2 + $0xd8] sm:$0xff]
    %v69 = vld [vmem:[#allocation2 + $0xe0] sm:$0xff]
    %v70 = vld [vmem:[#allocation2 + $0xe8] sm:$0xff]
    %v71 = vld [vmem:[#allocation2 + $0xf0] sm:$0xff]
    %v72 = vld [vmem:[#allocation2 + $0xf8] sm:$0xff]
    %v73 = vld [vmem:[#allocation2 + $0x100] sm:$0xff]
    %v74 = vld [vmem:[#allocation2 + $0x108] sm:$0xff]
    %v75 = vld [vmem:[#allocation2 + $0x110] sm:$0xff]
    %v76 = vld [vmem:[#allocation2 + $0x118] sm:$0xff]
    %v77 = vld [vmem:[#allocation2 + $0x120] sm:$0xff]
    %v78 = vld [vmem:[#allocation2 + $0x128] sm:$0xff]
    %v79 = vld [vmem:[#allocation2 + $0x130] sm:$0xff]
    %v80 = vld [vmem:[#allocation2 + $0x138] sm:$0xff]
    %v81 = vld [vmem:[#allocation2 + $0x140] sm:$0xff]
    %v82 = vld [vmem:[#allocation2 + $0x148] sm:$0xff]
    %v83 = vld [vmem:[#allocation2 + $0x150] sm:$0xff]
    %v84 = vld [vmem:[#allocation2 + $0x158] sm:$0xff]
    %v85 = vld [vmem:[#allocation2 + $0x160] sm:$0xff]
    %v86 = vld [vmem:[#allocation2 + $0x168] sm:$0xff]
    %v87 = vld [vmem:[#allocation2 + $0x170] sm:$0xff]
    %v88 = vld [vmem:[#allocation2 + $0x178] sm:$0xff]
    %v89 = vld [vmem:[#allocation2 + $0x180] sm:$0xff]
    %v90 = vld [vmem:[#allocation2 + $0x188] sm:$0xff]
    %v91 = vld [vmem:[#allocation2 + $0x190] sm:$0xff]
    %v92 = vld [vmem:[#allocation2 + $0x198] sm:$0xff]
    %v93 = vld [vmem:[#allocation2 + $0x1a0] sm:$0xff]
    %v94 = vld [vmem:[#allocation2 + $0x1a8] sm:$0xff]
    %v95 = vld [vmem:[#allocation2 + $0x1b0] sm:$0xff]
    %v96 = vld [vmem:[#allocation2 + $0x1b8] sm:$0xff]
    %v97 = vld [vmem:[#allocation2 + $0x1c0] sm:$0xff]
    %v98 = vld [vmem:[#allocation2 + $0x1c8] sm:$0xff]
    %v99 = vld [vmem:[#allocation2 + $0x1d0] sm:$0xff]
    %v100 = vld [vmem:[#allocation2 + $0x1d8] sm:$0xff]
    %v101 = vld [vmem:[#allocation2 + $0x1e0] sm:$0xff]
    %v102 = vld [vmem:[#allocation2 + $0x1e8] sm:$0xff]
    %v103 = vld [vmem:[#allocation2 + $0x1f0] sm:$0xff]
    %v104 = vld [vmem:[#allocation2 + $0x1f8] sm:$0xff]
    %v105 = vld [vmem:[#allocation2 + $0x200] sm:$0xff]
    %v106 = vld [vmem:[#allocation2 + $0x208] sm:$0xff]
    %v107 = vld [vmem:[#allocation2 + $0x210] sm:$0xff]
    %v108 = vld [vmem:[#allocation2 + $0x218] sm:$0xff]
    %v109 = vld [vmem:[#allocation2 + $0x220] sm:$0xff]
    %v110 = vld [vmem:[#allocation2 + $0x228] sm:$0xff]
    %v111 = vld [vmem:[#allocation2 + $0x230] sm:$0xff]
    %v112 = vld [vmem:[#allocation2 + $0x238] sm:$0xff]
    %v113 = vld [vmem:[#allocation2 + $0x240] sm:$0xff]
    %v114 = vld [vmem:[#allocation2 + $0x248] sm:$0xff]
    %v115 = vld [vmem:[#allocation2 + $0x250] sm:$0xff]
    %v116 = vld [vmem:[#allocation2 + $0x258] sm:$0xff]
    %v117 = vld [vmem:[#allocation2 + $0x260] sm:$0xff]
    %v118 = vld [vmem:[#allocation2 + $0x268] sm:$0xff]
    %v119 = vld [vmem:[#allocation2 + $0x270] sm:$0xff]
    %v120 = vld [vmem:[#allocation2 + $0x278] sm:$0xff]
    %v121 = vld [vmem:[#allocation2 + $0x280] sm:$0xff]
    %v122 = vld [vmem:[#allocation2 + $0x288] sm:$0xff]
    %v123 = vld [vmem:[#allocation2 + $0x290] sm:$0xff]
    %v124 = vld [vmem:[#allocation2 + $0x298] sm:$0xff]
    %v125 = vld [vmem:[#allocation2 + $0x2a0] sm:$0xff]
    %v126 = vld [vmem:[#allocation2 + $0x2a8] sm:$0xff]
    %v127 = vld [vmem:[#allocation2 + $0x2b0] sm:$0xff]
    %v128 = vld [vmem:[#allocation2 + $0x2b8] sm:$0xff]
    %v129 = vld [vmem:[#allocation2 + $0x2c0] sm:$0xff]
    %v130 = vld [vmem:[#allocation2 + $0x2c8] sm:$0xff]
    %v131 = vld [vmem:[#allocation2 + $0x2d0] sm:$0xff]
    %v132 = vld [vmem:[#allocation2 + $0x2d8] sm:$0xff]
    %v133 = vld [vmem:[#allocation2 + $0x2e0] sm:$0xff]
    %v134 = vld [vmem:[#allocation2 + $0x2e8] sm:$0xff]
    %v135 = vld [vmem:[#allocation2 + $0x2f0] sm:$0xff]
    %v136 = vld [vmem:[#allocation2 + $0x2f8] sm:$0xff]
    %v137 = vld [vmem:[#allocation2 + $0x300] sm:$0xff]
    %v138 = vld [vmem:[#allocation2 + $0x308] sm:$0xff]
    %v139 = vld [vmem:[#allocation2 + $0x310] sm:$0xff]
    %v140 = vld [vmem:[#allocation2 + $0x318] sm:$0xff]
    %v141 = vld [vmem:[#allocation2 + $0x320] sm:$0xff]
    %v142 = vld [vmem:[#allocation2 + $0x328] sm:$0xff]
    %v143 = vld [vmem:[#allocation2 + $0x330] sm:$0xff]
    %v144 = vld [vmem:[#allocation2 + $0x338] sm:$0xff]
    %v145 = vld [vmem:[#allocation2 + $0x340] sm:$0xff]
    %v146 = vld [vmem:[#allocation2 + $0x348] sm:$0xff]
    %v147 = vld [vmem:[#allocation2 + $0x350] sm:$0xff]
    %v148 = vld [vmem:[#allocation2 + $0x358] sm:$0xff]
    %v149 = vld [vmem:[#allocation2 + $0x360] sm:$0xff]
    %v150 = vld [vmem:[#allocation2 + $0x368] sm:$0xff]
    %v151 = vld [vmem:[#allocation2 + $0x370] sm:$0xff]
    %v152 = vld [vmem:[#allocation2 + $0x378] sm:$0xff]
    %v153 = vld [vmem:[#allocation2 + $0x380] sm:$0xff]
    %v154 = vld [vmem:[#allocation2 + $0x388] sm:$0xff]
    %v155 = vld [vmem:[#allocation2 + $0x390] sm:$0xff]
    %v156 = vld [vmem:[#allocation2 + $0x398] sm:$0xff]
    %v157 = vld [vmem:[#allocation2 + $0x3a0] sm:$0xff]
    %v158 = vld [vmem:[#allocation2 + $0x3a8] sm:$0xff]
    %v159 = vld [vmem:[#allocation2 + $0x3b0] sm:$0xff]
    %v160 = vld [vmem:[#allocation2 + $0x3b8] sm:$0xff]
    %v161 = vld [vmem:[#allocation2 + $0x3c0] sm:$0xff]
    %v162 = vld [vmem:[#allocation2 + $0x3c8] sm:$0xff]
    %v163 = vld [vmem:[#allocation2 + $0x3d0] sm:$0xff]
    %v164 = vld [vmem:[#allocation2 + $0x3d8] sm:$0xff]
    %v165 = vld [vmem:[#allocation2 + $0x3e0] sm:$0xff]
    %v166 = vld [vmem:[#allocation2 + $0x3e8] sm:$0xff]
    %v167 = vld [vmem:[#allocation2 + $0x3f0] sm:$0xff]
    %v168 = vld [vmem:[#allocation2 + $0x3f8] sm:$0xff]
    %v169 = vld [vmem:[#allocation2 + $0x400] sm:$0xff]
    %v170 = vld [vmem:[#allocation2 + $0x408] sm:$0xff]
    %v171 = vld [vmem:[#allocation2 + $0x410] sm:$0xff]
    %v172 = vld [vmem:[#allocation2 + $0x418] sm:$0xff]
    %v173 = vld [vmem:[#allocation2 + $0x420] sm:$0xff]
    %v174 = vld [vmem:[#allocation2 + $0x428] sm:$0xff]
    %v175 = vld [vmem:[#allocation2 + $0x430] sm:$0xff]
    %v176 = vld [vmem:[#allocation2 + $0x438] sm:$0xff]
    %v177 = vld [vmem:[#allocation2 + $0x440] sm:$0xff]
    %v178 = vld [vmem:[#allocation2 + $0x448] sm:$0xff]
    %v179 = vld [vmem:[#allocation2 + $0x450] sm:$0xff]
    %v180 = vld [vmem:[#allocation2 + $0x458] sm:$0xff]
    %v181 = vld [vmem:[#allocation2 + $0x460] sm:$0xff]
    %v182 = vld [vmem:[#allocation2 + $0x468] sm:$0xff]
    %v183 = vld [vmem:[#allocation2 + $0x470] sm:$0xff]
    %v184 = vld [vmem:[#allocation2 + $0x478] sm:$0xff]
    %v185 = vld [vmem:[#allocation2 + $0x480] sm:$0xff]
    %v186 = vld [vmem:[#allocation2 + $0x488] sm:$0xff]
    %v187 = vld [vmem:[#allocation2 + $0x490] sm:$0xff]
    %v188 = vld [vmem:[#allocation2 + $0x498] sm:$0xff]
    %v189 = vld [vmem:[#allocation2 + $0x4a0] sm:$0xff]
    %v190 = vld [vmem:[#allocation2 + $0x4a8] sm:$0xff]
    %v191 = vld [vmem:[#allocation2 + $0x4b0] sm:$0xff]
    %v192 = vld [vmem:[#allocation2 + $0x4b8] sm:$0xff]
    %v193 = vld [vmem:[#allocation2 + $0x4c0] sm:$0xff]
    %v194 = vld [vmem:[#allocation2 + $0x4c8] sm:$0xff]
    %v195 = vld [vmem:[#allocation2 + $0x4d0] sm:$0xff]
    %v196 = vld [vmem:[#allocation2 + $0x4d8] sm:$0xff]
    %v197 = vld [vmem:[#allocation2 + $0x4e0] sm:$0xff]
    %v198 = vld [vmem:[#allocation2 + $0x4e8] sm:$0xff]
    %v199 = vld [vmem:[#allocation2 + $0x4f0] sm:$0xff]
    %v200 = vld [vmem:[#allocation2 + $0x4f8] sm:$0xff]
    %v201 = vld [vmem:[#allocation2 + $0x500] sm:$0xff]
    %v202 = vld [vmem:[#allocation2 + $0x508] sm:$0xff]
    %v203 = vld [vmem:[#allocation2 + $0x510] sm:$0xff]
    %v204 = vld [vmem:[#allocation2 + $0x518] sm:$0xff]
    %v205 = vld [vmem:[#allocation2 + $0x520] sm:$0xff]
    %v206 = vld [vmem:[#allocation2 + $0x528] sm:$0xff]
    %v207 = vld [vmem:[#allocation2 + $0x530] sm:$0xff]
    %v208 = vld [vmem:[#allocation2 + $0x538] sm:$0xff]
    %v209 = vld [vmem:[#allocation2 + $0x540] sm:$0xff]
    %v210 = vld [vmem:[#allocation2 + $0x548] sm:$0xff]
    %v211 = vld [vmem:[#allocation2 + $0x550] sm:$0xff]
    %v212 = vld [vmem:[#allocation2 + $0x558] sm:$0xff]
    %v213 = vld [vmem:[#allocation2 + $0x560] sm:$0xff]
    %v214 = vld [vmem:[#allocation2 + $0x568] sm:$0xff]
    %v215 = vld [vmem:[#allocation2 + $0x570] sm:$0xff]
    %v216 = vld [vmem:[#allocation2 + $0x578] sm:$0xff]
    %v217 = vld [vmem:[#allocation2 + $0x580] sm:$0xff]
    %v218 = vld [vmem:[#allocation2 + $0x588] sm:$0xff]
    %v219 = vld [vmem:[#allocation2 + $0x590] sm:$0xff]
    %v220 = vld [vmem:[#allocation2 + $0x598] sm:$0xff]
    %v221 = vld [vmem:[#allocation2 + $0x5a0] sm:$0xff]
    %v222 = vld [vmem:[#allocation2 + $0x5a8] sm:$0xff]
    %v223 = vld [vmem:[#allocation2 + $0x5b0] sm:$0xff]
    %v224 = vld [vmem:[#allocation2 + $0x5b8] sm:$0xff]
    %v225 = vld [vmem:[#allocation2 + $0x5c0] sm:$0xff]
    %v226 = vld [vmem:[#allocation2 + $0x5c8] sm:$0xff]
    %v227 = vld [vmem:[#allocation2 + $0x5d0] sm:$0xff]
    %v228 = vld [vmem:[#allocation2 + $0x5d8] sm:$0xff]
    %v229 = vld [vmem:[#allocation2 + $0x5e0] sm:$0xff]
    %v230 = vld [vmem:[#allocation2 + $0x5e8] sm:$0xff]
    %v231 = vld [vmem:[#allocation2 + $0x5f0] sm:$0xff]
    %v232 = vld [vmem:[#allocation2 + $0x5f8] sm:$0xff]
    %v233 = vld [vmem:[#allocation2 + $0x600] sm:$0xff]
    %v234 = vld [vmem:[#allocation2 + $0x608] sm:$0xff]
    %v235 = vld [vmem:[#allocation2 + $0x610] sm:$0xff]
    %v236 = vld [vmem:[#allocation2 + $0x618] sm:$0xff]
    %v237 = vld [vmem:[#allocation2 + $0x620] sm:$0xff]
    %v238 = vld [vmem:[#allocation2 + $0x628] sm:$0xff]
    %v239 = vld [vmem:[#allocation2 + $0x630] sm:$0xff]
    %v240 = vld [vmem:[#allocation2 + $0x638] sm:$0xff]
    %v241 = vld [vmem:[#allocation2 + $0x640] sm:$0xff]
    %v242 = vld [vmem:[#allocation2 + $0x648] sm:$0xff]
    %v243 = vld [vmem:[#allocation2 + $0x650] sm:$0xff]
    %v244 = vld [vmem:[#allocation2 + $0x658] sm:$0xff]
    %v245 = vld [vmem:[#allocation2 + $0x660] sm:$0xff]
    %v246 = vld [vmem:[#allocation2 + $0x668] sm:$0xff]
    %v247 = vld [vmem:[#allocation2 + $0x670] sm:$0xff]
    %v248 = vld [vmem:[#allocation2 + $0x678] sm:$0xff]
    %v249 = vld [vmem:[#allocation2 + $0x680] sm:$0xff]
    %v250 = vld [vmem:[#allocation2 + $0x688] sm:$0xff]
    %v251 = vld [vmem:[#allocation2 + $0x690] sm:$0xff]
    %v252 = vld [vmem:[#allocation2 + $0x698] sm:$0xff]
    %v253 = vld [vmem:[#allocation2 + $0x6a0] sm:$0xff]
    %v254 = vld [vmem:[#allocation2 + $0x6a8] sm:$0xff]
    %v255 = vld [vmem:[#allocation2 + $0x6b0] sm:$0xff]
    %v256 = vld [vmem:[#allocation2 + $0x6b8] sm:$0xff]
    %v257 = vld [vmem:[#allocation2 + $0x6c0] sm:$0xff]
    %v258 = vld [vmem:[#allocation2 + $0x6c8] sm:$0xff]
    %v259 = vld [vmem:[#allocation2 + $0x6d0] sm:$0xff]
    %v260 = vld [vmem:[#allocation2 + $0x6d8] sm:$0xff]
    %v261 = vld [vmem:[#allocation2 + $0x6e0] sm:$0xff]
    %v262 = vld [vmem:[#allocation2 + $0x6e8] sm:$0xff]
    %v263 = vld [vmem:[#allocation2 + $0x6f0] sm:$0xff]
    %v264 = vld [vmem:[#allocation2 + $0x6f8] sm:$0xff]
    %v265 = vld [vmem:[#allocation2 + $0x700] sm:$0xff]
    %v266 = vld [vmem:[#allocation2 + $0x708] sm:$0xff]
    %v267 = vld [vmem:[#allocation2 + $0x710] sm:$0xff]
    %v268 = vld [vmem:[#allocation2 + $0x718] sm:$0xff]
    %v269 = vld [vmem:[#allocation2 + $0x720] sm:$0xff]
    %v270 = vld [vmem:[#allocation2 + $0x728] sm:$0xff]
    %v271 = vld [vmem:[#allocation2 + $0x730] sm:$0xff]
    %v272 = vld [vmem:[#allocation2 + $0x738] sm:$0xff]
    %v273 = vld [vmem:[#allocation2 + $0x740] sm:$0xff]
    %v274 = vld [vmem:[#allocation2 + $0x748] sm:$0xff]
    %v275 = vld [vmem:[#allocation2 + $0x750] sm:$0xff]
    %v276 = vld [vmem:[#allocation2 + $0x758] sm:$0xff]
    %v277 = vld [vmem:[#allocation2 + $0x760] sm:$0xff]
    %v278 = vld [vmem:[#allocation2 + $0x768] sm:$0xff]
    %v279 = vld [vmem:[#allocation2 + $0x770] sm:$0xff]
    %v280 = vld [vmem:[#allocation2 + $0x778] sm:$0xff]
    %v281 = vld [vmem:[#allocation2 + $0x780] sm:$0xff]
    %v282 = vld [vmem:[#allocation2 + $0x788] sm:$0xff]
    %v283 = vld [vmem:[#allocation2 + $0x790] sm:$0xff]
    %v284 = vld [vmem:[#allocation2 + $0x798] sm:$0xff]
    %v285 = vld [vmem:[#allocation2 + $0x7a0] sm:$0xff]
    %v286 = vld [vmem:[#allocation2 + $0x7a8] sm:$0xff]
    %v287 = vld [vmem:[#allocation2 + $0x7b0] sm:$0xff]
    %v288 = vld [vmem:[#allocation2 + $0x7b8] sm:$0xff]
    %v289 = vld [vmem:[#allocation2 + $0x7c0] sm:$0xff]
    %v290 = vld [vmem:[#allocation2 + $0x7c8] sm:$0xff]
    %v291 = vld [vmem:[#allocation2 + $0x7d0] sm:$0xff]
    %v292 = vld [vmem:[#allocation2 + $0x7d8] sm:$0xff]
    %v293 = vld [vmem:[#allocation2 + $0x7e0] sm:$0xff]
    %v294 = vld [vmem:[#allocation2 + $0x7e8] sm:$0xff]
    %v295 = vld [vmem:[#allocation2 + $0x7f0] sm:$0xff]
    %v296 = vld [vmem:[#allocation2 + $0x7f8] sm:$0xff]
    %v298 = vcombine.high %v40, %v40
    %v300 = vunpack.c.l.s4 1966171168
    %v301 = vunpack.c.0.s8 %v300
    %v302 = vlaneseq
    %v303 = vshrl.u32 %v302, 7
    %v304 = vsub.s32 %v301, %v303
    %v305 = vrot.slane %v40, %v304
    %v307 = vunpack.c.l.s4 1966171168
    %v308 = vunpack.c.0.s8 %v307
    %v309 = vlaneseq
    %v310 = vshrl.u32 %v309, 7
    %v311 = vsub.s32 %v308, %v310
    %v312 = vrot.slane %v298, %v311
    %v313 = vcombine.high %v305, %v305
    %v314 = vcombine.high %v312, %v312
    %v316 = vunpack.c.l.s4 1966171168
    %v317 = vunpack.c.0.s8 %v316
    %v318 = vlaneseq
    %v319 = vshrl.u32 %v318, 7
    %v320 = vsub.s32 %v317, %v319
    %v321 = vrot.slane %v305, %v320
    %v323 = vunpack.c.l.s4 1966171168
    %v324 = vunpack.c.0.s8 %v323
    %v325 = vlaneseq
    %v326 = vshrl.u32 %v325, 7
    %v327 = vsub.s32 %v324, %v326
    %v328 = vrot.slane %v312, %v327
    %v330 = vunpack.c.l.s4 1966171168
    %v331 = vunpack.c.0.s8 %v330
    %v332 = vlaneseq
    %v333 = vshrl.u32 %v332, 7
    %v334 = vsub.s32 %v331, %v333
    %v335 = vrot.slane %v313, %v334
    %v337 = vunpack.c.l.s4 1966171168
    %v338 = vunpack.c.0.s8 %v337
    %v339 = vlaneseq
    %v340 = vshrl.u32 %v339, 7
    %v341 = vsub.s32 %v338, %v340
    %v342 = vrot.slane %v314, %v341
    %v343 = vcombine.high %v321, %v321
    %v344 = vcombine.high %v328, %v328
    %v345 = vcombine.high %v335, %v335
    %v346 = vcombine.high %v342, %v342
    %v611 = vunpack.c.l.b16 %v41
    %v612 = vunpack.c.h.b16 %v41
    %v613 = vunpack.c.l.b16 %v42
    %v614 = vunpack.c.h.b16 %v42
    %v615 = vunpack.c.l.b16 %v43
    %v616 = vunpack.c.h.b16 %v43
    %v617 = vunpack.c.l.b16 %v44
    %v618 = vunpack.c.h.b16 %v44
    %v619 = vunpack.c.l.b16 %v45
    %v620 = vunpack.c.h.b16 %v45
    %v621 = vunpack.c.l.b16 %v46
    %v622 = vunpack.c.h.b16 %v46
    %v623 = vunpack.c.l.b16 %v47
    %v624 = vunpack.c.h.b16 %v47
    %v625 = vunpack.c.l.b16 %v48
    %v626 = vunpack.c.h.b16 %v48
    %v627 = vunpack.c.l.b16 %v49
    %v628 = vunpack.c.h.b16 %v49
    %v629 = vunpack.c.l.b16 %v50
    %v630 = vunpack.c.h.b16 %v50
    %v631 = vunpack.c.l.b16 %v51
    %v632 = vunpack.c.h.b16 %v51
    %v633 = vunpack.c.l.b16 %v52
    %v634 = vunpack.c.h.b16 %v52
    %v635 = vunpack.c.l.b16 %v53
    %v636 = vunpack.c.h.b16 %v53
    %v637 = vunpack.c.l.b16 %v54
    %v638 = vunpack.c.h.b16 %v54
    %v639 = vunpack.c.l.b16 %v55
    %v640 = vunpack.c.h.b16 %v55
    %v641 = vunpack.c.l.b16 %v56
    %v642 = vunpack.c.h.b16 %v56
    %v643 = vunpack.c.l.b16 %v57
    %v644 = vunpack.c.h.b16 %v57
    %v645 = vunpack.c.l.b16 %v58
    %v646 = vunpack.c.h.b16 %v58
    %v647 = vunpack.c.l.b16 %v59
    %v648 = vunpack.c.h.b16 %v59
    %v649 = vunpack.c.l.b16 %v60
    %v650 = vunpack.c.h.b16 %v60
    %v651 = vunpack.c.l.b16 %v61
    %v652 = vunpack.c.h.b16 %v61
    %v653 = vunpack.c.l.b16 %v62
    %v654 = vunpack.c.h.b16 %v62
    %v655 = vunpack.c.l.b16 %v63
    %v656 = vunpack.c.h.b16 %v63
    %v657 = vunpack.c.l.b16 %v64
    %v658 = vunpack.c.h.b16 %v64
    %v659 = vunpack.c.l.b16 %v65
    %v660 = vunpack.c.h.b16 %v65
    %v661 = vunpack.c.l.b16 %v66
    %v662 = vunpack.c.h.b16 %v66
    %v663 = vunpack.c.l.b16 %v67
    %v664 = vunpack.c.h.b16 %v67
    %v665 = vunpack.c.l.b16 %v68
    %v666 = vunpack.c.h.b16 %v68
    %v667 = vunpack.c.l.b16 %v69
    %v668 = vunpack.c.h.b16 %v69
    %v669 = vunpack.c.l.b16 %v70
    %v670 = vunpack.c.h.b16 %v70
    %v671 = vunpack.c.l.b16 %v71
    %v672 = vunpack.c.h.b16 %v71
    %v673 = vunpack.c.l.b16 %v72
    %v674 = vunpack.c.h.b16 %v72
    %v675 = vunpack.c.l.b16 %v73
    %v676 = vunpack.c.h.b16 %v73
    %v677 = vunpack.c.l.b16 %v74
    %v678 = vunpack.c.h.b16 %v74
    %v679 = vunpack.c.l.b16 %v75
    %v680 = vunpack.c.h.b16 %v75
    %v681 = vunpack.c.l.b16 %v76
    %v682 = vunpack.c.h.b16 %v76
    %v683 = vunpack.c.l.b16 %v77
    %v684 = vunpack.c.h.b16 %v77
    %v685 = vunpack.c.l.b16 %v78
    %v686 = vunpack.c.h.b16 %v78
    %v687 = vunpack.c.l.b16 %v79
    %v688 = vunpack.c.h.b16 %v79
    %v689 = vunpack.c.l.b16 %v80
    %v690 = vunpack.c.h.b16 %v80
    %v691 = vunpack.c.l.b16 %v81
    %v692 = vunpack.c.h.b16 %v81
    %v693 = vunpack.c.l.b16 %v82
    %v694 = vunpack.c.h.b16 %v82
    %v695 = vunpack.c.l.b16 %v83
    %v696 = vunpack.c.h.b16 %v83
    %v697 = vunpack.c.l.b16 %v84
    %v698 = vunpack.c.h.b16 %v84
    %v699 = vunpack.c.l.b16 %v85
    %v700 = vunpack.c.h.b16 %v85
    %v701 = vunpack.c.l.b16 %v86
    %v702 = vunpack.c.h.b16 %v86
    %v703 = vunpack.c.l.b16 %v87
    %v704 = vunpack.c.h.b16 %v87
    %v705 = vunpack.c.l.b16 %v88
    %v706 = vunpack.c.h.b16 %v88
    %v707 = vunpack.c.l.b16 %v89
    %v708 = vunpack.c.h.b16 %v89
    %v709 = vunpack.c.l.b16 %v90
    %v710 = vunpack.c.h.b16 %v90
    %v711 = vunpack.c.l.b16 %v91
    %v712 = vunpack.c.h.b16 %v91
    %v713 = vunpack.c.l.b16 %v92
    %v714 = vunpack.c.h.b16 %v92
    %v715 = vunpack.c.l.b16 %v93
    %v716 = vunpack.c.h.b16 %v93
    %v717 = vunpack.c.l.b16 %v94
    %v718 = vunpack.c.h.b16 %v94
    %v719 = vunpack.c.l.b16 %v95
    %v720 = vunpack.c.h.b16 %v95
    %v721 = vunpack.c.l.b16 %v96
    %v722 = vunpack.c.h.b16 %v96
    %v723 = vunpack.c.l.b16 %v97
    %v724 = vunpack.c.h.b16 %v97
    %v725 = vunpack.c.l.b16 %v98
    %v726 = vunpack.c.h.b16 %v98
    %v727 = vunpack.c.l.b16 %v99
    %v728 = vunpack.c.h.b16 %v99
    %v729 = vunpack.c.l.b16 %v100
    %v730 = vunpack.c.h.b16 %v100
    %v731 = vunpack.c.l.b16 %v101
    %v732 = vunpack.c.h.b16 %v101
    %v733 = vunpack.c.l.b16 %v102
    %v734 = vunpack.c.h.b16 %v102
    %v735 = vunpack.c.l.b16 %v103
    %v736 = vunpack.c.h.b16 %v103
    %v737 = vunpack.c.l.b16 %v104
    %v738 = vunpack.c.h.b16 %v104
    %v739 = vunpack.c.l.b16 %v105
    %v740 = vunpack.c.h.b16 %v105
    %v741 = vunpack.c.l.b16 %v106
    %v742 = vunpack.c.h.b16 %v106
    %v743 = vunpack.c.l.b16 %v107
    %v744 = vunpack.c.h.b16 %v107
    %v745 = vunpack.c.l.b16 %v108
    %v746 = vunpack.c.h.b16 %v108
    %v747 = vunpack.c.l.b16 %v109
    %v748 = vunpack.c.h.b16 %v109
    %v749 = vunpack.c.l.b16 %v110
    %v750 = vunpack.c.h.b16 %v110
    %v751 = vunpack.c.l.b16 %v111
    %v752 = vunpack.c.h.b16 %v111
    %v753 = vunpack.c.l.b16 %v112
    %v754 = vunpack.c.h.b16 %v112
    %v755 = vunpack.c.l.b16 %v113
    %v756 = vunpack.c.h.b16 %v113
    %v757 = vunpack.c.l.b16 %v114
    %v758 = vunpack.c.h.b16 %v114
    %v759 = vunpack.c.l.b16 %v115
    %v760 = vunpack.c.h.b16 %v115
    %v761 = vunpack.c.l.b16 %v116
    %v762 = vunpack.c.h.b16 %v116
    %v763 = vunpack.c.l.b16 %v117
    %v764 = vunpack.c.h.b16 %v117
    %v765 = vunpack.c.l.b16 %v118
    %v766 = vunpack.c.h.b16 %v118
    %v767 = vunpack.c.l.b16 %v119
    %v768 = vunpack.c.h.b16 %v119
    %v769 = vunpack.c.l.b16 %v120
    %v770 = vunpack.c.h.b16 %v120
    %v771 = vunpack.c.l.b16 %v121
    %v772 = vunpack.c.h.b16 %v121
    %v773 = vunpack.c.l.b16 %v122
    %v774 = vunpack.c.h.b16 %v122
    %v775 = vunpack.c.l.b16 %v123
    %v776 = vunpack.c.h.b16 %v123
    %v777 = vunpack.c.l.b16 %v124
    %v778 = vunpack.c.h.b16 %v124
    %v779 = vunpack.c.l.b16 %v125
    %v780 = vunpack.c.h.b16 %v125
    %v781 = vunpack.c.l.b16 %v126
    %v782 = vunpack.c.h.b16 %v126
    %v783 = vunpack.c.l.b16 %v127
    %v784 = vunpack.c.h.b16 %v127
    %v785 = vunpack.c.l.b16 %v128
    %v786 = vunpack.c.h.b16 %v128
    %v787 = vunpack.c.l.b16 %v129
    %v788 = vunpack.c.h.b16 %v129
    %v789 = vunpack.c.l.b16 %v130
    %v790 = vunpack.c.h.b16 %v130
    %v791 = vunpack.c.l.b16 %v131
    %v792 = vunpack.c.h.b16 %v131
    %v793 = vunpack.c.l.b16 %v132
    %v794 = vunpack.c.h.b16 %v132
    %v795 = vunpack.c.l.b16 %v133
    %v796 = vunpack.c.h.b16 %v133
    %v797 = vunpack.c.l.b16 %v134
    %v798 = vunpack.c.h.b16 %v134
    %v799 = vunpack.c.l.b16 %v135
    %v800 = vunpack.c.h.b16 %v135
    %v801 = vunpack.c.l.b16 %v136
    %v802 = vunpack.c.h.b16 %v136
    %v803 = vunpack.c.l.b16 %v137
    %v804 = vunpack.c.h.b16 %v137
    %v805 = vunpack.c.l.b16 %v138
    %v806 = vunpack.c.h.b16 %v138
    %v807 = vunpack.c.l.b16 %v139
    %v808 = vunpack.c.h.b16 %v139
    %v809 = vunpack.c.l.b16 %v140
    %v810 = vunpack.c.h.b16 %v140
    %v811 = vunpack.c.l.b16 %v141
    %v812 = vunpack.c.h.b16 %v141
    %v813 = vunpack.c.l.b16 %v142
    %v814 = vunpack.c.h.b16 %v142
    %v815 = vunpack.c.l.b16 %v143
    %v816 = vunpack.c.h.b16 %v143
    %v817 = vunpack.c.l.b16 %v144
    %v818 = vunpack.c.h.b16 %v144
    %v819 = vunpack.c.l.b16 %v145
    %v820 = vunpack.c.h.b16 %v145
    %v821 = vunpack.c.l.b16 %v146
    %v822 = vunpack.c.h.b16 %v146
    %v823 = vunpack.c.l.b16 %v147
    %v824 = vunpack.c.h.b16 %v147
    %v825 = vunpack.c.l.b16 %v148
    %v826 = vunpack.c.h.b16 %v148
    %v827 = vunpack.c.l.b16 %v149
    %v828 = vunpack.c.h.b16 %v149
    %v829 = vunpack.c.l.b16 %v150
    %v830 = vunpack.c.h.b16 %v150
    %v831 = vunpack.c.l.b16 %v151
    %v832 = vunpack.c.h.b16 %v151
    %v833 = vunpack.c.l.b16 %v152
    %v834 = vunpack.c.h.b16 %v152
    %v835 = vunpack.c.l.b16 %v153
    %v836 = vunpack.c.h.b16 %v153
    %v837 = vunpack.c.l.b16 %v154
    %v838 = vunpack.c.h.b16 %v154
    %v839 = vunpack.c.l.b16 %v155
    %v840 = vunpack.c.h.b16 %v155
    %v841 = vunpack.c.l.b16 %v156
    %v842 = vunpack.c.h.b16 %v156
    %v843 = vunpack.c.l.b16 %v157
    %v844 = vunpack.c.h.b16 %v157
    %v845 = vunpack.c.l.b16 %v158
    %v846 = vunpack.c.h.b16 %v158
    %v847 = vunpack.c.l.b16 %v159
    %v848 = vunpack.c.h.b16 %v159
    %v849 = vunpack.c.l.b16 %v160
    %v850 = vunpack.c.h.b16 %v160
    %v851 = vunpack.c.l.b16 %v161
    %v852 = vunpack.c.h.b16 %v161
    %v853 = vunpack.c.l.b16 %v162
    %v854 = vunpack.c.h.b16 %v162
    %v855 = vunpack.c.l.b16 %v163
    %v856 = vunpack.c.h.b16 %v163
    %v857 = vunpack.c.l.b16 %v164
    %v858 = vunpack.c.h.b16 %v164
    %v859 = vunpack.c.l.b16 %v165
    %v860 = vunpack.c.h.b16 %v165
    %v861 = vunpack.c.l.b16 %v166
    %v862 = vunpack.c.h.b16 %v166
    %v863 = vunpack.c.l.b16 %v167
    %v864 = vunpack.c.h.b16 %v167
    %v865 = vunpack.c.l.b16 %v168
    %v866 = vunpack.c.h.b16 %v168
    %v867 = vunpack.c.l.b16 %v169
    %v868 = vunpack.c.h.b16 %v169
    %v869 = vunpack.c.l.b16 %v170
    %v870 = vunpack.c.h.b16 %v170
    %v871 = vunpack.c.l.b16 %v171
    %v872 = vunpack.c.h.b16 %v171
    %v873 = vunpack.c.l.b16 %v172
    %v874 = vunpack.c.h.b16 %v172
    %v875 = vunpack.c.l.b16 %v173
    %v876 = vunpack.c.h.b16 %v173
    %v877 = vunpack.c.l.b16 %v174
    %v878 = vunpack.c.h.b16 %v174
    %v879 = vunpack.c.l.b16 %v175
    %v880 = vunpack.c.h.b16 %v175
    %v881 = vunpack.c.l.b16 %v176
    %v882 = vunpack.c.h.b16 %v176
    %v883 = vunpack.c.l.b16 %v177
    %v884 = vunpack.c.h.b16 %v177
    %v885 = vunpack.c.l.b16 %v178
    %v886 = vunpack.c.h.b16 %v178
    %v887 = vunpack.c.l.b16 %v179
    %v888 = vunpack.c.h.b16 %v179
    %v889 = vunpack.c.l.b16 %v180
    %v890 = vunpack.c.h.b16 %v180
    %v891 = vunpack.c.l.b16 %v181
    %v892 = vunpack.c.h.b16 %v181
    %v893 = vunpack.c.l.b16 %v182
    %v894 = vunpack.c.h.b16 %v182
    %v895 = vunpack.c.l.b16 %v183
    %v896 = vunpack.c.h.b16 %v183
    %v897 = vunpack.c.l.b16 %v184
    %v898 = vunpack.c.h.b16 %v184
    %v899 = vunpack.c.l.b16 %v185
    %v900 = vunpack.c.h.b16 %v185
    %v901 = vunpack.c.l.b16 %v186
    %v902 = vunpack.c.h.b16 %v186
    %v903 = vunpack.c.l.b16 %v187
    %v904 = vunpack.c.h.b16 %v187
    %v905 = vunpack.c.l.b16 %v188
    %v906 = vunpack.c.h.b16 %v188
    %v907 = vunpack.c.l.b16 %v189
    %v908 = vunpack.c.h.b16 %v189
    %v909 = vunpack.c.l.b16 %v190
    %v910 = vunpack.c.h.b16 %v190
    %v911 = vunpack.c.l.b16 %v191
    %v912 = vunpack.c.h.b16 %v191
    %v913 = vunpack.c.l.b16 %v192
    %v914 = vunpack.c.h.b16 %v192
    %v915 = vunpack.c.l.b16 %v193
    %v916 = vunpack.c.h.b16 %v193
    %v917 = vunpack.c.l.b16 %v194
    %v918 = vunpack.c.h.b16 %v194
    %v919 = vunpack.c.l.b16 %v195
    %v920 = vunpack.c.h.b16 %v195
    %v921 = vunpack.c.l.b16 %v196
    %v922 = vunpack.c.h.b16 %v196
    %v923 = vunpack.c.l.b16 %v197
    %v924 = vunpack.c.h.b16 %v197
    %v925 = vunpack.c.l.b16 %v198
    %v926 = vunpack.c.h.b16 %v198
    %v927 = vunpack.c.l.b16 %v199
    %v928 = vunpack.c.h.b16 %v199
    %v929 = vunpack.c.l.b16 %v200
    %v930 = vunpack.c.h.b16 %v200
    %v931 = vunpack.c.l.b16 %v201
    %v932 = vunpack.c.h.b16 %v201
    %v933 = vunpack.c.l.b16 %v202
    %v934 = vunpack.c.h.b16 %v202
    %v935 = vunpack.c.l.b16 %v203
    %v936 = vunpack.c.h.b16 %v203
    %v937 = vunpack.c.l.b16 %v204
    %v938 = vunpack.c.h.b16 %v204
    %v939 = vunpack.c.l.b16 %v205
    %v940 = vunpack.c.h.b16 %v205
    %v941 = vunpack.c.l.b16 %v206
    %v942 = vunpack.c.h.b16 %v206
    %v943 = vunpack.c.l.b16 %v207
    %v944 = vunpack.c.h.b16 %v207
    %v945 = vunpack.c.l.b16 %v208
    %v946 = vunpack.c.h.b16 %v208
    %v947 = vunpack.c.l.b16 %v209
    %v948 = vunpack.c.h.b16 %v209
    %v949 = vunpack.c.l.b16 %v210
    %v950 = vunpack.c.h.b16 %v210
    %v951 = vunpack.c.l.b16 %v211
    %v952 = vunpack.c.h.b16 %v211
    %v953 = vunpack.c.l.b16 %v212
    %v954 = vunpack.c.h.b16 %v212
    %v955 = vunpack.c.l.b16 %v213
    %v956 = vunpack.c.h.b16 %v213
    %v957 = vunpack.c.l.b16 %v214
    %v958 = vunpack.c.h.b16 %v214
    %v959 = vunpack.c.l.b16 %v215
    %v960 = vunpack.c.h.b16 %v215
    %v961 = vunpack.c.l.b16 %v216
    %v962 = vunpack.c.h.b16 %v216
    %v963 = vunpack.c.l.b16 %v217
    %v964 = vunpack.c.h.b16 %v217
    %v965 = vunpack.c.l.b16 %v218
    %v966 = vunpack.c.h.b16 %v218
    %v967 = vunpack.c.l.b16 %v219
    %v968 = vunpack.c.h.b16 %v219
    %v969 = vunpack.c.l.b16 %v220
    %v970 = vunpack.c.h.b16 %v220
    %v971 = vunpack.c.l.b16 %v221
    %v972 = vunpack.c.h.b16 %v221
    %v973 = vunpack.c.l.b16 %v222
    %v974 = vunpack.c.h.b16 %v222
    %v975 = vunpack.c.l.b16 %v223
    %v976 = vunpack.c.h.b16 %v223
    %v977 = vunpack.c.l.b16 %v224
    %v978 = vunpack.c.h.b16 %v224
    %v979 = vunpack.c.l.b16 %v225
    %v980 = vunpack.c.h.b16 %v225
    %v981 = vunpack.c.l.b16 %v226
    %v982 = vunpack.c.h.b16 %v226
    %v983 = vunpack.c.l.b16 %v227
    %v984 = vunpack.c.h.b16 %v227
    %v985 = vunpack.c.l.b16 %v228
    %v986 = vunpack.c.h.b16 %v228
    %v987 = vunpack.c.l.b16 %v229
    %v988 = vunpack.c.h.b16 %v229
    %v989 = vunpack.c.l.b16 %v230
    %v990 = vunpack.c.h.b16 %v230
    %v991 = vunpack.c.l.b16 %v231
    %v992 = vunpack.c.h.b16 %v231
    %v993 = vunpack.c.l.b16 %v232
    %v994 = vunpack.c.h.b16 %v232
    %v995 = vunpack.c.l.b16 %v233
    %v996 = vunpack.c.h.b16 %v233
    %v997 = vunpack.c.l.b16 %v234
    %v998 = vunpack.c.h.b16 %v234
    %v999 = vunpack.c.l.b16 %v235
    %v1000 = vunpack.c.h.b16 %v235
    %v1001 = vunpack.c.l.b16 %v236
    %v1002 = vunpack.c.h.b16 %v236
    %v1003 = vunpack.c.l.b16 %v237
    %v1004 = vunpack.c.h.b16 %v237
    %v1005 = vunpack.c.l.b16 %v238
    %v1006 = vunpack.c.h.b16 %v238
    %v1007 = vunpack.c.l.b16 %v239
    %v1008 = vunpack.c.h.b16 %v239
    %v1009 = vunpack.c.l.b16 %v240
    %v1010 = vunpack.c.h.b16 %v240
    %v1011 = vunpack.c.l.b16 %v241
    %v1012 = vunpack.c.h.b16 %v241
    %v1013 = vunpack.c.l.b16 %v242
    %v1014 = vunpack.c.h.b16 %v242
    %v1015 = vunpack.c.l.b16 %v243
    %v1016 = vunpack.c.h.b16 %v243
    %v1017 = vunpack.c.l.b16 %v244
    %v1018 = vunpack.c.h.b16 %v244
    %v1019 = vunpack.c.l.b16 %v245
    %v1020 = vunpack.c.h.b16 %v245
    %v1021 = vunpack.c.l.b16 %v246
    %v1022 = vunpack.c.h.b16 %v246
    %v1023 = vunpack.c.l.b16 %v247
    %v1024 = vunpack.c.h.b16 %v247
    %v1025 = vunpack.c.l.b16 %v248
    %v1026 = vunpack.c.h.b16 %v248
    %v1027 = vunpack.c.l.b16 %v249
    %v1028 = vunpack.c.h.b16 %v249
    %v1029 = vunpack.c.l.b16 %v250
    %v1030 = vunpack.c.h.b16 %v250
    %v1031 = vunpack.c.l.b16 %v251
    %v1032 = vunpack.c.h.b16 %v251
    %v1033 = vunpack.c.l.b16 %v252
    %v1034 = vunpack.c.h.b16 %v252
    %v1035 = vunpack.c.l.b16 %v253
    %v1036 = vunpack.c.h.b16 %v253
    %v1037 = vunpack.c.l.b16 %v254
    %v1038 = vunpack.c.h.b16 %v254
    %v1039 = vunpack.c.l.b16 %v255
    %v1040 = vunpack.c.h.b16 %v255
    %v1041 = vunpack.c.l.b16 %v256
    %v1042 = vunpack.c.h.b16 %v256
    %v1043 = vunpack.c.l.b16 %v257
    %v1044 = vunpack.c.h.b16 %v257
    %v1045 = vunpack.c.l.b16 %v258
    %v1046 = vunpack.c.h.b16 %v258
    %v1047 = vunpack.c.l.b16 %v259
    %v1048 = vunpack.c.h.b16 %v259
    %v1049 = vunpack.c.l.b16 %v260
    %v1050 = vunpack.c.h.b16 %v260
    %v1051 = vunpack.c.l.b16 %v261
    %v1052 = vunpack.c.h.b16 %v261
    %v1053 = vunpack.c.l.b16 %v262
    %v1054 = vunpack.c.h.b16 %v262
    %v1055 = vunpack.c.l.b16 %v263
    %v1056 = vunpack.c.h.b16 %v263
    %v1057 = vunpack.c.l.b16 %v264
    %v1058 = vunpack.c.h.b16 %v264
    %v1059 = vunpack.c.l.b16 %v265
    %v1060 = vunpack.c.h.b16 %v265
    %v1061 = vunpack.c.l.b16 %v266
    %v1062 = vunpack.c.h.b16 %v266
    %v1063 = vunpack.c.l.b16 %v267
    %v1064 = vunpack.c.h.b16 %v267
    %v1065 = vunpack.c.l.b16 %v268
    %v1066 = vunpack.c.h.b16 %v268
    %v1067 = vunpack.c.l.b16 %v269
    %v1068 = vunpack.c.h.b16 %v269
    %v1069 = vunpack.c.l.b16 %v270
    %v1070 = vunpack.c.h.b16 %v270
    %v1071 = vunpack.c.l.b16 %v271
    %v1072 = vunpack.c.h.b16 %v271
    %v1073 = vunpack.c.l.b16 %v272
    %v1074 = vunpack.c.h.b16 %v272
    %v1075 = vunpack.c.l.b16 %v273
    %v1076 = vunpack.c.h.b16 %v273
    %v1077 = vunpack.c.l.b16 %v274
    %v1078 = vunpack.c.h.b16 %v274
    %v1079 = vunpack.c.l.b16 %v275
    %v1080 = vunpack.c.h.b16 %v275
    %v1081 = vunpack.c.l.b16 %v276
    %v1082 = vunpack.c.h.b16 %v276
    %v1083 = vunpack.c.l.b16 %v277
    %v1084 = vunpack.c.h.b16 %v277
    %v1085 = vunpack.c.l.b16 %v278
    %v1086 = vunpack.c.h.b16 %v278
    %v1087 = vunpack.c.l.b16 %v279
    %v1088 = vunpack.c.h.b16 %v279
    %v1089 = vunpack.c.l.b16 %v280
    %v1090 = vunpack.c.h.b16 %v280
    %v1091 = vunpack.c.l.b16 %v281
    %v1092 = vunpack.c.h.b16 %v281
    %v1093 = vunpack.c.l.b16 %v282
    %v1094 = vunpack.c.h.b16 %v282
    %v1095 = vunpack.c.l.b16 %v283
    %v1096 = vunpack.c.h.b16 %v283
    %v1097 = vunpack.c.l.b16 %v284
    %v1098 = vunpack.c.h.b16 %v284
    %v1099 = vunpack.c.l.b16 %v285
    %v1100 = vunpack.c.h.b16 %v285
    %v1101 = vunpack.c.l.b16 %v286
    %v1102 = vunpack.c.h.b16 %v286
    %v1103 = vunpack.c.l.b16 %v287
    %v1104 = vunpack.c.h.b16 %v287
    %v1105 = vunpack.c.l.b16 %v288
    %v1106 = vunpack.c.h.b16 %v288
    %v1107 = vunpack.c.l.b16 %v289
    %v1108 = vunpack.c.h.b16 %v289
    %v1109 = vunpack.c.l.b16 %v290
    %v1110 = vunpack.c.h.b16 %v290
    %v1111 = vunpack.c.l.b16 %v291
    %v1112 = vunpack.c.h.b16 %v291
    %v1113 = vunpack.c.l.b16 %v292
    %v1114 = vunpack.c.h.b16 %v292
    %v1115 = vunpack.c.l.b16 %v293
    %v1116 = vunpack.c.h.b16 %v293
    %v1117 = vunpack.c.l.b16 %v294
    %v1118 = vunpack.c.h.b16 %v294
    %v1119 = vunpack.c.l.b16 %v295
    %v1120 = vunpack.c.h.b16 %v295
    %v1121 = vunpack.c.l.b16 %v296
    %v1122 = vunpack.c.h.b16 %v296
    %v1123 = vpack.c.b16 %v615, %v611
    %v1124 = vpack.c.b16 %v616, %v612
    %v1125 = vpack.c.b16 %v617, %v613
    %v1126 = vpack.c.b16 %v618, %v614
    %v1127 = vpack.c.b16 %v623, %v619
    %v1128 = vpack.c.b16 %v624, %v620
    %v1129 = vpack.c.b16 %v625, %v621
    %v1130 = vpack.c.b16 %v626, %v622
    %v1131 = vpack.c.b16 %v631, %v627
    %v1132 = vpack.c.b16 %v632, %v628
    %v1133 = vpack.c.b16 %v633, %v629
    %v1134 = vpack.c.b16 %v634, %v630
    %v1135 = vpack.c.b16 %v639, %v635
    %v1136 = vpack.c.b16 %v640, %v636
    %v1137 = vpack.c.b16 %v641, %v637
    %v1138 = vpack.c.b16 %v642, %v638
    %v1139 = vpack.c.b16 %v647, %v643
    %v1140 = vpack.c.b16 %v648, %v644
    %v1141 = vpack.c.b16 %v649, %v645
    %v1142 = vpack.c.b16 %v650, %v646
    %v1143 = vpack.c.b16 %v655, %v651
    %v1144 = vpack.c.b16 %v656, %v652
    %v1145 = vpack.c.b16 %v657, %v653
    %v1146 = vpack.c.b16 %v658, %v654
    %v1147 = vpack.c.b16 %v663, %v659
    %v1148 = vpack.c.b16 %v664, %v660
    %v1149 = vpack.c.b16 %v665, %v661
    %v1150 = vpack.c.b16 %v666, %v662
    %v1151 = vpack.c.b16 %v671, %v667
    %v1152 = vpack.c.b16 %v672, %v668
    %v1153 = vpack.c.b16 %v673, %v669
    %v1154 = vpack.c.b16 %v674, %v670
    %v1155 = vpack.c.b16 %v679, %v675
    %v1156 = vpack.c.b16 %v680, %v676
    %v1157 = vpack.c.b16 %v681, %v677
    %v1158 = vpack.c.b16 %v682, %v678
    %v1159 = vpack.c.b16 %v687, %v683
    %v1160 = vpack.c.b16 %v688, %v684
    %v1161 = vpack.c.b16 %v689, %v685
    %v1162 = vpack.c.b16 %v690, %v686
    %v1163 = vpack.c.b16 %v695, %v691
    %v1164 = vpack.c.b16 %v696, %v692
    %v1165 = vpack.c.b16 %v697, %v693
    %v1166 = vpack.c.b16 %v698, %v694
    %v1167 = vpack.c.b16 %v703, %v699
    %v1168 = vpack.c.b16 %v704, %v700
    %v1169 = vpack.c.b16 %v705, %v701
    %v1170 = vpack.c.b16 %v706, %v702
    %v1171 = vpack.c.b16 %v711, %v707
    %v1172 = vpack.c.b16 %v712, %v708
    %v1173 = vpack.c.b16 %v713, %v709
    %v1174 = vpack.c.b16 %v714, %v710
    %v1175 = vpack.c.b16 %v719, %v715
    %v1176 = vpack.c.b16 %v720, %v716
    %v1177 = vpack.c.b16 %v721, %v717
    %v1178 = vpack.c.b16 %v722, %v718
    %v1179 = vpack.c.b16 %v727, %v723
    %v1180 = vpack.c.b16 %v728, %v724
    %v1181 = vpack.c.b16 %v729, %v725
    %v1182 = vpack.c.b16 %v730, %v726
    %v1183 = vpack.c.b16 %v735, %v731
    %v1184 = vpack.c.b16 %v736, %v732
    %v1185 = vpack.c.b16 %v737, %v733
    %v1186 = vpack.c.b16 %v738, %v734
    %v1187 = vpack.c.b16 %v743, %v739
    %v1188 = vpack.c.b16 %v744, %v740
    %v1189 = vpack.c.b16 %v745, %v741
    %v1190 = vpack.c.b16 %v746, %v742
    %v1191 = vpack.c.b16 %v751, %v747
    %v1192 = vpack.c.b16 %v752, %v748
    %v1193 = vpack.c.b16 %v753, %v749
    %v1194 = vpack.c.b16 %v754, %v750
    %v1195 = vpack.c.b16 %v759, %v755
    %v1196 = vpack.c.b16 %v760, %v756
    %v1197 = vpack.c.b16 %v761, %v757
    %v1198 = vpack.c.b16 %v762, %v758
    %v1199 = vpack.c.b16 %v767, %v763
    %v1200 = vpack.c.b16 %v768, %v764
    %v1201 = vpack.c.b16 %v769, %v765
    %v1202 = vpack.c.b16 %v770, %v766
    %v1203 = vpack.c.b16 %v775, %v771
    %v1204 = vpack.c.b16 %v776, %v772
    %v1205 = vpack.c.b16 %v777, %v773
    %v1206 = vpack.c.b16 %v778, %v774
    %v1207 = vpack.c.b16 %v783, %v779
    %v1208 = vpack.c.b16 %v784, %v780
    %v1209 = vpack.c.b16 %v785, %v781
    %v1210 = vpack.c.b16 %v786, %v782
    %v1211 = vpack.c.b16 %v791, %v787
    %v1212 = vpack.c.b16 %v792, %v788
    %v1213 = vpack.c.b16 %v793, %v789
    %v1214 = vpack.c.b16 %v794, %v790
    %v1215 = vpack.c.b16 %v799, %v795
    %v1216 = vpack.c.b16 %v800, %v796
    %v1217 = vpack.c.b16 %v801, %v797
    %v1218 = vpack.c.b16 %v802, %v798
    %v1219 = vpack.c.b16 %v807, %v803
    %v1220 = vpack.c.b16 %v808, %v804
    %v1221 = vpack.c.b16 %v809, %v805
    %v1222 = vpack.c.b16 %v810, %v806
    %v1223 = vpack.c.b16 %v815, %v811
    %v1224 = vpack.c.b16 %v816, %v812
    %v1225 = vpack.c.b16 %v817, %v813
    %v1226 = vpack.c.b16 %v818, %v814
    %v1227 = vpack.c.b16 %v823, %v819
    %v1228 = vpack.c.b16 %v824, %v820
    %v1229 = vpack.c.b16 %v825, %v821
    %v1230 = vpack.c.b16 %v826, %v822
    %v1231 = vpack.c.b16 %v831, %v827
    %v1232 = vpack.c.b16 %v832, %v828
    %v1233 = vpack.c.b16 %v833, %v829
    %v1234 = vpack.c.b16 %v834, %v830
    %v1235 = vpack.c.b16 %v839, %v835
    %v1236 = vpack.c.b16 %v840, %v836
    %v1237 = vpack.c.b16 %v841, %v837
    %v1238 = vpack.c.b16 %v842, %v838
    %v1239 = vpack.c.b16 %v847, %v843
    %v1240 = vpack.c.b16 %v848, %v844
    %v1241 = vpack.c.b16 %v849, %v845
    %v1242 = vpack.c.b16 %v850, %v846
    %v1243 = vpack.c.b16 %v855, %v851
    %v1244 = vpack.c.b16 %v856, %v852
    %v1245 = vpack.c.b16 %v857, %v853
    %v1246 = vpack.c.b16 %v858, %v854
    %v1247 = vpack.c.b16 %v863, %v859
    %v1248 = vpack.c.b16 %v864, %v860
    %v1249 = vpack.c.b16 %v865, %v861
    %v1250 = vpack.c.b16 %v866, %v862
    %v1251 = vpack.c.b16 %v871, %v867
    %v1252 = vpack.c.b16 %v872, %v868
    %v1253 = vpack.c.b16 %v873, %v869
    %v1254 = vpack.c.b16 %v874, %v870
    %v1255 = vpack.c.b16 %v879, %v875
    %v1256 = vpack.c.b16 %v880, %v876
    %v1257 = vpack.c.b16 %v881, %v877
    %v1258 = vpack.c.b16 %v882, %v878
    %v1259 = vpack.c.b16 %v887, %v883
    %v1260 = vpack.c.b16 %v888, %v884
    %v1261 = vpack.c.b16 %v889, %v885
    %v1262 = vpack.c.b16 %v890, %v886
    %v1263 = vpack.c.b16 %v895, %v891
    %v1264 = vpack.c.b16 %v896, %v892
    %v1265 = vpack.c.b16 %v897, %v893
    %v1266 = vpack.c.b16 %v898, %v894
    %v1267 = vpack.c.b16 %v903, %v899
    %v1268 = vpack.c.b16 %v904, %v900
    %v1269 = vpack.c.b16 %v905, %v901
    %v1270 = vpack.c.b16 %v906, %v902
    %v1271 = vpack.c.b16 %v911, %v907
    %v1272 = vpack.c.b16 %v912, %v908
    %v1273 = vpack.c.b16 %v913, %v909
    %v1274 = vpack.c.b16 %v914, %v910
    %v1275 = vpack.c.b16 %v919, %v915
    %v1276 = vpack.c.b16 %v920, %v916
    %v1277 = vpack.c.b16 %v921, %v917
    %v1278 = vpack.c.b16 %v922, %v918
    %v1279 = vpack.c.b16 %v927, %v923
    %v1280 = vpack.c.b16 %v928, %v924
    %v1281 = vpack.c.b16 %v929, %v925
    %v1282 = vpack.c.b16 %v930, %v926
    %v1283 = vpack.c.b16 %v935, %v931
    %v1284 = vpack.c.b16 %v936, %v932
    %v1285 = vpack.c.b16 %v937, %v933
    %v1286 = vpack.c.b16 %v938, %v934
    %v1287 = vpack.c.b16 %v943, %v939
    %v1288 = vpack.c.b16 %v944, %v940
    %v1289 = vpack.c.b16 %v945, %v941
    %v1290 = vpack.c.b16 %v946, %v942
    %v1291 = vpack.c.b16 %v951, %v947
    %v1292 = vpack.c.b16 %v952, %v948
    %v1293 = vpack.c.b16 %v953, %v949
    %v1294 = vpack.c.b16 %v954, %v950
    %v1295 = vpack.c.b16 %v959, %v955
    %v1296 = vpack.c.b16 %v960, %v956
    %v1297 = vpack.c.b16 %v961, %v957
    %v1298 = vpack.c.b16 %v962, %v958
    %v1299 = vpack.c.b16 %v967, %v963
    %v1300 = vpack.c.b16 %v968, %v964
    %v1301 = vpack.c.b16 %v969, %v965
    %v1302 = vpack.c.b16 %v970, %v966
    %v1303 = vpack.c.b16 %v975, %v971
    %v1304 = vpack.c.b16 %v976, %v972
    %v1305 = vpack.c.b16 %v977, %v973
    %v1306 = vpack.c.b16 %v978, %v974
    %v1307 = vpack.c.b16 %v983, %v979
    %v1308 = vpack.c.b16 %v984, %v980
    %v1309 = vpack.c.b16 %v985, %v981
    %v1310 = vpack.c.b16 %v986, %v982
    %v1311 = vpack.c.b16 %v991, %v987
    %v1312 = vpack.c.b16 %v992, %v988
    %v1313 = vpack.c.b16 %v993, %v989
    %v1314 = vpack.c.b16 %v994, %v990
    %v1315 = vpack.c.b16 %v999, %v995
    %v1316 = vpack.c.b16 %v1000, %v996
    %v1317 = vpack.c.b16 %v1001, %v997
    %v1318 = vpack.c.b16 %v1002, %v998
    %v1319 = vpack.c.b16 %v1007, %v1003
    %v1320 = vpack.c.b16 %v1008, %v1004
    %v1321 = vpack.c.b16 %v1009, %v1005
    %v1322 = vpack.c.b16 %v1010, %v1006
    %v1323 = vpack.c.b16 %v1015, %v1011
    %v1324 = vpack.c.b16 %v1016, %v1012
    %v1325 = vpack.c.b16 %v1017, %v1013
    %v1326 = vpack.c.b16 %v1018, %v1014
    %v1327 = vpack.c.b16 %v1023, %v1019
    %v1328 = vpack.c.b16 %v1024, %v1020
    %v1329 = vpack.c.b16 %v1025, %v1021
    %v1330 = vpack.c.b16 %v1026, %v1022
    %v1331 = vpack.c.b16 %v1031, %v1027
    %v1332 = vpack.c.b16 %v1032, %v1028
    %v1333 = vpack.c.b16 %v1033, %v1029
    %v1334 = vpack.c.b16 %v1034, %v1030
    %v1335 = vpack.c.b16 %v1039, %v1035
    %v1336 = vpack.c.b16 %v1040, %v1036
    %v1337 = vpack.c.b16 %v1041, %v1037
    %v1338 = vpack.c.b16 %v1042, %v1038
    %v1339 = vpack.c.b16 %v1047, %v1043
    %v1340 = vpack.c.b16 %v1048, %v1044
    %v1341 = vpack.c.b16 %v1049, %v1045
    %v1342 = vpack.c.b16 %v1050, %v1046
    %v1343 = vpack.c.b16 %v1055, %v1051
    %v1344 = vpack.c.b16 %v1056, %v1052
    %v1345 = vpack.c.b16 %v1057, %v1053
    %v1346 = vpack.c.b16 %v1058, %v1054
    %v1347 = vpack.c.b16 %v1063, %v1059
    %v1348 = vpack.c.b16 %v1064, %v1060
    %v1349 = vpack.c.b16 %v1065, %v1061
    %v1350 = vpack.c.b16 %v1066, %v1062
    %v1351 = vpack.c.b16 %v1071, %v1067
    %v1352 = vpack.c.b16 %v1072, %v1068
    %v1353 = vpack.c.b16 %v1073, %v1069
    %v1354 = vpack.c.b16 %v1074, %v1070
    %v1355 = vpack.c.b16 %v1079, %v1075
    %v1356 = vpack.c.b16 %v1080, %v1076
    %v1357 = vpack.c.b16 %v1081, %v1077
    %v1358 = vpack.c.b16 %v1082, %v1078
    %v1359 = vpack.c.b16 %v1087, %v1083
    %v1360 = vpack.c.b16 %v1088, %v1084
    %v1361 = vpack.c.b16 %v1089, %v1085
    %v1362 = vpack.c.b16 %v1090, %v1086
    %v1363 = vpack.c.b16 %v1095, %v1091
    %v1364 = vpack.c.b16 %v1096, %v1092
    %v1365 = vpack.c.b16 %v1097, %v1093
    %v1366 = vpack.c.b16 %v1098, %v1094
    %v1367 = vpack.c.b16 %v1103, %v1099
    %v1368 = vpack.c.b16 %v1104, %v1100
    %v1369 = vpack.c.b16 %v1105, %v1101
    %v1370 = vpack.c.b16 %v1106, %v1102
    %v1371 = vpack.c.b16 %v1111, %v1107
    %v1372 = vpack.c.b16 %v1112, %v1108
    %v1373 = vpack.c.b16 %v1113, %v1109
    %v1374 = vpack.c.b16 %v1114, %v1110
    %v1375 = vpack.c.b16 %v1119, %v1115
    %v1376 = vpack.c.b16 %v1120, %v1116
    %v1377 = vpack.c.b16 %v1121, %v1117
    %v1378 = vpack.c.b16 %v1122, %v1118
    %1635 = vmatprep.subr.bf16.mxu0 %v1152
    %1636 = vmatpush1.bf16.msra.mxu0 %v1151
    %1637 = vmatprep.subr.bf16.mxu0 %v1148
    %1638 = vmatpush1.bf16.msra.mxu0 %v1147
    %1639 = vmatprep.subr.bf16.mxu0 %v1144
    %1640 = vmatpush1.bf16.msra.mxu0 %v1143
    %1641 = vmatprep.subr.bf16.mxu0 %v1140
    %1642 = vmatpush1.bf16.msra.mxu0 %v1139
    %1643 = vmatprep.subr.bf16.mxu0 %v1136
    %1644 = vmatpush1.bf16.msra.mxu0 %v1135
    %1645 = vmatprep.subr.bf16.mxu0 %v1132
    %1646 = vmatpush1.bf16.msra.mxu0 %v1131
    %1647 = vmatprep.subr.bf16.mxu0 %v1128
    %1648 = vmatpush1.bf16.msra.mxu0 %v1127
    %1649 = vmatprep.subr.bf16.mxu0 %v1124
    %1650 = vmatpush1.bf16.msra.mxu0 %v1123
    %1651 = vmatprep.subr.bf16.mxu0 %v1184
    %1652 = vmatpush2.bf16.msra.mxu0 %v1183
    %1653 = vmatprep.subr.bf16.mxu0 %v1180
    %1654 = vmatpush2.bf16.msra.mxu0 %v1179
    %1655 = vmatprep.subr.bf16.mxu0 %v1176
    %1656 = vmatpush2.bf16.msra.mxu0 %v1175
    %1657 = vmatprep.subr.bf16.mxu0 %v1172
    %1658 = vmatpush2.bf16.msra.mxu0 %v1171
    %1659 = vmatprep.subr.bf16.mxu0 %v1168
    %1660 = vmatpush2.bf16.msra.mxu0 %v1167
    %1661 = vmatprep.subr.bf16.mxu0 %v1164
    %1662 = vmatpush2.bf16.msra.mxu0 %v1163
    %1663 = vmatprep.subr.bf16.mxu0 %v1160
    %1664 = vmatpush2.bf16.msra.mxu0 %v1159
    %1665 = vmatprep.subr.bf16.mxu0 %v1156
    %1666 = vmatpush2.bf16.msra.mxu0 %v1155
    %1667 = vmatprep.mubr.bf16.mxu0 %v335
    %1668 = vmatmul.mubr.bf16.gmra.mxu0 %v321
    %v1669 = vpop.f32.mrf.mxu0
    %v1670 = vadd.f32 0.0, %v1669
    %v1671 = vpop.f32.mrf.mxu0
    %v1672 = vadd.f32 0.0, %v1671
    %v1673 = vpop.f32.mrf.mxu0
    %v1674 = vpop.f32.mrf.mxu0
    %1675 = vdwg.mxu0
    %1676 = vmatprep.subr.bf16.mxu0 %v1216
    %1677 = vmatpush1.bf16.msra.mxu0 %v1215
    %1678 = vmatprep.subr.bf16.mxu0 %v1212
    %1679 = vmatpush1.bf16.msra.mxu0 %v1211
    %1680 = vmatprep.subr.bf16.mxu0 %v1208
    %1681 = vmatpush1.bf16.msra.mxu0 %v1207
    %1682 = vmatprep.subr.bf16.mxu0 %v1204
    %1683 = vmatpush1.bf16.msra.mxu0 %v1203
    %1684 = vmatprep.subr.bf16.mxu0 %v1200
    %1685 = vmatpush1.bf16.msra.mxu0 %v1199
    %1686 = vmatprep.subr.bf16.mxu0 %v1196
    %1687 = vmatpush1.bf16.msra.mxu0 %v1195
    %1688 = vmatprep.subr.bf16.mxu0 %v1192
    %1689 = vmatpush1.bf16.msra.mxu0 %v1191
    %1690 = vmatprep.subr.bf16.mxu0 %v1188
    %1691 = vmatpush1.bf16.msra.mxu0 %v1187
    %1692 = vmatprep.subr.bf16.mxu0 %v1248
    %1693 = vmatpush2.bf16.msra.mxu0 %v1247
    %1694 = vmatprep.subr.bf16.mxu0 %v1244
    %1695 = vmatpush2.bf16.msra.mxu0 %v1243
    %1696 = vmatprep.subr.bf16.mxu0 %v1240
    %1697 = vmatpush2.bf16.msra.mxu0 %v1239
    %1698 = vmatprep.subr.bf16.mxu0 %v1236
    %1699 = vmatpush2.bf16.msra.mxu0 %v1235
    %1700 = vmatprep.subr.bf16.mxu0 %v1232
    %1701 = vmatpush2.bf16.msra.mxu0 %v1231
    %1702 = vmatprep.subr.bf16.mxu0 %v1228
    %1703 = vmatpush2.bf16.msra.mxu0 %v1227
    %1704 = vmatprep.subr.bf16.mxu0 %v1224
    %1705 = vmatpush2.bf16.msra.mxu0 %v1223
    %1706 = vmatprep.subr.bf16.mxu0 %v1220
    %1707 = vmatpush2.bf16.msra.mxu0 %v1219
    %1708 = vmatprep.mubr.bf16.mxu0 %v345
    %1709 = vmatmul.mubr.bf16.gmra.mxu0 %v343
    %v1710 = vpop.f32.mrf.mxu0
    %v1711 = vadd.f32 %v1670, %v1710
    %v1712 = vpop.f32.mrf.mxu0
    %v1713 = vadd.f32 %v1672, %v1712
    %v1714 = vpop.f32.mrf.mxu0
    %v1715 = vpop.f32.mrf.mxu0
    %1716 = vdwg.mxu0
    %1717 = vmatprep.subr.bf16.mxu0 %v1280
    %1718 = vmatpush1.bf16.msra.mxu0 %v1279
    %1719 = vmatprep.subr.bf16.mxu0 %v1276
    %1720 = vmatpush1.bf16.msra.mxu0 %v1275
    %1721 = vmatprep.subr.bf16.mxu0 %v1272
    %1722 = vmatpush1.bf16.msra.mxu0 %v1271
    %1723 = vmatprep.subr.bf16.mxu0 %v1268
    %1724 = vmatpush1.bf16.msra.mxu0 %v1267
    %1725 = vmatprep.subr.bf16.mxu0 %v1264
    %1726 = vmatpush1.bf16.msra.mxu0 %v1263
    %1727 = vmatprep.subr.bf16.mxu0 %v1260
    %1728 = vmatpush1.bf16.msra.mxu0 %v1259
    %1729 = vmatprep.subr.bf16.mxu0 %v1256
    %1730 = vmatpush1.bf16.msra.mxu0 %v1255
    %1731 = vmatprep.subr.bf16.mxu0 %v1252
    %1732 = vmatpush1.bf16.msra.mxu0 %v1251
    %1733 = vmatprep.subr.bf16.mxu0 %v1312
    %1734 = vmatpush2.bf16.msra.mxu0 %v1311
    %1735 = vmatprep.subr.bf16.mxu0 %v1308
    %1736 = vmatpush2.bf16.msra.mxu0 %v1307
    %1737 = vmatprep.subr.bf16.mxu0 %v1304
    %1738 = vmatpush2.bf16.msra.mxu0 %v1303
    %1739 = vmatprep.subr.bf16.mxu0 %v1300
    %1740 = vmatpush2.bf16.msra.mxu0 %v1299
    %1741 = vmatprep.subr.bf16.mxu0 %v1296
    %1742 = vmatpush2.bf16.msra.mxu0 %v1295
    %1743 = vmatprep.subr.bf16.mxu0 %v1292
    %1744 = vmatpush2.bf16.msra.mxu0 %v1291
    %1745 = vmatprep.subr.bf16.mxu0 %v1288
    %1746 = vmatpush2.bf16.msra.mxu0 %v1287
    %1747 = vmatprep.subr.bf16.mxu0 %v1284
    %1748 = vmatpush2.bf16.msra.mxu0 %v1283
    %1749 = vmatprep.mubr.bf16.mxu0 %v342
    %1750 = vmatmul.mubr.bf16.gmra.mxu0 %v328
    %v1751 = vpop.f32.mrf.mxu0
    %v1752 = vadd.f32 %v1711, %v1751
    %v1753 = vpop.f32.mrf.mxu0
    %v1754 = vadd.f32 %v1713, %v1753
    %v1755 = vpop.f32.mrf.mxu0
    %v1756 = vpop.f32.mrf.mxu0
    %1757 = vdwg.mxu0
    %1758 = vmatprep.subr.bf16.mxu0 %v1344
    %1759 = vmatpush1.bf16.msra.mxu0 %v1343
    %1760 = vmatprep.subr.bf16.mxu0 %v1340
    %1761 = vmatpush1.bf16.msra.mxu0 %v1339
    %1762 = vmatprep.subr.bf16.mxu0 %v1336
    %1763 = vmatpush1.bf16.msra.mxu0 %v1335
    %1764 = vmatprep.subr.bf16.mxu0 %v1332
    %1765 = vmatpush1.bf16.msra.mxu0 %v1331
    %1766 = vmatprep.subr.bf16.mxu0 %v1328
    %1767 = vmatpush1.bf16.msra.mxu0 %v1327
    %1768 = vmatprep.subr.bf16.mxu0 %v1324
    %1769 = vmatpush1.bf16.msra.mxu0 %v1323
    %1770 = vmatprep.subr.bf16.mxu0 %v1320
    %1771 = vmatpush1.bf16.msra.mxu0 %v1319
    %1772 = vmatprep.subr.bf16.mxu0 %v1316
    %1773 = vmatpush1.bf16.msra.mxu0 %v1315
    %1774 = vmatprep.subr.bf16.mxu0 %v1376
    %1775 = vmatpush2.bf16.msra.mxu0 %v1375
    %1776 = vmatprep.subr.bf16.mxu0 %v1372
    %1777 = vmatpush2.bf16.msra.mxu0 %v1371
    %1778 = vmatprep.subr.bf16.mxu0 %v1368
    %1779 = vmatpush2.bf16.msra.mxu0 %v1367
    %1780 = vmatprep.subr.bf16.mxu0 %v1364
    %1781 = vmatpush2.bf16.msra.mxu0 %v1363
    %1782 = vmatprep.subr.bf16.mxu0 %v1360
    %1783 = vmatpush2.bf16.msra.mxu0 %v1359
    %1784 = vmatprep.subr.bf16.mxu0 %v1356
    %1785 = vmatpush2.bf16.msra.mxu0 %v1355
    %1786 = vmatprep.subr.bf16.mxu0 %v1352
    %1787 = vmatpush2.bf16.msra.mxu0 %v1351
    %1788 = vmatprep.subr.bf16.mxu0 %v1348
    %1789 = vmatpush2.bf16.msra.mxu0 %v1347
    %1790 = vmatprep.mubr.bf16.mxu0 %v346
    %1791 = vmatmul.mubr.bf16.gmra.mxu0 %v344
    %v1792 = vpop.f32.mrf.mxu0
    %v1793 = vadd.f32 %v1752, %v1792
    %v1794 = vpop.f32.mrf.mxu0
    %v1795 = vadd.f32 %v1754, %v1794
    %v1796 = vpop.f32.mrf.mxu0
    %v1797 = vpop.f32.mrf.mxu0
    %1798 = vdwg.mxu0
    %1799 = vmatprep.subr.bf16.mxu0 %v1154
    %1800 = vmatpush1.bf16.msra.mxu0 %v1153
    %1801 = vmatprep.subr.bf16.mxu0 %v1150
    %1802 = vmatpush1.bf16.msra.mxu0 %v1149
    %1803 = vmatprep.subr.bf16.mxu0 %v1146
    %1804 = vmatpush1.bf16.msra.mxu0 %v1145
    %1805 = vmatprep.subr.bf16.mxu0 %v1142
    %1806 = vmatpush1.bf16.msra.mxu0 %v1141
    %1807 = vmatprep.subr.bf16.mxu0 %v1138
    %1808 = vmatpush1.bf16.msra.mxu0 %v1137
    %1809 = vmatprep.subr.bf16.mxu0 %v1134
    %1810 = vmatpush1.bf16.msra.mxu0 %v1133
    %1811 = vmatprep.subr.bf16.mxu0 %v1130
    %1812 = vmatpush1.bf16.msra.mxu0 %v1129
    %1813 = vmatprep.subr.bf16.mxu0 %v1126
    %1814 = vmatpush1.bf16.msra.mxu0 %v1125
    %1815 = vmatprep.subr.bf16.mxu0 %v1186
    %1816 = vmatpush2.bf16.msra.mxu0 %v1185
    %1817 = vmatprep.subr.bf16.mxu0 %v1182
    %1818 = vmatpush2.bf16.msra.mxu0 %v1181
    %1819 = vmatprep.subr.bf16.mxu0 %v1178
    %1820 = vmatpush2.bf16.msra.mxu0 %v1177
    %1821 = vmatprep.subr.bf16.mxu0 %v1174
    %1822 = vmatpush2.bf16.msra.mxu0 %v1173
    %1823 = vmatprep.subr.bf16.mxu0 %v1170
    %1824 = vmatpush2.bf16.msra.mxu0 %v1169
    %1825 = vmatprep.subr.bf16.mxu0 %v1166
    %1826 = vmatpush2.bf16.msra.mxu0 %v1165
    %1827 = vmatprep.subr.bf16.mxu0 %v1162
    %1828 = vmatpush2.bf16.msra.mxu0 %v1161
    %1829 = vmatprep.subr.bf16.mxu0 %v1158
    %1830 = vmatpush2.bf16.msra.mxu0 %v1157
    %1831 = vmatprep.mubr.bf16.mxu0 %v335
    %1832 = vmatmul.mubr.bf16.gmra.mxu0 %v321
    %v1833 = vpop.f32.mrf.mxu0
    %v1834 = vadd.f32 0.0, %v1833
    %v1835 = vpop.f32.mrf.mxu0
    %v1836 = vadd.f32 0.0, %v1835
    %v1837 = vpop.f32.mrf.mxu0
    %v1838 = vpop.f32.mrf.mxu0
    %1839 = vdwg.mxu0
    %1840 = vmatprep.subr.bf16.mxu0 %v1218
    %1841 = vmatpush1.bf16.msra.mxu0 %v1217
    %1842 = vmatprep.subr.bf16.mxu0 %v1214
    %1843 = vmatpush1.bf16.msra.mxu0 %v1213
    %1844 = vmatprep.subr.bf16.mxu0 %v1210
    %1845 = vmatpush1.bf16.msra.mxu0 %v1209
    %1846 = vmatprep.subr.bf16.mxu0 %v1206
    %1847 = vmatpush1.bf16.msra.mxu0 %v1205
    %1848 = vmatprep.subr.bf16.mxu0 %v1202
    %1849 = vmatpush1.bf16.msra.mxu0 %v1201
    %1850 = vmatprep.subr.bf16.mxu0 %v1198
    %1851 = vmatpush1.bf16.msra.mxu0 %v1197
    %1852 = vmatprep.subr.bf16.mxu0 %v1194
    %1853 = vmatpush1.bf16.msra.mxu0 %v1193
    %1854 = vmatprep.subr.bf16.mxu0 %v1190
    %1855 = vmatpush1.bf16.msra.mxu0 %v1189
    %1856 = vmatprep.subr.bf16.mxu0 %v1250
    %1857 = vmatpush2.bf16.msra.mxu0 %v1249
    %1858 = vmatprep.subr.bf16.mxu0 %v1246
    %1859 = vmatpush2.bf16.msra.mxu0 %v1245
    %1860 = vmatprep.subr.bf16.mxu0 %v1242
    %1861 = vmatpush2.bf16.msra.mxu0 %v1241
    %1862 = vmatprep.subr.bf16.mxu0 %v1238
    %1863 = vmatpush2.bf16.msra.mxu0 %v1237
    %1864 = vmatprep.subr.bf16.mxu0 %v1234
    %1865 = vmatpush2.bf16.msra.mxu0 %v1233
    %1866 = vmatprep.subr.bf16.mxu0 %v1230
    %1867 = vmatpush2.bf16.msra.mxu0 %v1229
    %1868 = vmatprep.subr.bf16.mxu0 %v1226
    %1869 = vmatpush2.bf16.msra.mxu0 %v1225
    %1870 = vmatprep.subr.bf16.mxu0 %v1222
    %1871 = vmatpush2.bf16.msra.mxu0 %v1221
    %1872 = vmatprep.mubr.bf16.mxu0 %v345
    %1873 = vmatmul.mubr.bf16.gmra.mxu0 %v343
    %v1874 = vpop.f32.mrf.mxu0
    %v1875 = vadd.f32 %v1834, %v1874
    %v1876 = vpop.f32.mrf.mxu0
    %v1877 = vadd.f32 %v1836, %v1876
    %v1878 = vpop.f32.mrf.mxu0
    %v1879 = vpop.f32.mrf.mxu0
    %1880 = vdwg.mxu0
    %1881 = vmatprep.subr.bf16.mxu0 %v1282
    %1882 = vmatpush1.bf16.msra.mxu0 %v1281
    %1883 = vmatprep.subr.bf16.mxu0 %v1278
    %1884 = vmatpush1.bf16.msra.mxu0 %v1277
    %1885 = vmatprep.subr.bf16.mxu0 %v1274
    %1886 = vmatpush1.bf16.msra.mxu0 %v1273
    %1887 = vmatprep.subr.bf16.mxu0 %v1270
    %1888 = vmatpush1.bf16.msra.mxu0 %v1269
    %1889 = vmatprep.subr.bf16.mxu0 %v1266
    %1890 = vmatpush1.bf16.msra.mxu0 %v1265
    %1891 = vmatprep.subr.bf16.mxu0 %v1262
    %1892 = vmatpush1.bf16.msra.mxu0 %v1261
    %1893 = vmatprep.subr.bf16.mxu0 %v1258
    %1894 = vmatpush1.bf16.msra.mxu0 %v1257
    %1895 = vmatprep.subr.bf16.mxu0 %v1254
    %1896 = vmatpush1.bf16.msra.mxu0 %v1253
    %1897 = vmatprep.subr.bf16.mxu0 %v1314
    %1898 = vmatpush2.bf16.msra.mxu0 %v1313
    %1899 = vmatprep.subr.bf16.mxu0 %v1310
    %1900 = vmatpush2.bf16.msra.mxu0 %v1309
    %1901 = vmatprep.subr.bf16.mxu0 %v1306
    %1902 = vmatpush2.bf16.msra.mxu0 %v1305
    %1903 = vmatprep.subr.bf16.mxu0 %v1302
    %1904 = vmatpush2.bf16.msra.mxu0 %v1301
    %1905 = vmatprep.subr.bf16.mxu0 %v1298
    %1906 = vmatpush2.bf16.msra.mxu0 %v1297
    %1907 = vmatprep.subr.bf16.mxu0 %v1294
    %1908 = vmatpush2.bf16.msra.mxu0 %v1293
    %1909 = vmatprep.subr.bf16.mxu0 %v1290
    %1910 = vmatpush2.bf16.msra.mxu0 %v1289
    %1911 = vmatprep.subr.bf16.mxu0 %v1286
    %1912 = vmatpush2.bf16.msra.mxu0 %v1285
    %1913 = vmatprep.mubr.bf16.mxu0 %v342
    %1914 = vmatmul.mubr.bf16.gmra.mxu0 %v328
    %v1915 = vpop.f32.mrf.mxu0
    %v1916 = vadd.f32 %v1875, %v1915
    %v1917 = vpop.f32.mrf.mxu0
    %v1918 = vadd.f32 %v1877, %v1917
    %v1919 = vpop.f32.mrf.mxu0
    %v1920 = vpop.f32.mrf.mxu0
    %1921 = vdwg.mxu0
    %1922 = vmatprep.subr.bf16.mxu0 %v1346
    %1923 = vmatpush1.bf16.msra.mxu0 %v1345
    %1924 = vmatprep.subr.bf16.mxu0 %v1342
    %1925 = vmatpush1.bf16.msra.mxu0 %v1341
    %1926 = vmatprep.subr.bf16.mxu0 %v1338
    %1927 = vmatpush1.bf16.msra.mxu0 %v1337
    %1928 = vmatprep.subr.bf16.mxu0 %v1334
    %1929 = vmatpush1.bf16.msra.mxu0 %v1333
    %1930 = vmatprep.subr.bf16.mxu0 %v1330
    %1931 = vmatpush1.bf16.msra.mxu0 %v1329
    %1932 = vmatprep.subr.bf16.mxu0 %v1326
    %1933 = vmatpush1.bf16.msra.mxu0 %v1325
    %1934 = vmatprep.subr.bf16.mxu0 %v1322
    %1935 = vmatpush1.bf16.msra.mxu0 %v1321
    %1936 = vmatprep.subr.bf16.mxu0 %v1318
    %1937 = vmatpush1.bf16.msra.mxu0 %v1317
    %1938 = vmatprep.subr.bf16.mxu0 %v1378
    %1939 = vmatpush2.bf16.msra.mxu0 %v1377
    %1940 = vmatprep.subr.bf16.mxu0 %v1374
    %1941 = vmatpush2.bf16.msra.mxu0 %v1373
    %1942 = vmatprep.subr.bf16.mxu0 %v1370
    %1943 = vmatpush2.bf16.msra.mxu0 %v1369
    %1944 = vmatprep.subr.bf16.mxu0 %v1366
    %1945 = vmatpush2.bf16.msra.mxu0 %v1365
    %1946 = vmatprep.subr.bf16.mxu0 %v1362
    %1947 = vmatpush2.bf16.msra.mxu0 %v1361
    %1948 = vmatprep.subr.bf16.mxu0 %v1358
    %1949 = vmatpush2.bf16.msra.mxu0 %v1357
    %1950 = vmatprep.subr.bf16.mxu0 %v1354
    %1951 = vmatpush2.bf16.msra.mxu0 %v1353
    %1952 = vmatprep.subr.bf16.mxu0 %v1350
    %1953 = vmatpush2.bf16.msra.mxu0 %v1349
    %1954 = vmatprep.mubr.bf16.mxu0 %v346
    %1955 = vmatmul.mubr.bf16.gmra.mxu0 %v344
    %v1956 = vpop.f32.mrf.mxu0
    %v1957 = vadd.f32 %v1916, %v1956
    %v1958 = vpop.f32.mrf.mxu0
    %v1959 = vadd.f32 %v1918, %v1958
    %v1960 = vpop.f32.mrf.mxu0
    %v1961 = vpop.f32.mrf.mxu0
    %1962 = vdwg.mxu0
    %v1963 = vld [vmem:[%s2] sm:$0xf]
    %v1965 = vlaneseq
    %v1966 = vshrl.u32 %v1965, 7
    %v1967 = vsub.s32 0, %v1966
    %v1968 = vrot.slane %v1963, %v1967
    %v1969 = vlaneseq
    %v1970 = vshrl.u32 %v1969, 7
    %v1971 = vsub.s32 1, %v1970
    %v1972 = vrot.slane %v1963, %v1971
    %v1973 = vlaneseq
    %v1974 = vshrl.u32 %v1973, 7
    %v1975 = vsub.s32 2, %v1974
    %v1976 = vrot.slane %v1963, %v1975
    %v1977 = vlaneseq
    %v1978 = vshrl.u32 %v1977, 7
    %v1979 = vsub.s32 3, %v1978
    %v1980 = vrot.slane %v1963, %v1979
    %v1985 = vmul.f32 %v1793, %v1968
    %v1986 = vmul.f32 %v1795, %v1972
    %v1987 = vmul.f32 %v1957, %v1976
    %v1988 = vmul.f32 %v1959, %v1980
    %v1989 = vld [vmem:[%s3] sm:$0xf]
    %v1991 = vlaneseq
    %v1992 = vshrl.u32 %v1991, 7
    %v1993 = vsub.s32 0, %v1992
    %v1994 = vrot.slane %v1989, %v1993
    %v1995 = vlaneseq
    %v1996 = vshrl.u32 %v1995, 7
    %v1997 = vsub.s32 1, %v1996
    %v1998 = vrot.slane %v1989, %v1997
    %v1999 = vlaneseq
    %v2000 = vshrl.u32 %v1999, 7
    %v2001 = vsub.s32 2, %v2000
    %v2002 = vrot.slane %v1989, %v2001
    %v2003 = vlaneseq
    %v2004 = vshrl.u32 %v2003, 7
    %v2005 = vsub.s32 3, %v2004
    %v2006 = vrot.slane %v1989, %v2005
    %v2011 = vadd.f32 %v1985, %v1994
    %v2012 = vadd.f32 %v1986, %v1998
    %v2013 = vadd.f32 %v1987, %v2002
    %v2014 = vadd.f32 %v1988, %v2006
    %vm2015 = vcmp.gt.f32.partialorder %v2011, 0.0
    %vm2016 = vcmp.gt.f32.partialorder %v2012, 0.0
    %vm2017 = vcmp.gt.f32.partialorder %v2013, 0.0
    %vm2018 = vcmp.gt.f32.partialorder %v2014, 0.0
    %v2019 = vmul.f32 %v2011, 0.2
    %v2020 = vmul.f32 %v2012, 0.2
    %v2021 = vmul.f32 %v2013, 0.2
    %v2022 = vmul.f32 %v2014, 0.2
    %v2023 = vsel %vm2015, %v2011, %v2019
    %v2024 = vsel %vm2016, %v2012, %v2020
    %v2025 = vsel %vm2017, %v2013, %v2021
    %v2026 = vsel %vm2018, %v2014, %v2022
    %v2027 = vpack.c.bf16 %v2023, %v2023
    %v2028 = vpack.c.bf16 %v2024, %v2024
    %v2029 = vpack.c.bf16 %v2025, %v2025
    %v2030 = vpack.c.bf16 %v2026, %v2026
    %v2031 = vld [vmem:[%s4] sm:$0xff]
    %v2032 = vld [vmem:[%s4 + $0x8] sm:$0xff]
    %v2033 = vld [vmem:[%s4 + $0x10] sm:$0xff]
    %v2034 = vld [vmem:[%s4 + $0x18] sm:$0xff]
    %v2035 = vld [vmem:[%s4 + $0x20] sm:$0xff]
    %v2036 = vld [vmem:[%s4 + $0x28] sm:$0xff]
    %v2037 = vld [vmem:[%s4 + $0x30] sm:$0xff]
    %v2038 = vld [vmem:[%s4 + $0x38] sm:$0xff]
    %v2039 = vld [vmem:[%s4 + $0x40] sm:$0xff]
    %v2040 = vld [vmem:[%s4 + $0x48] sm:$0xff]
    %v2041 = vld [vmem:[%s4 + $0x50] sm:$0xff]
    %v2042 = vld [vmem:[%s4 + $0x58] sm:$0xff]
    %v2043 = vld [vmem:[%s4 + $0x60] sm:$0xff]
    %v2044 = vld [vmem:[%s4 + $0x68] sm:$0xff]
    %v2045 = vld [vmem:[%s4 + $0x70] sm:$0xff]
    %v2046 = vld [vmem:[%s4 + $0x78] sm:$0xff]
    %v2047 = vld [vmem:[%s4 + $0x80] sm:$0xff]
    %v2048 = vld [vmem:[%s4 + $0x88] sm:$0xff]
    %v2049 = vld [vmem:[%s4 + $0x90] sm:$0xff]
    %v2050 = vld [vmem:[%s4 + $0x98] sm:$0xff]
    %v2051 = vld [vmem:[%s4 + $0xa0] sm:$0xff]
    %v2052 = vld [vmem:[%s4 + $0xa8] sm:$0xff]
    %v2053 = vld [vmem:[%s4 + $0xb0] sm:$0xff]
    %v2054 = vld [vmem:[%s4 + $0xb8] sm:$0xff]
    %v2055 = vld [vmem:[%s4 + $0xc0] sm:$0xff]
    %v2056 = vld [vmem:[%s4 + $0xc8] sm:$0xff]
    %v2057 = vld [vmem:[%s4 + $0xd0] sm:$0xff]
    %v2058 = vld [vmem:[%s4 + $0xd8] sm:$0xff]
    %v2059 = vld [vmem:[%s4 + $0xe0] sm:$0xff]
    %v2060 = vld [vmem:[%s4 + $0xe8] sm:$0xff]
    %v2061 = vld [vmem:[%s4 + $0xf0] sm:$0xff]
    %v2062 = vld [vmem:[%s4 + $0xf8] sm:$0xff]
    %v2063 = vld [vmem:[%s4 + $0x100] sm:$0xff]
    %v2064 = vld [vmem:[%s4 + $0x108] sm:$0xff]
    %v2065 = vld [vmem:[%s4 + $0x110] sm:$0xff]
    %v2066 = vld [vmem:[%s4 + $0x118] sm:$0xff]
    %v2067 = vld [vmem:[%s4 + $0x120] sm:$0xff]
    %v2068 = vld [vmem:[%s4 + $0x128] sm:$0xff]
    %v2069 = vld [vmem:[%s4 + $0x130] sm:$0xff]
    %v2070 = vld [vmem:[%s4 + $0x138] sm:$0xff]
    %v2071 = vld [vmem:[%s4 + $0x140] sm:$0xff]
    %v2072 = vld [vmem:[%s4 + $0x148] sm:$0xff]
    %v2073 = vld [vmem:[%s4 + $0x150] sm:$0xff]
    %v2074 = vld [vmem:[%s4 + $0x158] sm:$0xff]
    %v2075 = vld [vmem:[%s4 + $0x160] sm:$0xff]
    %v2076 = vld [vmem:[%s4 + $0x168] sm:$0xff]
    %v2077 = vld [vmem:[%s4 + $0x170] sm:$0xff]
    %v2078 = vld [vmem:[%s4 + $0x178] sm:$0xff]
    %v2079 = vld [vmem:[%s4 + $0x180] sm:$0xff]
    %v2080 = vld [vmem:[%s4 + $0x188] sm:$0xff]
    %v2081 = vld [vmem:[%s4 + $0x190] sm:$0xff]
    %v2082 = vld [vmem:[%s4 + $0x198] sm:$0xff]
    %v2083 = vld [vmem:[%s4 + $0x1a0] sm:$0xff]
    %v2084 = vld [vmem:[%s4 + $0x1a8] sm:$0xff]
    %v2085 = vld [vmem:[%s4 + $0x1b0] sm:$0xff]
    %v2086 = vld [vmem:[%s4 + $0x1b8] sm:$0xff]
    %v2087 = vld [vmem:[%s4 + $0x1c0] sm:$0xff]
    %v2088 = vld [vmem:[%s4 + $0x1c8] sm:$0xff]
    %v2089 = vld [vmem:[%s4 + $0x1d0] sm:$0xff]
    %v2090 = vld [vmem:[%s4 + $0x1d8] sm:$0xff]
    %v2091 = vld [vmem:[%s4 + $0x1e0] sm:$0xff]
    %v2092 = vld [vmem:[%s4 + $0x1e8] sm:$0xff]
    %v2093 = vld [vmem:[%s4 + $0x1f0] sm:$0xff]
    %v2094 = vld [vmem:[%s4 + $0x1f8] sm:$0xff]
    %v2159 = vunpack.c.l.b16 %v2031
    %v2160 = vunpack.c.h.b16 %v2031
    %v2161 = vunpack.c.l.b16 %v2032
    %v2162 = vunpack.c.h.b16 %v2032
    %v2163 = vunpack.c.l.b16 %v2033
    %v2164 = vunpack.c.h.b16 %v2033
    %v2165 = vunpack.c.l.b16 %v2034
    %v2166 = vunpack.c.h.b16 %v2034
    %v2167 = vunpack.c.l.b16 %v2035
    %v2168 = vunpack.c.h.b16 %v2035
    %v2169 = vunpack.c.l.b16 %v2036
    %v2170 = vunpack.c.h.b16 %v2036
    %v2171 = vunpack.c.l.b16 %v2037
    %v2172 = vunpack.c.h.b16 %v2037
    %v2173 = vunpack.c.l.b16 %v2038
    %v2174 = vunpack.c.h.b16 %v2038
    %v2175 = vunpack.c.l.b16 %v2039
    %v2176 = vunpack.c.h.b16 %v2039
    %v2177 = vunpack.c.l.b16 %v2040
    %v2178 = vunpack.c.h.b16 %v2040
    %v2179 = vunpack.c.l.b16 %v2041
    %v2180 = vunpack.c.h.b16 %v2041
    %v2181 = vunpack.c.l.b16 %v2042
    %v2182 = vunpack.c.h.b16 %v2042
    %v2183 = vunpack.c.l.b16 %v2043
    %v2184 = vunpack.c.h.b16 %v2043
    %v2185 = vunpack.c.l.b16 %v2044
    %v2186 = vunpack.c.h.b16 %v2044
    %v2187 = vunpack.c.l.b16 %v2045
    %v2188 = vunpack.c.h.b16 %v2045
    %v2189 = vunpack.c.l.b16 %v2046
    %v2190 = vunpack.c.h.b16 %v2046
    %v2191 = vunpack.c.l.b16 %v2047
    %v2192 = vunpack.c.h.b16 %v2047
    %v2193 = vunpack.c.l.b16 %v2048
    %v2194 = vunpack.c.h.b16 %v2048
    %v2195 = vunpack.c.l.b16 %v2049
    %v2196 = vunpack.c.h.b16 %v2049
    %v2197 = vunpack.c.l.b16 %v2050
    %v2198 = vunpack.c.h.b16 %v2050
    %v2199 = vunpack.c.l.b16 %v2051
    %v2200 = vunpack.c.h.b16 %v2051
    %v2201 = vunpack.c.l.b16 %v2052
    %v2202 = vunpack.c.h.b16 %v2052
    %v2203 = vunpack.c.l.b16 %v2053
    %v2204 = vunpack.c.h.b16 %v2053
    %v2205 = vunpack.c.l.b16 %v2054
    %v2206 = vunpack.c.h.b16 %v2054
    %v2207 = vunpack.c.l.b16 %v2055
    %v2208 = vunpack.c.h.b16 %v2055
    %v2209 = vunpack.c.l.b16 %v2056
    %v2210 = vunpack.c.h.b16 %v2056
    %v2211 = vunpack.c.l.b16 %v2057
    %v2212 = vunpack.c.h.b16 %v2057
    %v2213 = vunpack.c.l.b16 %v2058
    %v2214 = vunpack.c.h.b16 %v2058
    %v2215 = vunpack.c.l.b16 %v2059
    %v2216 = vunpack.c.h.b16 %v2059
    %v2217 = vunpack.c.l.b16 %v2060
    %v2218 = vunpack.c.h.b16 %v2060
    %v2219 = vunpack.c.l.b16 %v2061
    %v2220 = vunpack.c.h.b16 %v2061
    %v2221 = vunpack.c.l.b16 %v2062
    %v2222 = vunpack.c.h.b16 %v2062
    %v2223 = vunpack.c.l.b16 %v2063
    %v2224 = vunpack.c.h.b16 %v2063
    %v2225 = vunpack.c.l.b16 %v2064
    %v2226 = vunpack.c.h.b16 %v2064
    %v2227 = vunpack.c.l.b16 %v2065
    %v2228 = vunpack.c.h.b16 %v2065
    %v2229 = vunpack.c.l.b16 %v2066
    %v2230 = vunpack.c.h.b16 %v2066
    %v2231 = vunpack.c.l.b16 %v2067
    %v2232 = vunpack.c.h.b16 %v2067
    %v2233 = vunpack.c.l.b16 %v2068
    %v2234 = vunpack.c.h.b16 %v2068
    %v2235 = vunpack.c.l.b16 %v2069
    %v2236 = vunpack.c.h.b16 %v2069
    %v2237 = vunpack.c.l.b16 %v2070
    %v2238 = vunpack.c.h.b16 %v2070
    %v2239 = vunpack.c.l.b16 %v2071
    %v2240 = vunpack.c.h.b16 %v2071
    %v2241 = vunpack.c.l.b16 %v2072
    %v2242 = vunpack.c.h.b16 %v2072
    %v2243 = vunpack.c.l.b16 %v2073
    %v2244 = vunpack.c.h.b16 %v2073
    %v2245 = vunpack.c.l.b16 %v2074
    %v2246 = vunpack.c.h.b16 %v2074
    %v2247 = vunpack.c.l.b16 %v2075
    %v2248 = vunpack.c.h.b16 %v2075
    %v2249 = vunpack.c.l.b16 %v2076
    %v2250 = vunpack.c.h.b16 %v2076
    %v2251 = vunpack.c.l.b16 %v2077
    %v2252 = vunpack.c.h.b16 %v2077
    %v2253 = vunpack.c.l.b16 %v2078
    %v2254 = vunpack.c.h.b16 %v2078
    %v2255 = vunpack.c.l.b16 %v2079
    %v2256 = vunpack.c.h.b16 %v2079
    %v2257 = vunpack.c.l.b16 %v2080
    %v2258 = vunpack.c.h.b16 %v2080
    %v2259 = vunpack.c.l.b16 %v2081
    %v2260 = vunpack.c.h.b16 %v2081
    %v2261 = vunpack.c.l.b16 %v2082
    %v2262 = vunpack.c.h.b16 %v2082
    %v2263 = vunpack.c.l.b16 %v2083
    %v2264 = vunpack.c.h.b16 %v2083
    %v2265 = vunpack.c.l.b16 %v2084
    %v2266 = vunpack.c.h.b16 %v2084
    %v2267 = vunpack.c.l.b16 %v2085
    %v2268 = vunpack.c.h.b16 %v2085
    %v2269 = vunpack.c.l.b16 %v2086
    %v2270 = vunpack.c.h.b16 %v2086
    %v2271 = vunpack.c.l.b16 %v2087
    %v2272 = vunpack.c.h.b16 %v2087
    %v2273 = vunpack.c.l.b16 %v2088
    %v2274 = vunpack.c.h.b16 %v2088
    %v2275 = vunpack.c.l.b16 %v2089
    %v2276 = vunpack.c.h.b16 %v2089
    %v2277 = vunpack.c.l.b16 %v2090
    %v2278 = vunpack.c.h.b16 %v2090
    %v2279 = vunpack.c.l.b16 %v2091
    %v2280 = vunpack.c.h.b16 %v2091
    %v2281 = vunpack.c.l.b16 %v2092
    %v2282 = vunpack.c.h.b16 %v2092
    %v2283 = vunpack.c.l.b16 %v2093
    %v2284 = vunpack.c.h.b16 %v2093
    %v2285 = vunpack.c.l.b16 %v2094
    %v2286 = vunpack.c.h.b16 %v2094
    %v2287 = vpack.c.b16 %v2161, %v2159
    %v2288 = vpack.c.b16 %v2162, %v2160
    %v2289 = vpack.c.b16 %v2165, %v2163
    %v2290 = vpack.c.b16 %v2166, %v2164
    %v2291 = vpack.c.b16 %v2169, %v2167
    %v2292 = vpack.c.b16 %v2170, %v2168
    %v2293 = vpack.c.b16 %v2173, %v2171
    %v2294 = vpack.c.b16 %v2174, %v2172
    %v2295 = vpack.c.b16 %v2177, %v2175
    %v2296 = vpack.c.b16 %v2178, %v2176
    %v2297 = vpack.c.b16 %v2181, %v2179
    %v2298 = vpack.c.b16 %v2182, %v2180
    %v2299 = vpack.c.b16 %v2185, %v2183
    %v2300 = vpack.c.b16 %v2186, %v2184
    %v2301 = vpack.c.b16 %v2189, %v2187
    %v2302 = vpack.c.b16 %v2190, %v2188
    %v2303 = vpack.c.b16 %v2193, %v2191
    %v2304 = vpack.c.b16 %v2194, %v2192
    %v2305 = vpack.c.b16 %v2197, %v2195
    %v2306 = vpack.c.b16 %v2198, %v2196
    %v2307 = vpack.c.b16 %v2201, %v2199
    %v2308 = vpack.c.b16 %v2202, %v2200
    %v2309 = vpack.c.b16 %v2205, %v2203
    %v2310 = vpack.c.b16 %v2206, %v2204
    %v2311 = vpack.c.b16 %v2209, %v2207
    %v2312 = vpack.c.b16 %v2210, %v2208
    %v2313 = vpack.c.b16 %v2213, %v2211
    %v2314 = vpack.c.b16 %v2214, %v2212
    %v2315 = vpack.c.b16 %v2217, %v2215
    %v2316 = vpack.c.b16 %v2218, %v2216
    %v2317 = vpack.c.b16 %v2221, %v2219
    %v2318 = vpack.c.b16 %v2222, %v2220
    %v2319 = vpack.c.b16 %v2225, %v2223
    %v2320 = vpack.c.b16 %v2226, %v2224
    %v2321 = vpack.c.b16 %v2229, %v2227
    %v2322 = vpack.c.b16 %v2230, %v2228
    %v2323 = vpack.c.b16 %v2233, %v2231
    %v2324 = vpack.c.b16 %v2234, %v2232
    %v2325 = vpack.c.b16 %v2237, %v2235
    %v2326 = vpack.c.b16 %v2238, %v2236
    %v2327 = vpack.c.b16 %v2241, %v2239
    %v2328 = vpack.c.b16 %v2242, %v2240
    %v2329 = vpack.c.b16 %v2245, %v2243
    %v2330 = vpack.c.b16 %v2246, %v2244
    %v2331 = vpack.c.b16 %v2249, %v2247
    %v2332 = vpack.c.b16 %v2250, %v2248
    %v2333 = vpack.c.b16 %v2253, %v2251
    %v2334 = vpack.c.b16 %v2254, %v2252
    %v2335 = vpack.c.b16 %v2257, %v2255
    %v2336 = vpack.c.b16 %v2258, %v2256
    %v2337 = vpack.c.b16 %v2261, %v2259
    %v2338 = vpack.c.b16 %v2262, %v2260
    %v2339 = vpack.c.b16 %v2265, %v2263
    %v2340 = vpack.c.b16 %v2266, %v2264
    %v2341 = vpack.c.b16 %v2269, %v2267
    %v2342 = vpack.c.b16 %v2270, %v2268
    %v2343 = vpack.c.b16 %v2273, %v2271
    %v2344 = vpack.c.b16 %v2274, %v2272
    %v2345 = vpack.c.b16 %v2277, %v2275
    %v2346 = vpack.c.b16 %v2278, %v2276
    %v2347 = vpack.c.b16 %v2281, %v2279
    %v2348 = vpack.c.b16 %v2282, %v2280
    %v2349 = vpack.c.b16 %v2285, %v2283
    %v2350 = vpack.c.b16 %v2286, %v2284
    %2415 = vmatprep.subr.bf16.mxu0 %v2302
    %2416 = vmatpush1.bf16.msra.mxu0 %v2301
    %2417 = vmatprep.subr.bf16.mxu0 %v2300
    %2418 = vmatpush1.bf16.msra.mxu0 %v2299
    %2419 = vmatprep.subr.bf16.mxu0 %v2298
    %2420 = vmatpush1.bf16.msra.mxu0 %v2297
    %2421 = vmatprep.subr.bf16.mxu0 %v2296
    %2422 = vmatpush1.bf16.msra.mxu0 %v2295
    %2423 = vmatprep.subr.bf16.mxu0 %v2294
    %2424 = vmatpush1.bf16.msra.mxu0 %v2293
    %2425 = vmatprep.subr.bf16.mxu0 %v2292
    %2426 = vmatpush1.bf16.msra.mxu0 %v2291
    %2427 = vmatprep.subr.bf16.mxu0 %v2290
    %2428 = vmatpush1.bf16.msra.mxu0 %v2289
    %2429 = vmatprep.subr.bf16.mxu0 %v2288
    %2430 = vmatpush1.bf16.msra.mxu0 %v2287
    %2431 = vmatprep.subr.bf16.mxu0 %v2318
    %2432 = vmatpush2.bf16.msra.mxu0 %v2317
    %2433 = vmatprep.subr.bf16.mxu0 %v2316
    %2434 = vmatpush2.bf16.msra.mxu0 %v2315
    %2435 = vmatprep.subr.bf16.mxu0 %v2314
    %2436 = vmatpush2.bf16.msra.mxu0 %v2313
    %2437 = vmatprep.subr.bf16.mxu0 %v2312
    %2438 = vmatpush2.bf16.msra.mxu0 %v2311
    %2439 = vmatprep.subr.bf16.mxu0 %v2310
    %2440 = vmatpush2.bf16.msra.mxu0 %v2309
    %2441 = vmatprep.subr.bf16.mxu0 %v2308
    %2442 = vmatpush2.bf16.msra.mxu0 %v2307
    %2443 = vmatprep.subr.bf16.mxu0 %v2306
    %2444 = vmatpush2.bf16.msra.mxu0 %v2305
    %2445 = vmatprep.subr.bf16.mxu0 %v2304
    %2446 = vmatpush2.bf16.msra.mxu0 %v2303
    %2447 = vmatprep.mubr.bf16.mxu0 %v2028
    %2448 = vmatmul.mubr.bf16.gmra.mxu0 %v2027
    %v2449 = vpop.f32.mrf.mxu0
    %v2450 = vadd.f32 0.0, %v2449
    %v2451 = vpop.f32.mrf.mxu0
    %v2452 = vadd.f32 0.0, %v2451
    %v2453 = vpop.f32.mrf.mxu0
    %v2454 = vpop.f32.mrf.mxu0
    %2455 = vdwg.mxu0
    %2456 = vmatprep.subr.bf16.mxu0 %v2334
    %2457 = vmatpush1.bf16.msra.mxu0 %v2333
    %2458 = vmatprep.subr.bf16.mxu0 %v2332
    %2459 = vmatpush1.bf16.msra.mxu0 %v2331
    %2460 = vmatprep.subr.bf16.mxu0 %v2330
    %2461 = vmatpush1.bf16.msra.mxu0 %v2329
    %2462 = vmatprep.subr.bf16.mxu0 %v2328
    %2463 = vmatpush1.bf16.msra.mxu0 %v2327
    %2464 = vmatprep.subr.bf16.mxu0 %v2326
    %2465 = vmatpush1.bf16.msra.mxu0 %v2325
    %2466 = vmatprep.subr.bf16.mxu0 %v2324
    %2467 = vmatpush1.bf16.msra.mxu0 %v2323
    %2468 = vmatprep.subr.bf16.mxu0 %v2322
    %2469 = vmatpush1.bf16.msra.mxu0 %v2321
    %2470 = vmatprep.subr.bf16.mxu0 %v2320
    %2471 = vmatpush1.bf16.msra.mxu0 %v2319
    %2472 = vmatprep.subr.bf16.mxu0 %v2350
    %2473 = vmatpush2.bf16.msra.mxu0 %v2349
    %2474 = vmatprep.subr.bf16.mxu0 %v2348
    %2475 = vmatpush2.bf16.msra.mxu0 %v2347
    %2476 = vmatprep.subr.bf16.mxu0 %v2346
    %2477 = vmatpush2.bf16.msra.mxu0 %v2345
    %2478 = vmatprep.subr.bf16.mxu0 %v2344
    %2479 = vmatpush2.bf16.msra.mxu0 %v2343
    %2480 = vmatprep.subr.bf16.mxu0 %v2342
    %2481 = vmatpush2.bf16.msra.mxu0 %v2341
    %2482 = vmatprep.subr.bf16.mxu0 %v2340
    %2483 = vmatpush2.bf16.msra.mxu0 %v2339
    %2484 = vmatprep.subr.bf16.mxu0 %v2338
    %2485 = vmatpush2.bf16.msra.mxu0 %v2337
    %2486 = vmatprep.subr.bf16.mxu0 %v2336
    %2487 = vmatpush2.bf16.msra.mxu0 %v2335
    %2488 = vmatprep.mubr.bf16.mxu0 %v2030
    %2489 = vmatmul.mubr.bf16.gmra.mxu0 %v2029
    %v2490 = vpop.f32.mrf.mxu0
    %v2491 = vadd.f32 %v2450, %v2490
    %v2492 = vpop.f32.mrf.mxu0
    %v2493 = vadd.f32 %v2452, %v2492
    %v2494 = vpop.f32.mrf.mxu0
    %v2495 = vpop.f32.mrf.mxu0
    %2496 = vdwg.mxu0
    %v2497 = vld [vmem:[%s5] sm:$0x3]
    %v2499 = vlaneseq
    %v2500 = vshrl.u32 %v2499, 7
    %v2501 = vsub.s32 0, %v2500
    %v2502 = vrot.slane %v2497, %v2501
    %v2503 = vlaneseq
    %v2504 = vshrl.u32 %v2503, 7
    %v2505 = vsub.s32 1, %v2504
    %v2506 = vrot.slane %v2497, %v2505
    %v2509 = vmul.f32 %v2491, %v2502
    %v2510 = vmul.f32 %v2493, %v2506
    %v2511 = vld [vmem:[%s6] sm:$0x3]
    %v2513 = vlaneseq
    %v2514 = vshrl.u32 %v2513, 7
    %v2515 = vsub.s32 0, %v2514
    %v2516 = vrot.slane %v2511, %v2515
    %v2517 = vlaneseq
    %v2518 = vshrl.u32 %v2517, 7
    %v2519 = vsub.s32 1, %v2518
    %v2520 = vrot.slane %v2511, %v2519
    %v2523 = vadd.f32 %v2509, %v2516
    %v2524 = vadd.f32 %v2510, %v2520
    %vm2525 = vcmp.gt.f32.partialorder %v2523, 0.0
    %vm2526 = vcmp.gt.f32.partialorder %v2524, 0.0
    %v2527 = vmul.f32 %v2523, 0.2
    %v2528 = vmul.f32 %v2524, 0.2
    %v2529 = vsel %vm2525, %v2523, %v2527
    %v2530 = vsel %vm2526, %v2524, %v2528
    %v2533 = vcombine.low %v2529, %v2530
    %v2535 = vunpack.c.l.s4 1983009808
    %v2536 = vunpack.c.0.s8 %v2535
    %v2537 = vlaneseq
    %v2538 = vshrl.u32 %v2537, 7
    %v2539 = vsub.s32 %v2536, %v2538
    %v2540 = vrot.slane %v2533, %v2539
    %2542 = vst [vmem:[%s7] sm:$0xf] %v2540
    // Predicated region
    $region34: #{transform_net_forward.5} parent=1 // pred_check
      _
    $region35: #{transform_net_forward.5} parent=1 // pred_check_branch
      %2544 = sbr.rel (0) target = $region37
    $region36: #{transform_net_forward.5} parent=1 // pred_region
      _
    $region37: #{transform_net_forward.5} parent=1 // pred_fallthru
      _
    // Predicated region
    $region38: #{transform_net_forward.5} parent=1 // pred_check
      _
    $region39: #{transform_net_forward.5} parent=1 // pred_check_branch
      %2546 = sbr.rel (0) target = $region41
    $region40: #{transform_net_forward.5} parent=1 // pred_region
      _
    $region41: #{transform_net_forward.5} parent=1 // pred_fallthru
      _
    %2547 = vsyncpa [#allocation3], 1

</llo_original>
